<compile_context>
chip_gen: v7x
topology: tpu7x:2x2x1
jax: 0.10.0
libtpu: 0.0.40
codegen_flags: <defaults>
</compile_context>

<pallas_src>
import jax
import jax.numpy as jnp
from jax import lax
from jax.experimental import pallas as pl
from jax.experimental.pallas import tpu as pltpu

Z_DIM = 32
NUM_CLASS = 10
HIDDEN_CH = 8
OUT_CH = 3
EPS = 1e-5                       # nn.InstanceNorm2d default eps

C0 = Z_DIM + NUM_CLASS           # 42
C0P = 48                         # zero-padded K for block 0 (bf16 sublane-tile aligned)
C1 = HIDDEN_CH * 8               # 64
C2 = HIDDEN_CH * 4               # 32
C3 = HIDDEN_CH * 2               # 16

# For ConvTranspose2d(k=4, stride=2, pad=1):  oy = 2*iy - 1 + ky.
# Window offset (into the 1-padded input) -> [(output phase, kernel index), ...]
_TAP_MAP = {0: [(0, 3)], 1: [(0, 1), (1, 2)], 2: [(1, 0)]}


# --------------------------------------------------------------------------- kernel helpers
def _instance_norm_relu_folded(y, cout, hw):
    """InstanceNorm2d (biased var, eps=1e-5) + ReLU applied on the phase-folded ConvT
    output y: (TB, hw, 4*cout) f32, columns ordered (2*py+px)*cout + c.
    Stats are per-sample / per-channel over all 4*hw output pixels."""
    inv_n = 1.0 / (4.0 * hw)
    s1 = jnp.sum(y, axis=1, keepdims=True)                                    # (TB,1,4c)
    s1 = (s1[:, :, 0 * cout:1 * cout] + s1[:, :, 1 * cout:2 * cout]
          + s1[:, :, 2 * cout:3 * cout] + s1[:, :, 3 * cout:4 * cout])
    mu = s1 * inv_n                                                           # (TB,1,c)
    mu4 = jnp.concatenate([mu, mu, mu, mu], axis=-1)                          # (TB,1,4c)
    d = y - mu4
    s2 = jnp.sum(d * d, axis=1, keepdims=True)
    s2 = (s2[:, :, 0 * cout:1 * cout] + s2[:, :, 1 * cout:2 * cout]
          + s2[:, :, 2 * cout:3 * cout] + s2[:, :, 3 * cout:4 * cout])
    inv = lax.rsqrt(s2 * inv_n + EPS)
    inv4 = jnp.concatenate([inv, inv, inv, inv], axis=-1)
    return jnp.maximum(d * inv4, 0.0)


def _pixel_shuffle(z, h, cout):
    """Phase-folded (TB, h*h, 4*cout) bf16 -> NHWC (TB, 2h, 2h, cout) bf16."""
    tb = z.shape[0]
    rows = []
    for py in range(2):
        s0 = z[:, :, (2 * py + 0) * cout:(2 * py + 1) * cout].reshape(tb, h, h, cout)
        s1 = z[:, :, (2 * py + 1) * cout:(2 * py + 2) * cout].reshape(tb, h, h, cout)
        rows.append(jnp.stack([s0, s1], axis=3).reshape(tb, h, 2 * h, cout))  # W interleave
    return jnp.stack(rows, axis=2).reshape(tb, 2 * h, 2 * h, cout)            # H interleave


def _upsample_convt(a, w_ref, cout):
    """Stride-2 ConvTranspose(k=4, p=1) via phase decomposition.
    a: (TB, h, h, cin) bf16 NHWC.  Returns phase-folded f32 (TB, h*h, 4*cout)."""
    tb, h, _, cin = a.shape
    zc = jnp.zeros((tb, h, 1, cin), a.dtype)
    ap = jnp.concatenate([zc, a, zc], axis=2)                   # (TB, h, h+2, cin)
    zr = jnp.zeros((tb, 1, h + 2, cin), a.dtype)
    ap = jnp.concatenate([zr, ap, zr], axis=1)                  # (TB, h+2, h+2, cin)
    # im2col built in registers: 9 shifted taps concatenated along lanes
    taps = [ap[:, wy:wy + h, wx:wx + h, :].reshape(tb, h * h, cin)
            for wy in range(3) for wx in range(3)]
    lhs = jnp.concatenate(taps, axis=-1).reshape(tb * h * h, 9 * cin)          # bf16
    y = jnp.dot(lhs, w_ref[...], preferred_element_type=jnp.float32)           # MXU, f32 acc
    return y.reshape(tb, h * h, 4 * cout)


# --------------------------------------------------------------------------- kernel
def _generator_kernel(x_ref, w0_ref, w1_ref, w2_ref, w3_ref, b3_ref, o_ref):
    tb = x_ref.shape[0]

    # ---- block 0: 1x1 -> 4x4 ConvT == one (TB, C0P) x (C0P, 16*C1) matmul ---------------
    y0 = jnp.dot(x_ref[:, 0, :], w0_ref[...], preferred_element_type=jnp.float32)
    cols = [y0[:, s * C1:(s + 1) * C1] for s in range(16)]       # 16 x (TB, C1), spatial s
    mu = cols[0]
    for c in cols[1:]:
        mu = mu + c
    mu = mu * (1.0 / 16.0)
    dev = [c - mu for c in cols]
    ssq = dev[0] * dev[0]
    for d in dev[1:]:
        ssq = ssq + d * d
    inv = lax.rsqrt(ssq * (1.0 / 16.0) + EPS)
    acts = [jnp.maximum(d * inv, 0.0).astype(jnp.bfloat16) for d in dev]
    a0 = jnp.stack(acts, axis=1).reshape(tb, 4, 4, C1)           # NHWC bf16

    # ---- block 1: 4x4 -> 8x8 --------------------------------------------------------------
    y1 = _upsample_convt(a0, w1_ref, C2)                         # (TB, 16, 128)
    a1 = _pixel_shuffle(
        _instance_norm_relu_folded(y1, C2, 16).astype(jnp.bfloat16), 4, C2)

    # ---- block 2: 8x8 -> 16x16 ------------------------------------------------------------
    y2 = _upsample_convt(a1, w2_ref, C3)                         # (TB, 64, 64)
    a2 = _pixel_shuffle(
        _instance_norm_relu_folded(y2, C3, 64).astype(jnp.bfloat16), 8, C3)

    # ---- block 3: 16x16 -> 32x32, bias + tanh, stored phase-folded -------------------------
    y3 = _upsample_convt(a2, w3_ref, OUT_CH)                     # (TB, 256, 12)
    o_ref[...] = jnp.tanh(y3 + b3_ref[...])


# --------------------------------------------------------------------------- weight prep
def _fold_convt_weight(w):
    """PyTorch ConvTranspose2d weight (Cin, Cout, 4, 4), stride=2, pad=1 ->
    phase-folded stride-1 weight over the 1-padded input: (9*Cin, 4*Cout), bf16."""
    cin, cout = w.shape[0], w.shape[1]
    wf = jnp.zeros((9 * cin, 4 * cout), jnp.float32)
    for wy in range(3):
        for wx in range(3):
            for (py, ky) in _TAP_MAP[wy]:
                for (px, kx) in _TAP_MAP[wx]:
                    r0 = (wy * 3 + wx) * cin
                    c0 = (py * 2 + px) * cout
                    wf = wf.at[r0:r0 + cin, c0:c0 + cout].set(w[:, :, ky, kx])
    return wf.astype(jnp.bfloat16)


def init_params(key):
    ks = jax.random.split(key, 6)

    def w(k, shape, scale=0.05):
        return (scale * jax.random.normal(k, shape)).astype(jnp.float32)

    return {
        "embed": w(ks[0], (NUM_CLASS, NUM_CLASS), 1.0),
        # PyTorch ConvTranspose2d weight layout: (Cin, Cout, K, K)
        "w1": w(ks[1], (C0, C1, 4, 4)),
        "w2": w(ks[2], (C1, C2, 4, 4)),
        "w3": w(ks[3], (C2, C3, 4, 4)),
        "w4": w(ks[4], (C3, OUT_CH, 4, 4)),
        "b4": w(ks[5], (OUT_CH,)),
    }


# --------------------------------------------------------------------------- wrapper
def _pick_tb(batch):
    # amortize per-step overhead / fill MXU M, but keep >= 2 grid steps for v7x megacore
    for tb in (8, 4, 2):
        if batch >= 2 * tb:
            return tb
    return 1


@jax.jit
def generator_forward(params, noise, labels):
    B = noise.shape[0]
    TB = _pick_tb(B)
    G = pl.cdiv(B, TB)
    B_pad = G * TB

    emb = jnp.take(params["embed"], labels, axis=0)                     # (B, NUM_CLASS)
    x0 = jnp.concatenate([noise, emb], axis=1).astype(jnp.float32)      # (B, C0)
    x0 = jnp.pad(x0, ((0, B_pad - B), (0, C0P - C0)))                   # zero pad K + batch
    x0 = x0.astype(jnp.bfloat16).reshape(B_pad, 1, C0P)

    # block-0 weight: (Cin, Cout, 4, 4) -> (C0P, 16*C1), columns ordered (sy*4+sx)*C1 + co
    w0 = jnp.transpose(params["w1"], (0, 2, 3, 1)).reshape(C0, 16 * C1)
    w0 = jnp.pad(w0, ((0, C0P - C0), (0, 0))).astype(jnp.bfloat16)
    w1 = _fold_convt_weight(params["w2"])        # (576, 128)
    w2 = _fold_convt_weight(params["w3"])        # (288,  64)
    w3 = _fold_convt_weight(params["w4"])        # (144,  12)
    b3 = jnp.tile(params["b4"], 4).reshape(1, 4 * OUT_CH).astype(jnp.float32)

    out = pl.pallas_call(
        _generator_kernel,
        grid=(G,),
        in_specs=[
            pl.BlockSpec((TB, 1, C0P), lambda g: (g, 0, 0)),
            pl.BlockSpec((C0P, 16 * C1), lambda g: (0, 0)),
            pl.BlockSpec((9 * C1, 4 * C2), lambda g: (0, 0)),
            pl.BlockSpec((9 * C2, 4 * C3), lambda g: (0, 0)),
            pl.BlockSpec((9 * C3, 4 * OUT_CH), lambda g: (0, 0)),
            pl.BlockSpec((1, 4 * OUT_CH), lambda g: (0, 0)),
        ],
        out_specs=pl.BlockSpec((TB, 256, 4 * OUT_CH), lambda g: (g, 0, 0)),
        out_shape=jax.ShapeDtypeStruct((B_pad, 256, 4 * OUT_CH), jnp.float32),
        compiler_params=pltpu.CompilerParams(
            dimension_semantics=("parallel",),
            vmem_limit_bytes=32 * 1024 * 1024),
    )(x0, w0, w1, w2, w3, b3)

    # depth-to-space + NHWC -> NCHW (pure layout, done by XLA outside the kernel)
    out = out[:B].reshape(B, 16, 16, 2, 2, OUT_CH)      # (b, iy, ix, py, px, c)
    out = jnp.transpose(out, (0, 5, 1, 3, 2, 4))        # (b, c, iy, py, ix, px)
    return out.reshape(B, OUT_CH, 32, 32)


# --------------------------------------------------------------------------- reference
def _reference_forward(params, noise, labels):
    """Pure-JAX reference (ConvT as lhs-dilated conv) with the same bf16 cast points."""
    bf = lambda a: a.astype(jnp.bfloat16).astype(jnp.float32)
    hp = lax.Precision.HIGHEST

    emb = jnp.take(params["embed"], labels, axis=0)
    x = bf(jnp.concatenate([noise, emb], axis=1))                    # (B, C0)

    def inorm_relu(y):                                               # (B, C, H, W)
        mu = jnp.mean(y, axis=(2, 3), keepdims=True)
        var = jnp.mean((y - mu) ** 2, axis=(2, 3), keepdims=True)
        return jnp.maximum((y - mu) * lax.rsqrt(var + EPS), 0.0)

    def convt(a, w):                                                 # k=4, s=2, p=1
        wf = jnp.transpose(bf(w), (1, 0, 2, 3))[:, :, ::-1, ::-1]    # (Cout, Cin, 4, 4)
        return lax.conv_general_dilated(
            a, wf, window_strides=(1, 1), padding=((2, 2), (2, 2)),
            lhs_dilation=(2, 2),
            dimension_numbers=("NCHW", "OIHW", "NCHW"), precision=hp)

    y = jnp.einsum("bi,iohw->bohw", x, bf(params["w1"]), precision=hp)   # 1x1 -> 4x4
    a = bf(inorm_relu(y))
    a = bf(inorm_relu(convt(a, params["w2"])))
    a = bf(inorm_relu(convt(a, params["w3"])))
    y = convt(a, params["w4"]) + params["b4"][None, :, None, None]
    return jnp.tanh(y)


# --------------------------------------------------------------------------- main
if __name__ == "__main__":
    key = jax.random.PRNGKey(0)
    kp, kn, kl = jax.random.split(key, 3)

    params = init_params(kp)
    ref_fn = jax.jit(_reference_forward)

    # --- small-batch check (B=2 -> TB=1, grid=(2,)) ---------------------------------------
    noise = jax.random.normal(kn, (2, Z_DIM), jnp.float32)            # (B, z_dim)
    labels = jax.random.randint(kl, (2,), 0, NUM_CLASS, jnp.int32)    # (B,)

    out = generator_forward(params, noise, labels)
    jax.block_until_ready(out)

    assert out.shape == (2, OUT_CH, 32, 32), out.shape
    assert bool(jnp.all(jnp.isfinite(out)))
    assert bool(jnp.all(jnp.abs(out) <= 1.0 + 1e-6))                  # tanh range

    ref = ref_fn(params, noise, labels)
    err = float(jnp.max(jnp.abs(out - ref)))
    assert err < 5e-2, f"B=2 kernel / reference mismatch: max|diff|={err}"

    # --- batched path check (B=16 -> TB=8 samples per grid step, grid=(2,)) ----------------
    kn2, kl2 = jax.random.split(kn)
    noise16 = jax.random.normal(kn2, (16, Z_DIM), jnp.float32)
    labels16 = jax.random.randint(kl2, (16,), 0, NUM_CLASS, jnp.int32)

    out16 = generator_forward(params, noise16, labels16)
    jax.block_until_ready(out16)
    assert out16.shape == (16, OUT_CH, 32, 32), out16.shape

    ref16 = ref_fn(params, noise16, labels16)
    err16 = float(jnp.max(jnp.abs(out16 - ref16)))
    assert err16 < 5e-2, f"B=16 kernel / reference mismatch: max|diff|={err16}"

    print("KERNEL_OK")
</pallas_src>

<mosaic_0001>
module attributes {stable_mosaic.version = 11 : i64} {
  func.func @_generator_kernel(%arg0: i32, %arg1: memref<1x1x48xbf16, #tpu.memory_space<vmem>>, %arg2: memref<48x1024xbf16, #tpu.memory_space<vmem>>, %arg3: memref<576x128xbf16, #tpu.memory_space<vmem>>, %arg4: memref<288x64xbf16, #tpu.memory_space<vmem>>, %arg5: memref<144x12xbf16, #tpu.memory_space<vmem>>, %arg6: memref<1x12xf32, #tpu.memory_space<vmem>>, %arg7: memref<1x256x12xf32, #tpu.memory_space<vmem>>) attributes {dimension_semantics = [#tpu.dimension_semantics<parallel>], iteration_bounds = array<i64: 2>, scalar_prefetch = 0 : i64, scratch_operands = 0 : i64, tpu.core_type = #tpu.core_type<tc>, window_params = [{transform_indices = @transform_0, window_bounds = array<i64: 1, 1, 48>}, {pipeline_mode = #tpu.pipeline_mode<synchronous>, transform_indices = @transform_1, window_bounds = array<i64: 48, 1024>}, {pipeline_mode = #tpu.pipeline_mode<synchronous>, transform_indices = @transform_2, window_bounds = array<i64: 576, 128>}, {pipeline_mode = #tpu.pipeline_mode<synchronous>, transform_indices = @transform_3, window_bounds = array<i64: 288, 64>}, {pipeline_mode = #tpu.pipeline_mode<synchronous>, transform_indices = @transform_4, window_bounds = array<i64: 144, 12>}, {pipeline_mode = #tpu.pipeline_mode<synchronous>, transform_indices = @transform_5, window_bounds = array<i64: 1, 12>}, {transform_indices = @transform_6, window_bounds = array<i64: 1, 256, 12>}]} {
    %c0 = arith.constant 0 : index
    %c0_0 = arith.constant 0 : index
    %c0_1 = arith.constant 0 : index
    %0 = vector.load %arg1[%c0, %c0_0, %c0_1] : memref<1x1x48xbf16, #tpu.memory_space<vmem>>, vector<1x1x48xbf16>
    %1 = vector.shape_cast %0 : vector<1x1x48xbf16> to vector<1x48xbf16>
    %c0_2 = arith.constant 0 : index
    %c0_3 = arith.constant 0 : index
    %2 = vector.load %arg2[%c0_2, %c0_3] : memref<48x1024xbf16, #tpu.memory_space<vmem>>, vector<48x1024xbf16>
    %cst = arith.constant dense<0.000000e+00> : vector<1x1024xf32>
    %3 = tpu.matmul %1, %2, %cst {dimension_numbers = #tpu.dot_dimension_numbers<[1], [0], [0], [1], [0, 0, 1, 1], [], []>} : vector<1x48xbf16>, vector<48x1024xbf16>, vector<1x1024xf32> -> vector<1x1024xf32>
    %4 = vector.extract_strided_slice %3 {offsets = [0, 0], sizes = [1, 64], strides = [1, 1]} : vector<1x1024xf32> to vector<1x64xf32>
    %5 = vector.extract_strided_slice %3 {offsets = [0, 64], sizes = [1, 64], strides = [1, 1]} : vector<1x1024xf32> to vector<1x64xf32>
    %6 = vector.extract_strided_slice %3 {offsets = [0, 128], sizes = [1, 64], strides = [1, 1]} : vector<1x1024xf32> to vector<1x64xf32>
    %7 = vector.extract_strided_slice %3 {offsets = [0, 192], sizes = [1, 64], strides = [1, 1]} : vector<1x1024xf32> to vector<1x64xf32>
    %8 = vector.extract_strided_slice %3 {offsets = [0, 256], sizes = [1, 64], strides = [1, 1]} : vector<1x1024xf32> to vector<1x64xf32>
    %9 = vector.extract_strided_slice %3 {offsets = [0, 320], sizes = [1, 64], strides = [1, 1]} : vector<1x1024xf32> to vector<1x64xf32>
    %10 = vector.extract_strided_slice %3 {offsets = [0, 384], sizes = [1, 64], strides = [1, 1]} : vector<1x1024xf32> to vector<1x64xf32>
    %11 = vector.extract_strided_slice %3 {offsets = [0, 448], sizes = [1, 64], strides = [1, 1]} : vector<1x1024xf32> to vector<1x64xf32>
    %12 = vector.extract_strided_slice %3 {offsets = [0, 512], sizes = [1, 64], strides = [1, 1]} : vector<1x1024xf32> to vector<1x64xf32>
    %13 = vector.extract_strided_slice %3 {offsets = [0, 576], sizes = [1, 64], strides = [1, 1]} : vector<1x1024xf32> to vector<1x64xf32>
    %14 = vector.extract_strided_slice %3 {offsets = [0, 640], sizes = [1, 64], strides = [1, 1]} : vector<1x1024xf32> to vector<1x64xf32>
    %15 = vector.extract_strided_slice %3 {offsets = [0, 704], sizes = [1, 64], strides = [1, 1]} : vector<1x1024xf32> to vector<1x64xf32>
    %16 = vector.extract_strided_slice %3 {offsets = [0, 768], sizes = [1, 64], strides = [1, 1]} : vector<1x1024xf32> to vector<1x64xf32>
    %17 = vector.extract_strided_slice %3 {offsets = [0, 832], sizes = [1, 64], strides = [1, 1]} : vector<1x1024xf32> to vector<1x64xf32>
    %18 = vector.extract_strided_slice %3 {offsets = [0, 896], sizes = [1, 64], strides = [1, 1]} : vector<1x1024xf32> to vector<1x64xf32>
    %19 = vector.extract_strided_slice %3 {offsets = [0, 960], sizes = [1, 64], strides = [1, 1]} : vector<1x1024xf32> to vector<1x64xf32>
    %20 = arith.addf %4, %5 : vector<1x64xf32>
    %21 = arith.addf %20, %6 : vector<1x64xf32>
    %22 = arith.addf %21, %7 : vector<1x64xf32>
    %23 = arith.addf %22, %8 : vector<1x64xf32>
    %24 = arith.addf %23, %9 : vector<1x64xf32>
    %25 = arith.addf %24, %10 : vector<1x64xf32>
    %26 = arith.addf %25, %11 : vector<1x64xf32>
    %27 = arith.addf %26, %12 : vector<1x64xf32>
    %28 = arith.addf %27, %13 : vector<1x64xf32>
    %29 = arith.addf %28, %14 : vector<1x64xf32>
    %30 = arith.addf %29, %15 : vector<1x64xf32>
    %31 = arith.addf %30, %16 : vector<1x64xf32>
    %32 = arith.addf %31, %17 : vector<1x64xf32>
    %33 = arith.addf %32, %18 : vector<1x64xf32>
    %34 = arith.addf %33, %19 : vector<1x64xf32>
    %cst_4 = arith.constant 6.250000e-02 : f32
    %35 = vector.broadcast %cst_4 : f32 to vector<1x64xf32>
    %36 = arith.mulf %34, %35 : vector<1x64xf32>
    %37 = arith.subf %4, %36 : vector<1x64xf32>
    %38 = arith.subf %5, %36 : vector<1x64xf32>
    %39 = arith.subf %6, %36 : vector<1x64xf32>
    %40 = arith.subf %7, %36 : vector<1x64xf32>
    %41 = arith.subf %8, %36 : vector<1x64xf32>
    %42 = arith.subf %9, %36 : vector<1x64xf32>
    %43 = arith.subf %10, %36 : vector<1x64xf32>
    %44 = arith.subf %11, %36 : vector<1x64xf32>
    %45 = arith.subf %12, %36 : vector<1x64xf32>
    %46 = arith.subf %13, %36 : vector<1x64xf32>
    %47 = arith.subf %14, %36 : vector<1x64xf32>
    %48 = arith.subf %15, %36 : vector<1x64xf32>
    %49 = arith.subf %16, %36 : vector<1x64xf32>
    %50 = arith.subf %17, %36 : vector<1x64xf32>
    %51 = arith.subf %18, %36 : vector<1x64xf32>
    %52 = arith.subf %19, %36 : vector<1x64xf32>
    %53 = arith.mulf %37, %37 : vector<1x64xf32>
    %54 = arith.mulf %38, %38 : vector<1x64xf32>
    %55 = arith.addf %53, %54 : vector<1x64xf32>
    %56 = arith.mulf %39, %39 : vector<1x64xf32>
    %57 = arith.addf %55, %56 : vector<1x64xf32>
    %58 = arith.mulf %40, %40 : vector<1x64xf32>
    %59 = arith.addf %57, %58 : vector<1x64xf32>
    %60 = arith.mulf %41, %41 : vector<1x64xf32>
    %61 = arith.addf %59, %60 : vector<1x64xf32>
    %62 = arith.mulf %42, %42 : vector<1x64xf32>
    %63 = arith.addf %61, %62 : vector<1x64xf32>
    %64 = arith.mulf %43, %43 : vector<1x64xf32>
    %65 = arith.addf %63, %64 : vector<1x64xf32>
    %66 = arith.mulf %44, %44 : vector<1x64xf32>
    %67 = arith.addf %65, %66 : vector<1x64xf32>
    %68 = arith.mulf %45, %45 : vector<1x64xf32>
    %69 = arith.addf %67, %68 : vector<1x64xf32>
    %70 = arith.mulf %46, %46 : vector<1x64xf32>
    %71 = arith.addf %69, %70 : vector<1x64xf32>
    %72 = arith.mulf %47, %47 : vector<1x64xf32>
    %73 = arith.addf %71, %72 : vector<1x64xf32>
    %74 = arith.mulf %48, %48 : vector<1x64xf32>
    %75 = arith.addf %73, %74 : vector<1x64xf32>
    %76 = arith.mulf %49, %49 : vector<1x64xf32>
    %77 = arith.addf %75, %76 : vector<1x64xf32>
    %78 = arith.mulf %50, %50 : vector<1x64xf32>
    %79 = arith.addf %77, %78 : vector<1x64xf32>
    %80 = arith.mulf %51, %51 : vector<1x64xf32>
    %81 = arith.addf %79, %80 : vector<1x64xf32>
    %82 = arith.mulf %52, %52 : vector<1x64xf32>
    %83 = arith.addf %81, %82 : vector<1x64xf32>
    %cst_5 = arith.constant 6.250000e-02 : f32
    %84 = vector.broadcast %cst_5 : f32 to vector<1x64xf32>
    %85 = arith.mulf %83, %84 : vector<1x64xf32>
    %cst_6 = arith.constant 9.99999974E-6 : f32
    %86 = vector.broadcast %cst_6 : f32 to vector<1x64xf32>
    %87 = arith.addf %85, %86 : vector<1x64xf32>
    %88 = math.rsqrt %87 : vector<1x64xf32>
    %89 = arith.mulf %37, %88 : vector<1x64xf32>
    %cst_7 = arith.constant 0.000000e+00 : f32
    %90 = vector.broadcast %cst_7 : f32 to vector<1x64xf32>
    %91 = arith.maximumf %89, %90 : vector<1x64xf32>
    %92 = arith.truncf %91 : vector<1x64xf32> to vector<1x64xbf16>
    %93 = arith.mulf %38, %88 : vector<1x64xf32>
    %cst_8 = arith.constant 0.000000e+00 : f32
    %94 = vector.broadcast %cst_8 : f32 to vector<1x64xf32>
    %95 = arith.maximumf %93, %94 : vector<1x64xf32>
    %96 = arith.truncf %95 : vector<1x64xf32> to vector<1x64xbf16>
    %97 = arith.mulf %39, %88 : vector<1x64xf32>
    %cst_9 = arith.constant 0.000000e+00 : f32
    %98 = vector.broadcast %cst_9 : f32 to vector<1x64xf32>
    %99 = arith.maximumf %97, %98 : vector<1x64xf32>
    %100 = arith.truncf %99 : vector<1x64xf32> to vector<1x64xbf16>
    %101 = arith.mulf %40, %88 : vector<1x64xf32>
    %cst_10 = arith.constant 0.000000e+00 : f32
    %102 = vector.broadcast %cst_10 : f32 to vector<1x64xf32>
    %103 = arith.maximumf %101, %102 : vector<1x64xf32>
    %104 = arith.truncf %103 : vector<1x64xf32> to vector<1x64xbf16>
    %105 = arith.mulf %41, %88 : vector<1x64xf32>
    %cst_11 = arith.constant 0.000000e+00 : f32
    %106 = vector.broadcast %cst_11 : f32 to vector<1x64xf32>
    %107 = arith.maximumf %105, %106 : vector<1x64xf32>
    %108 = arith.truncf %107 : vector<1x64xf32> to vector<1x64xbf16>
    %109 = arith.mulf %42, %88 : vector<1x64xf32>
    %cst_12 = arith.constant 0.000000e+00 : f32
    %110 = vector.broadcast %cst_12 : f32 to vector<1x64xf32>
    %111 = arith.maximumf %109, %110 : vector<1x64xf32>
    %112 = arith.truncf %111 : vector<1x64xf32> to vector<1x64xbf16>
    %113 = arith.mulf %43, %88 : vector<1x64xf32>
    %cst_13 = arith.constant 0.000000e+00 : f32
    %114 = vector.broadcast %cst_13 : f32 to vector<1x64xf32>
    %115 = arith.maximumf %113, %114 : vector<1x64xf32>
    %116 = arith.truncf %115 : vector<1x64xf32> to vector<1x64xbf16>
    %117 = arith.mulf %44, %88 : vector<1x64xf32>
    %cst_14 = arith.constant 0.000000e+00 : f32
    %118 = vector.broadcast %cst_14 : f32 to vector<1x64xf32>
    %119 = arith.maximumf %117, %118 : vector<1x64xf32>
    %120 = arith.truncf %119 : vector<1x64xf32> to vector<1x64xbf16>
    %121 = arith.mulf %45, %88 : vector<1x64xf32>
    %cst_15 = arith.constant 0.000000e+00 : f32
    %122 = vector.broadcast %cst_15 : f32 to vector<1x64xf32>
    %123 = arith.maximumf %121, %122 : vector<1x64xf32>
    %124 = arith.truncf %123 : vector<1x64xf32> to vector<1x64xbf16>
    %125 = arith.mulf %46, %88 : vector<1x64xf32>
    %cst_16 = arith.constant 0.000000e+00 : f32
    %126 = vector.broadcast %cst_16 : f32 to vector<1x64xf32>
    %127 = arith.maximumf %125, %126 : vector<1x64xf32>
    %128 = arith.truncf %127 : vector<1x64xf32> to vector<1x64xbf16>
    %129 = arith.mulf %47, %88 : vector<1x64xf32>
    %cst_17 = arith.constant 0.000000e+00 : f32
    %130 = vector.broadcast %cst_17 : f32 to vector<1x64xf32>
    %131 = arith.maximumf %129, %130 : vector<1x64xf32>
    %132 = arith.truncf %131 : vector<1x64xf32> to vector<1x64xbf16>
    %133 = arith.mulf %48, %88 : vector<1x64xf32>
    %cst_18 = arith.constant 0.000000e+00 : f32
    %134 = vector.broadcast %cst_18 : f32 to vector<1x64xf32>
    %135 = arith.maximumf %133, %134 : vector<1x64xf32>
    %136 = arith.truncf %135 : vector<1x64xf32> to vector<1x64xbf16>
    %137 = arith.mulf %49, %88 : vector<1x64xf32>
    %cst_19 = arith.constant 0.000000e+00 : f32
    %138 = vector.broadcast %cst_19 : f32 to vector<1x64xf32>
    %139 = arith.maximumf %137, %138 : vector<1x64xf32>
    %140 = arith.truncf %139 : vector<1x64xf32> to vector<1x64xbf16>
    %141 = arith.mulf %50, %88 : vector<1x64xf32>
    %cst_20 = arith.constant 0.000000e+00 : f32
    %142 = vector.broadcast %cst_20 : f32 to vector<1x64xf32>
    %143 = arith.maximumf %141, %142 : vector<1x64xf32>
    %144 = arith.truncf %143 : vector<1x64xf32> to vector<1x64xbf16>
    %145 = arith.mulf %51, %88 : vector<1x64xf32>
    %cst_21 = arith.constant 0.000000e+00 : f32
    %146 = vector.broadcast %cst_21 : f32 to vector<1x64xf32>
    %147 = arith.maximumf %145, %146 : vector<1x64xf32>
    %148 = arith.truncf %147 : vector<1x64xf32> to vector<1x64xbf16>
    %149 = arith.mulf %52, %88 : vector<1x64xf32>
    %cst_22 = arith.constant 0.000000e+00 : f32
    %150 = vector.broadcast %cst_22 : f32 to vector<1x64xf32>
    %151 = arith.maximumf %149, %150 : vector<1x64xf32>
    %152 = arith.truncf %151 : vector<1x64xf32> to vector<1x64xbf16>
    %153 = vector.shape_cast %92 : vector<1x64xbf16> to vector<1x1x64xbf16>
    %154 = vector.shape_cast %96 : vector<1x64xbf16> to vector<1x1x64xbf16>
    %155 = vector.shape_cast %100 : vector<1x64xbf16> to vector<1x1x64xbf16>
    %156 = vector.shape_cast %104 : vector<1x64xbf16> to vector<1x1x64xbf16>
    %157 = vector.shape_cast %108 : vector<1x64xbf16> to vector<1x1x64xbf16>
    %158 = vector.shape_cast %112 : vector<1x64xbf16> to vector<1x1x64xbf16>
    %159 = vector.shape_cast %116 : vector<1x64xbf16> to vector<1x1x64xbf16>
    %160 = vector.shape_cast %120 : vector<1x64xbf16> to vector<1x1x64xbf16>
    %161 = vector.shape_cast %124 : vector<1x64xbf16> to vector<1x1x64xbf16>
    %162 = vector.shape_cast %128 : vector<1x64xbf16> to vector<1x1x64xbf16>
    %163 = vector.shape_cast %132 : vector<1x64xbf16> to vector<1x1x64xbf16>
    %164 = vector.shape_cast %136 : vector<1x64xbf16> to vector<1x1x64xbf16>
    %165 = vector.shape_cast %140 : vector<1x64xbf16> to vector<1x1x64xbf16>
    %166 = vector.shape_cast %144 : vector<1x64xbf16> to vector<1x1x64xbf16>
    %167 = vector.shape_cast %148 : vector<1x64xbf16> to vector<1x1x64xbf16>
    %168 = vector.shape_cast %152 : vector<1x64xbf16> to vector<1x1x64xbf16>
    %169 = tpu.concatenate %153, %154, %155, %156, %157, %158, %159, %160, %161, %162, %163, %164, %165, %166, %167, %168 in 1 : vector<1x1x64xbf16>, vector<1x1x64xbf16>, vector<1x1x64xbf16>, vector<1x1x64xbf16>, vector<1x1x64xbf16>, vector<1x1x64xbf16>, vector<1x1x64xbf16>, vector<1x1x64xbf16>, vector<1x1x64xbf16>, vector<1x1x64xbf16>, vector<1x1x64xbf16>, vector<1x1x64xbf16>, vector<1x1x64xbf16>, vector<1x1x64xbf16>, vector<1x1x64xbf16>, vector<1x1x64xbf16> -> vector<1x16x64xbf16>
    %170 = vector.shape_cast %169 : vector<1x16x64xbf16> to vector<1x4x4x64xbf16>
    %cst_23 = arith.constant 0.000000e+00 : bf16
    %171 = vector.broadcast %cst_23 : bf16 to vector<1x4x1x64xbf16>
    %172 = tpu.concatenate %171, %170, %171 in 2 : vector<1x4x1x64xbf16>, vector<1x4x4x64xbf16>, vector<1x4x1x64xbf16> -> vector<1x4x6x64xbf16>
    %cst_24 = arith.constant 0.000000e+00 : bf16
    %173 = vector.broadcast %cst_24 : bf16 to vector<1x1x6x64xbf16>
    %174 = tpu.concatenate %173, %172, %173 in 1 : vector<1x1x6x64xbf16>, vector<1x4x6x64xbf16>, vector<1x1x6x64xbf16> -> vector<1x6x6x64xbf16>
    %175 = vector.extract_strided_slice %174 {offsets = [0, 0, 0, 0], sizes = [1, 4, 4, 64], strides = [1, 1, 1, 1]} : vector<1x6x6x64xbf16> to vector<1x4x4x64xbf16>
    %176 = vector.shape_cast %175 : vector<1x4x4x64xbf16> to vector<1x16x64xbf16>
    %177 = vector.extract_strided_slice %174 {offsets = [0, 0, 1, 0], sizes = [1, 4, 4, 64], strides = [1, 1, 1, 1]} : vector<1x6x6x64xbf16> to vector<1x4x4x64xbf16>
    %178 = vector.shape_cast %177 : vector<1x4x4x64xbf16> to vector<1x16x64xbf16>
    %179 = vector.extract_strided_slice %174 {offsets = [0, 0, 2, 0], sizes = [1, 4, 4, 64], strides = [1, 1, 1, 1]} : vector<1x6x6x64xbf16> to vector<1x4x4x64xbf16>
    %180 = vector.shape_cast %179 : vector<1x4x4x64xbf16> to vector<1x16x64xbf16>
    %181 = vector.extract_strided_slice %174 {offsets = [0, 1, 0, 0], sizes = [1, 4, 4, 64], strides = [1, 1, 1, 1]} : vector<1x6x6x64xbf16> to vector<1x4x4x64xbf16>
    %182 = vector.shape_cast %181 : vector<1x4x4x64xbf16> to vector<1x16x64xbf16>
    %183 = vector.extract_strided_slice %174 {offsets = [0, 1, 1, 0], sizes = [1, 4, 4, 64], strides = [1, 1, 1, 1]} : vector<1x6x6x64xbf16> to vector<1x4x4x64xbf16>
    %184 = vector.shape_cast %183 : vector<1x4x4x64xbf16> to vector<1x16x64xbf16>
    %185 = vector.extract_strided_slice %174 {offsets = [0, 1, 2, 0], sizes = [1, 4, 4, 64], strides = [1, 1, 1, 1]} : vector<1x6x6x64xbf16> to vector<1x4x4x64xbf16>
    %186 = vector.shape_cast %185 : vector<1x4x4x64xbf16> to vector<1x16x64xbf16>
    %187 = vector.extract_strided_slice %174 {offsets = [0, 2, 0, 0], sizes = [1, 4, 4, 64], strides = [1, 1, 1, 1]} : vector<1x6x6x64xbf16> to vector<1x4x4x64xbf16>
    %188 = vector.shape_cast %187 : vector<1x4x4x64xbf16> to vector<1x16x64xbf16>
    %189 = vector.extract_strided_slice %174 {offsets = [0, 2, 1, 0], sizes = [1, 4, 4, 64], strides = [1, 1, 1, 1]} : vector<1x6x6x64xbf16> to vector<1x4x4x64xbf16>
    %190 = vector.shape_cast %189 : vector<1x4x4x64xbf16> to vector<1x16x64xbf16>
    %191 = vector.extract_strided_slice %174 {offsets = [0, 2, 2, 0], sizes = [1, 4, 4, 64], strides = [1, 1, 1, 1]} : vector<1x6x6x64xbf16> to vector<1x4x4x64xbf16>
    %192 = vector.shape_cast %191 : vector<1x4x4x64xbf16> to vector<1x16x64xbf16>
    %193 = tpu.concatenate %176, %178, %180, %182, %184, %186, %188, %190, %192 in 2 : vector<1x16x64xbf16>, vector<1x16x64xbf16>, vector<1x16x64xbf16>, vector<1x16x64xbf16>, vector<1x16x64xbf16>, vector<1x16x64xbf16>, vector<1x16x64xbf16>, vector<1x16x64xbf16>, vector<1x16x64xbf16> -> vector<1x16x576xbf16>
    %194 = vector.shape_cast %193 : vector<1x16x576xbf16> to vector<16x576xbf16>
    %c0_25 = arith.constant 0 : index
    %c0_26 = arith.constant 0 : index
    %195 = vector.load %arg3[%c0_25, %c0_26] : memref<576x128xbf16, #tpu.memory_space<vmem>>, vector<576x128xbf16>
    %cst_27 = arith.constant dense<0.000000e+00> : vector<16x128xf32>
    %196 = tpu.matmul %194, %195, %cst_27 {dimension_numbers = #tpu.dot_dimension_numbers<[1], [0], [0], [1], [0, 0, 1, 1], [], []>} : vector<16x576xbf16>, vector<576x128xbf16>, vector<16x128xf32> -> vector<16x128xf32>
    %197 = vector.shape_cast %196 : vector<16x128xf32> to vector<1x16x128xf32>
    %cst_28 = arith.constant dense<0.000000e+00> : vector<1x128xf32>
    %198 = vector.multi_reduction <add>, %197, %cst_28 [1] : vector<1x16x128xf32> to vector<1x128xf32>
    %199 = vector.shape_cast %198 : vector<1x128xf32> to vector<1x1x128xf32>
    %200 = vector.extract_strided_slice %199 {offsets = [0, 0, 0], sizes = [1, 1, 32], strides = [1, 1, 1]} : vector<1x1x128xf32> to vector<1x1x32xf32>
    %201 = vector.extract_strided_slice %199 {offsets = [0, 0, 32], sizes = [1, 1, 32], strides = [1, 1, 1]} : vector<1x1x128xf32> to vector<1x1x32xf32>
    %202 = arith.addf %200, %201 : vector<1x1x32xf32>
    %203 = vector.extract_strided_slice %199 {offsets = [0, 0, 64], sizes = [1, 1, 32], strides = [1, 1, 1]} : vector<1x1x128xf32> to vector<1x1x32xf32>
    %204 = arith.addf %202, %203 : vector<1x1x32xf32>
    %205 = vector.extract_strided_slice %199 {offsets = [0, 0, 96], sizes = [1, 1, 32], strides = [1, 1, 1]} : vector<1x1x128xf32> to vector<1x1x32xf32>
    %206 = arith.addf %204, %205 : vector<1x1x32xf32>
    %cst_29 = arith.constant 1.562500e-02 : f32
    %207 = vector.broadcast %cst_29 : f32 to vector<1x1x32xf32>
    %208 = arith.mulf %206, %207 : vector<1x1x32xf32>
    %209 = tpu.concatenate %208, %208, %208, %208 in 2 : vector<1x1x32xf32>, vector<1x1x32xf32>, vector<1x1x32xf32>, vector<1x1x32xf32> -> vector<1x1x128xf32>
    %210 = vector.broadcast %209 : vector<1x1x128xf32> to vector<1x16x128xf32>
    %211 = arith.subf %197, %210 : vector<1x16x128xf32>
    %212 = arith.mulf %211, %211 : vector<1x16x128xf32>
    %cst_30 = arith.constant dense<0.000000e+00> : vector<1x128xf32>
    %213 = vector.multi_reduction <add>, %212, %cst_30 [1] : vector<1x16x128xf32> to vector<1x128xf32>
    %214 = vector.shape_cast %213 : vector<1x128xf32> to vector<1x1x128xf32>
    %215 = vector.extract_strided_slice %214 {offsets = [0, 0, 0], sizes = [1, 1, 32], strides = [1, 1, 1]} : vector<1x1x128xf32> to vector<1x1x32xf32>
    %216 = vector.extract_strided_slice %214 {offsets = [0, 0, 32], sizes = [1, 1, 32], strides = [1, 1, 1]} : vector<1x1x128xf32> to vector<1x1x32xf32>
    %217 = arith.addf %215, %216 : vector<1x1x32xf32>
    %218 = vector.extract_strided_slice %214 {offsets = [0, 0, 64], sizes = [1, 1, 32], strides = [1, 1, 1]} : vector<1x1x128xf32> to vector<1x1x32xf32>
    %219 = arith.addf %217, %218 : vector<1x1x32xf32>
    %220 = vector.extract_strided_slice %214 {offsets = [0, 0, 96], sizes = [1, 1, 32], strides = [1, 1, 1]} : vector<1x1x128xf32> to vector<1x1x32xf32>
    %221 = arith.addf %219, %220 : vector<1x1x32xf32>
    %cst_31 = arith.constant 1.562500e-02 : f32
    %222 = vector.broadcast %cst_31 : f32 to vector<1x1x32xf32>
    %223 = arith.mulf %221, %222 : vector<1x1x32xf32>
    %cst_32 = arith.constant 9.99999974E-6 : f32
    %224 = vector.broadcast %cst_32 : f32 to vector<1x1x32xf32>
    %225 = arith.addf %223, %224 : vector<1x1x32xf32>
    %226 = math.rsqrt %225 : vector<1x1x32xf32>
    %227 = tpu.concatenate %226, %226, %226, %226 in 2 : vector<1x1x32xf32>, vector<1x1x32xf32>, vector<1x1x32xf32>, vector<1x1x32xf32> -> vector<1x1x128xf32>
    %228 = vector.broadcast %227 : vector<1x1x128xf32> to vector<1x16x128xf32>
    %229 = arith.mulf %211, %228 : vector<1x16x128xf32>
    %cst_33 = arith.constant 0.000000e+00 : f32
    %230 = vector.broadcast %cst_33 : f32 to vector<1x16x128xf32>
    %231 = arith.maximumf %229, %230 : vector<1x16x128xf32>
    %232 = arith.truncf %231 : vector<1x16x128xf32> to vector<1x16x128xbf16>
    %233 = vector.extract_strided_slice %232 {offsets = [0, 0, 0], sizes = [1, 16, 32], strides = [1, 1, 1]} : vector<1x16x128xbf16> to vector<1x16x32xbf16>
    %234 = vector.shape_cast %233 : vector<1x16x32xbf16> to vector<1x4x4x32xbf16>
    %235 = vector.extract_strided_slice %232 {offsets = [0, 0, 32], sizes = [1, 16, 32], strides = [1, 1, 1]} : vector<1x16x128xbf16> to vector<1x16x32xbf16>
    %236 = vector.shape_cast %235 : vector<1x16x32xbf16> to vector<1x4x4x32xbf16>
    %237 = vector.shape_cast %234 : vector<1x4x4x32xbf16> to vector<1x4x4x1x32xbf16>
    %238 = vector.shape_cast %236 : vector<1x4x4x32xbf16> to vector<1x4x4x1x32xbf16>
    %239 = tpu.concatenate %237, %238 in 3 : vector<1x4x4x1x32xbf16>, vector<1x4x4x1x32xbf16> -> vector<1x4x4x2x32xbf16>
    %240 = vector.shape_cast %239 : vector<1x4x4x2x32xbf16> to vector<1x4x8x32xbf16>
    %241 = vector.extract_strided_slice %232 {offsets = [0, 0, 64], sizes = [1, 16, 32], strides = [1, 1, 1]} : vector<1x16x128xbf16> to vector<1x16x32xbf16>
    %242 = vector.shape_cast %241 : vector<1x16x32xbf16> to vector<1x4x4x32xbf16>
    %243 = vector.extract_strided_slice %232 {offsets = [0, 0, 96], sizes = [1, 16, 32], strides = [1, 1, 1]} : vector<1x16x128xbf16> to vector<1x16x32xbf16>
    %244 = vector.shape_cast %243 : vector<1x16x32xbf16> to vector<1x4x4x32xbf16>
    %245 = vector.shape_cast %242 : vector<1x4x4x32xbf16> to vector<1x4x4x1x32xbf16>
    %246 = vector.shape_cast %244 : vector<1x4x4x32xbf16> to vector<1x4x4x1x32xbf16>
    %247 = tpu.concatenate %245, %246 in 3 : vector<1x4x4x1x32xbf16>, vector<1x4x4x1x32xbf16> -> vector<1x4x4x2x32xbf16>
    %248 = vector.shape_cast %247 : vector<1x4x4x2x32xbf16> to vector<1x4x8x32xbf16>
    %249 = vector.shape_cast %240 : vector<1x4x8x32xbf16> to vector<1x4x1x8x32xbf16>
    %250 = vector.shape_cast %248 : vector<1x4x8x32xbf16> to vector<1x4x1x8x32xbf16>
    %251 = tpu.concatenate %249, %250 in 2 : vector<1x4x1x8x32xbf16>, vector<1x4x1x8x32xbf16> -> vector<1x4x2x8x32xbf16>
    %252 = vector.shape_cast %251 : vector<1x4x2x8x32xbf16> to vector<1x8x8x32xbf16>
    %cst_34 = arith.constant 0.000000e+00 : bf16
    %253 = vector.broadcast %cst_34 : bf16 to vector<1x8x1x32xbf16>
    %254 = tpu.concatenate %253, %252, %253 in 2 : vector<1x8x1x32xbf16>, vector<1x8x8x32xbf16>, vector<1x8x1x32xbf16> -> vector<1x8x10x32xbf16>
    %cst_35 = arith.constant 0.000000e+00 : bf16
    %255 = vector.broadcast %cst_35 : bf16 to vector<1x1x10x32xbf16>
    %256 = tpu.concatenate %255, %254, %255 in 1 : vector<1x1x10x32xbf16>, vector<1x8x10x32xbf16>, vector<1x1x10x32xbf16> -> vector<1x10x10x32xbf16>
    %257 = vector.extract_strided_slice %256 {offsets = [0, 0, 0, 0], sizes = [1, 8, 8, 32], strides = [1, 1, 1, 1]} : vector<1x10x10x32xbf16> to vector<1x8x8x32xbf16>
    %258 = vector.shape_cast %257 : vector<1x8x8x32xbf16> to vector<1x64x32xbf16>
    %259 = vector.extract_strided_slice %256 {offsets = [0, 0, 1, 0], sizes = [1, 8, 8, 32], strides = [1, 1, 1, 1]} : vector<1x10x10x32xbf16> to vector<1x8x8x32xbf16>
    %260 = vector.shape_cast %259 : vector<1x8x8x32xbf16> to vector<1x64x32xbf16>
    %261 = vector.extract_strided_slice %256 {offsets = [0, 0, 2, 0], sizes = [1, 8, 8, 32], strides = [1, 1, 1, 1]} : vector<1x10x10x32xbf16> to vector<1x8x8x32xbf16>
    %262 = vector.shape_cast %261 : vector<1x8x8x32xbf16> to vector<1x64x32xbf16>
    %263 = vector.extract_strided_slice %256 {offsets = [0, 1, 0, 0], sizes = [1, 8, 8, 32], strides = [1, 1, 1, 1]} : vector<1x10x10x32xbf16> to vector<1x8x8x32xbf16>
    %264 = vector.shape_cast %263 : vector<1x8x8x32xbf16> to vector<1x64x32xbf16>
    %265 = vector.extract_strided_slice %256 {offsets = [0, 1, 1, 0], sizes = [1, 8, 8, 32], strides = [1, 1, 1, 1]} : vector<1x10x10x32xbf16> to vector<1x8x8x32xbf16>
    %266 = vector.shape_cast %265 : vector<1x8x8x32xbf16> to vector<1x64x32xbf16>
    %267 = vector.extract_strided_slice %256 {offsets = [0, 1, 2, 0], sizes = [1, 8, 8, 32], strides = [1, 1, 1, 1]} : vector<1x10x10x32xbf16> to vector<1x8x8x32xbf16>
    %268 = vector.shape_cast %267 : vector<1x8x8x32xbf16> to vector<1x64x32xbf16>
    %269 = vector.extract_strided_slice %256 {offsets = [0, 2, 0, 0], sizes = [1, 8, 8, 32], strides = [1, 1, 1, 1]} : vector<1x10x10x32xbf16> to vector<1x8x8x32xbf16>
    %270 = vector.shape_cast %269 : vector<1x8x8x32xbf16> to vector<1x64x32xbf16>
    %271 = vector.extract_strided_slice %256 {offsets = [0, 2, 1, 0], sizes = [1, 8, 8, 32], strides = [1, 1, 1, 1]} : vector<1x10x10x32xbf16> to vector<1x8x8x32xbf16>
    %272 = vector.shape_cast %271 : vector<1x8x8x32xbf16> to vector<1x64x32xbf16>
    %273 = vector.extract_strided_slice %256 {offsets = [0, 2, 2, 0], sizes = [1, 8, 8, 32], strides = [1, 1, 1, 1]} : vector<1x10x10x32xbf16> to vector<1x8x8x32xbf16>
    %274 = vector.shape_cast %273 : vector<1x8x8x32xbf16> to vector<1x64x32xbf16>
    %275 = tpu.concatenate %258, %260, %262, %264, %266, %268, %270, %272, %274 in 2 : vector<1x64x32xbf16>, vector<1x64x32xbf16>, vector<1x64x32xbf16>, vector<1x64x32xbf16>, vector<1x64x32xbf16>, vector<1x64x32xbf16>, vector<1x64x32xbf16>, vector<1x64x32xbf16>, vector<1x64x32xbf16> -> vector<1x64x288xbf16>
    %276 = vector.shape_cast %275 : vector<1x64x288xbf16> to vector<64x288xbf16>
    %c0_36 = arith.constant 0 : index
    %c0_37 = arith.constant 0 : index
    %277 = vector.load %arg4[%c0_36, %c0_37] : memref<288x64xbf16, #tpu.memory_space<vmem>>, vector<288x64xbf16>
    %cst_38 = arith.constant dense<0.000000e+00> : vector<64x64xf32>
    %278 = tpu.matmul %276, %277, %cst_38 {dimension_numbers = #tpu.dot_dimension_numbers<[1], [0], [0], [1], [0, 0, 1, 1], [], []>} : vector<64x288xbf16>, vector<288x64xbf16>, vector<64x64xf32> -> vector<64x64xf32>
    %279 = vector.shape_cast %278 : vector<64x64xf32> to vector<1x64x64xf32>
    %cst_39 = arith.constant dense<0.000000e+00> : vector<1x64xf32>
    %280 = vector.multi_reduction <add>, %279, %cst_39 [1] : vector<1x64x64xf32> to vector<1x64xf32>
    %281 = vector.shape_cast %280 : vector<1x64xf32> to vector<1x1x64xf32>
    %282 = vector.extract_strided_slice %281 {offsets = [0, 0, 0], sizes = [1, 1, 16], strides = [1, 1, 1]} : vector<1x1x64xf32> to vector<1x1x16xf32>
    %283 = vector.extract_strided_slice %281 {offsets = [0, 0, 16], sizes = [1, 1, 16], strides = [1, 1, 1]} : vector<1x1x64xf32> to vector<1x1x16xf32>
    %284 = arith.addf %282, %283 : vector<1x1x16xf32>
    %285 = vector.extract_strided_slice %281 {offsets = [0, 0, 32], sizes = [1, 1, 16], strides = [1, 1, 1]} : vector<1x1x64xf32> to vector<1x1x16xf32>
    %286 = arith.addf %284, %285 : vector<1x1x16xf32>
    %287 = vector.extract_strided_slice %281 {offsets = [0, 0, 48], sizes = [1, 1, 16], strides = [1, 1, 1]} : vector<1x1x64xf32> to vector<1x1x16xf32>
    %288 = arith.addf %286, %287 : vector<1x1x16xf32>
    %cst_40 = arith.constant 3.906250e-03 : f32
    %289 = vector.broadcast %cst_40 : f32 to vector<1x1x16xf32>
    %290 = arith.mulf %288, %289 : vector<1x1x16xf32>
    %291 = tpu.concatenate %290, %290, %290, %290 in 2 : vector<1x1x16xf32>, vector<1x1x16xf32>, vector<1x1x16xf32>, vector<1x1x16xf32> -> vector<1x1x64xf32>
    %292 = vector.broadcast %291 : vector<1x1x64xf32> to vector<1x64x64xf32>
    %293 = arith.subf %279, %292 : vector<1x64x64xf32>
    %294 = arith.mulf %293, %293 : vector<1x64x64xf32>
    %cst_41 = arith.constant dense<0.000000e+00> : vector<1x64xf32>
    %295 = vector.multi_reduction <add>, %294, %cst_41 [1] : vector<1x64x64xf32> to vector<1x64xf32>
    %296 = vector.shape_cast %295 : vector<1x64xf32> to vector<1x1x64xf32>
    %297 = vector.extract_strided_slice %296 {offsets = [0, 0, 0], sizes = [1, 1, 16], strides = [1, 1, 1]} : vector<1x1x64xf32> to vector<1x1x16xf32>
    %298 = vector.extract_strided_slice %296 {offsets = [0, 0, 16], sizes = [1, 1, 16], strides = [1, 1, 1]} : vector<1x1x64xf32> to vector<1x1x16xf32>
    %299 = arith.addf %297, %298 : vector<1x1x16xf32>
    %300 = vector.extract_strided_slice %296 {offsets = [0, 0, 32], sizes = [1, 1, 16], strides = [1, 1, 1]} : vector<1x1x64xf32> to vector<1x1x16xf32>
    %301 = arith.addf %299, %300 : vector<1x1x16xf32>
    %302 = vector.extract_strided_slice %296 {offsets = [0, 0, 48], sizes = [1, 1, 16], strides = [1, 1, 1]} : vector<1x1x64xf32> to vector<1x1x16xf32>
    %303 = arith.addf %301, %302 : vector<1x1x16xf32>
    %cst_42 = arith.constant 3.906250e-03 : f32
    %304 = vector.broadcast %cst_42 : f32 to vector<1x1x16xf32>
    %305 = arith.mulf %303, %304 : vector<1x1x16xf32>
    %cst_43 = arith.constant 9.99999974E-6 : f32
    %306 = vector.broadcast %cst_43 : f32 to vector<1x1x16xf32>
    %307 = arith.addf %305, %306 : vector<1x1x16xf32>
    %308 = math.rsqrt %307 : vector<1x1x16xf32>
    %309 = tpu.concatenate %308, %308, %308, %308 in 2 : vector<1x1x16xf32>, vector<1x1x16xf32>, vector<1x1x16xf32>, vector<1x1x16xf32> -> vector<1x1x64xf32>
    %310 = vector.broadcast %309 : vector<1x1x64xf32> to vector<1x64x64xf32>
    %311 = arith.mulf %293, %310 : vector<1x64x64xf32>
    %cst_44 = arith.constant 0.000000e+00 : f32
    %312 = vector.broadcast %cst_44 : f32 to vector<1x64x64xf32>
    %313 = arith.maximumf %311, %312 : vector<1x64x64xf32>
    %314 = arith.truncf %313 : vector<1x64x64xf32> to vector<1x64x64xbf16>
    %315 = vector.extract_strided_slice %314 {offsets = [0, 0, 0], sizes = [1, 64, 16], strides = [1, 1, 1]} : vector<1x64x64xbf16> to vector<1x64x16xbf16>
    %316 = vector.shape_cast %315 : vector<1x64x16xbf16> to vector<1x8x8x16xbf16>
    %317 = vector.extract_strided_slice %314 {offsets = [0, 0, 16], sizes = [1, 64, 16], strides = [1, 1, 1]} : vector<1x64x64xbf16> to vector<1x64x16xbf16>
    %318 = vector.shape_cast %317 : vector<1x64x16xbf16> to vector<1x8x8x16xbf16>
    %319 = vector.shape_cast %316 : vector<1x8x8x16xbf16> to vector<1x8x8x1x16xbf16>
    %320 = vector.shape_cast %318 : vector<1x8x8x16xbf16> to vector<1x8x8x1x16xbf16>
    %321 = tpu.concatenate %319, %320 in 3 : vector<1x8x8x1x16xbf16>, vector<1x8x8x1x16xbf16> -> vector<1x8x8x2x16xbf16>
    %322 = vector.shape_cast %321 : vector<1x8x8x2x16xbf16> to vector<1x8x16x16xbf16>
    %323 = vector.extract_strided_slice %314 {offsets = [0, 0, 32], sizes = [1, 64, 16], strides = [1, 1, 1]} : vector<1x64x64xbf16> to vector<1x64x16xbf16>
    %324 = vector.shape_cast %323 : vector<1x64x16xbf16> to vector<1x8x8x16xbf16>
    %325 = vector.extract_strided_slice %314 {offsets = [0, 0, 48], sizes = [1, 64, 16], strides = [1, 1, 1]} : vector<1x64x64xbf16> to vector<1x64x16xbf16>
    %326 = vector.shape_cast %325 : vector<1x64x16xbf16> to vector<1x8x8x16xbf16>
    %327 = vector.shape_cast %324 : vector<1x8x8x16xbf16> to vector<1x8x8x1x16xbf16>
    %328 = vector.shape_cast %326 : vector<1x8x8x16xbf16> to vector<1x8x8x1x16xbf16>
    %329 = tpu.concatenate %327, %328 in 3 : vector<1x8x8x1x16xbf16>, vector<1x8x8x1x16xbf16> -> vector<1x8x8x2x16xbf16>
    %330 = vector.shape_cast %329 : vector<1x8x8x2x16xbf16> to vector<1x8x16x16xbf16>
    %331 = vector.shape_cast %322 : vector<1x8x16x16xbf16> to vector<1x8x1x16x16xbf16>
    %332 = vector.shape_cast %330 : vector<1x8x16x16xbf16> to vector<1x8x1x16x16xbf16>
    %333 = tpu.concatenate %331, %332 in 2 : vector<1x8x1x16x16xbf16>, vector<1x8x1x16x16xbf16> -> vector<1x8x2x16x16xbf16>
    %334 = vector.shape_cast %333 : vector<1x8x2x16x16xbf16> to vector<1x16x16x16xbf16>
    %cst_45 = arith.constant 0.000000e+00 : bf16
    %335 = vector.broadcast %cst_45 : bf16 to vector<1x16x1x16xbf16>
    %336 = tpu.concatenate %335, %334, %335 in 2 : vector<1x16x1x16xbf16>, vector<1x16x16x16xbf16>, vector<1x16x1x16xbf16> -> vector<1x16x18x16xbf16>
    %cst_46 = arith.constant 0.000000e+00 : bf16
    %337 = vector.broadcast %cst_46 : bf16 to vector<1x1x18x16xbf16>
    %338 = tpu.concatenate %337, %336, %337 in 1 : vector<1x1x18x16xbf16>, vector<1x16x18x16xbf16>, vector<1x1x18x16xbf16> -> vector<1x18x18x16xbf16>
    %339 = vector.extract_strided_slice %338 {offsets = [0, 0, 0, 0], sizes = [1, 16, 16, 16], strides = [1, 1, 1, 1]} : vector<1x18x18x16xbf16> to vector<1x16x16x16xbf16>
    %340 = vector.shape_cast %339 : vector<1x16x16x16xbf16> to vector<1x256x16xbf16>
    %341 = vector.extract_strided_slice %338 {offsets = [0, 0, 1, 0], sizes = [1, 16, 16, 16], strides = [1, 1, 1, 1]} : vector<1x18x18x16xbf16> to vector<1x16x16x16xbf16>
    %342 = vector.shape_cast %341 : vector<1x16x16x16xbf16> to vector<1x256x16xbf16>
    %343 = vector.extract_strided_slice %338 {offsets = [0, 0, 2, 0], sizes = [1, 16, 16, 16], strides = [1, 1, 1, 1]} : vector<1x18x18x16xbf16> to vector<1x16x16x16xbf16>
    %344 = vector.shape_cast %343 : vector<1x16x16x16xbf16> to vector<1x256x16xbf16>
    %345 = vector.extract_strided_slice %338 {offsets = [0, 1, 0, 0], sizes = [1, 16, 16, 16], strides = [1, 1, 1, 1]} : vector<1x18x18x16xbf16> to vector<1x16x16x16xbf16>
    %346 = vector.shape_cast %345 : vector<1x16x16x16xbf16> to vector<1x256x16xbf16>
    %347 = vector.extract_strided_slice %338 {offsets = [0, 1, 1, 0], sizes = [1, 16, 16, 16], strides = [1, 1, 1, 1]} : vector<1x18x18x16xbf16> to vector<1x16x16x16xbf16>
    %348 = vector.shape_cast %347 : vector<1x16x16x16xbf16> to vector<1x256x16xbf16>
    %349 = vector.extract_strided_slice %338 {offsets = [0, 1, 2, 0], sizes = [1, 16, 16, 16], strides = [1, 1, 1, 1]} : vector<1x18x18x16xbf16> to vector<1x16x16x16xbf16>
    %350 = vector.shape_cast %349 : vector<1x16x16x16xbf16> to vector<1x256x16xbf16>
    %351 = vector.extract_strided_slice %338 {offsets = [0, 2, 0, 0], sizes = [1, 16, 16, 16], strides = [1, 1, 1, 1]} : vector<1x18x18x16xbf16> to vector<1x16x16x16xbf16>
    %352 = vector.shape_cast %351 : vector<1x16x16x16xbf16> to vector<1x256x16xbf16>
    %353 = vector.extract_strided_slice %338 {offsets = [0, 2, 1, 0], sizes = [1, 16, 16, 16], strides = [1, 1, 1, 1]} : vector<1x18x18x16xbf16> to vector<1x16x16x16xbf16>
    %354 = vector.shape_cast %353 : vector<1x16x16x16xbf16> to vector<1x256x16xbf16>
    %355 = vector.extract_strided_slice %338 {offsets = [0, 2, 2, 0], sizes = [1, 16, 16, 16], strides = [1, 1, 1, 1]} : vector<1x18x18x16xbf16> to vector<1x16x16x16xbf16>
    %356 = vector.shape_cast %355 : vector<1x16x16x16xbf16> to vector<1x256x16xbf16>
    %357 = tpu.concatenate %340, %342, %344, %346, %348, %350, %352, %354, %356 in 2 : vector<1x256x16xbf16>, vector<1x256x16xbf16>, vector<1x256x16xbf16>, vector<1x256x16xbf16>, vector<1x256x16xbf16>, vector<1x256x16xbf16>, vector<1x256x16xbf16>, vector<1x256x16xbf16>, vector<1x256x16xbf16> -> vector<1x256x144xbf16>
    %358 = vector.shape_cast %357 : vector<1x256x144xbf16> to vector<256x144xbf16>
    %c0_47 = arith.constant 0 : index
    %c0_48 = arith.constant 0 : index
    %359 = vector.load %arg5[%c0_47, %c0_48] : memref<144x12xbf16, #tpu.memory_space<vmem>>, vector<144x12xbf16>
    %cst_49 = arith.constant dense<0.000000e+00> : vector<256x12xf32>
    %360 = tpu.matmul %358, %359, %cst_49 {dimension_numbers = #tpu.dot_dimension_numbers<[1], [0], [0], [1], [0, 0, 1, 1], [], []>} : vector<256x144xbf16>, vector<144x12xbf16>, vector<256x12xf32> -> vector<256x12xf32>
    %361 = vector.shape_cast %360 : vector<256x12xf32> to vector<1x256x12xf32>
    %c0_50 = arith.constant 0 : index
    %c0_51 = arith.constant 0 : index
    %362 = vector.load %arg6[%c0_50, %c0_51] : memref<1x12xf32, #tpu.memory_space<vmem>>, vector<1x12xf32>
    %363 = vector.shape_cast %362 : vector<1x12xf32> to vector<1x1x12xf32>
    %364 = vector.broadcast %363 : vector<1x1x12xf32> to vector<1x256x12xf32>
    %365 = arith.addf %361, %364 : vector<1x256x12xf32>
    %366 = math.tanh %365 : vector<1x256x12xf32>
    %c0_52 = arith.constant 0 : index
    %c0_53 = arith.constant 0 : index
    %c0_54 = arith.constant 0 : index
    %367 = vector.load %arg7[%c0_52, %c0_53, %c0_54] : memref<1x256x12xf32, #tpu.memory_space<vmem>>, vector<1x256x12xf32>
    tpu.vector_store %arg7[%c0_52, %c0_53, %c0_54], %366 {strides = array<i32>} : memref<1x256x12xf32, #tpu.memory_space<vmem>>, vector<1x256x12xf32>,
    return
  }
  func.func @transform_0(%arg0: i32) -> (i32, i32, i32) {
    %c0_i32 = arith.constant 0 : i32
    %c0_i32_0 = arith.constant 0 : i32
    %c0_i32_1 = arith.constant 0 : i32
    return %arg0, %c0_i32, %c0_i32_0 : i32, i32, i32
  }
  func.func @transform_1(%arg0: i32) -> (i32, i32) {
    %c0_i32 = arith.constant 0 : i32
    %c0_i32_0 = arith.constant 0 : i32
    %c0_i32_1 = arith.constant 0 : i32
    return %c0_i32, %c0_i32_0 : i32, i32
  }
  func.func @transform_2(%arg0: i32) -> (i32, i32) {
    %c0_i32 = arith.constant 0 : i32
    %c0_i32_0 = arith.constant 0 : i32
    %c0_i32_1 = arith.constant 0 : i32
    return %c0_i32, %c0_i32_0 : i32, i32
  }
  func.func @transform_3(%arg0: i32) -> (i32, i32) {
    %c0_i32 = arith.constant 0 : i32
    %c0_i32_0 = arith.constant 0 : i32
    %c0_i32_1 = arith.constant 0 : i32
    return %c0_i32, %c0_i32_0 : i32, i32
  }
  func.func @transform_4(%arg0: i32) -> (i32, i32) {
    %c0_i32 = arith.constant 0 : i32
    %c0_i32_0 = arith.constant 0 : i32
    %c0_i32_1 = arith.constant 0 : i32
    return %c0_i32, %c0_i32_0 : i32, i32
  }
  func.func @transform_5(%arg0: i32) -> (i32, i32) {
    %c0_i32 = arith.constant 0 : i32
    %c0_i32_0 = arith.constant 0 : i32
    %c0_i32_1 = arith.constant 0 : i32
    return %c0_i32, %c0_i32_0 : i32, i32
  }
  func.func @transform_6(%arg0: i32) -> (i32, i32, i32) {
    %c0_i32 = arith.constant 0 : i32
    %c0_i32_0 = arith.constant 0 : i32
    %c0_i32_1 = arith.constant 0 : i32
    return %arg0, %c0_i32, %c0_i32_0 : i32, i32, i32
  }
}

</mosaic_0001>

<llo_original>
// kernel: tile.8
$region0: #{tile.8}
  #allocation2 [shape = 's32[1]{0}', space=sflag, size = 0x4, scoped, tag = 'scoped memory for tile.8']
  %s0 = inlined_call_operand.hbm [shape: f32[3], index: 0, kind: input, shape index: {}]
  %s1 = inlined_call_operand.vmem [shape: f32[4,3], index: 1, kind: output, shape index: {}]
  $region1: #{tile.8} parent=0
    #allocation0 [shape = 'u8[512]{0}', space=vmem, size = 0x400, scoped, tag = 'operand span for operand 0']
    #allocation1 [shape = 's32[1]{0}', space=sflag, size = 0x4, scoped, tag = 'scoped memory for tile.8']
    %2 = vsyncpa [#allocation1], 0
    // Predicated region
    $region2: #{tile.8} parent=1 // pred_check
      _
    $region3: #{tile.8} parent=1 // pred_check_branch
      %4 = sbr.rel (0) target = $region5
    $region4: #{tile.8} parent=1 // pred_region
      %s6 = ssub.s32 16, 16
      %7 = vsyncadd [#allocation1], %s6
      %s9 = sshll.u32 [#allocation0], 4
      %s10 = int_to_ptr.vmem [resolvable:$true] %s9
      %12 = dma.hbm_to_vmem [thread:$0]  %s0, 16, %s10, [#allocation1]
    $region5: #{tile.8} parent=1 // pred_fallthru
      _
    // Predicated region
    $region6: #{tile.8} parent=1 // pred_check
      _
    $region7: #{tile.8} parent=1 // pred_check_branch
      %14 = sbr.rel (0) target = $region9
    $region8: #{tile.8} parent=1 // pred_region
      %15 = dma.done [#allocation1], 16
    $region9: #{tile.8} parent=1 // pred_fallthru
      _
    %v16 = vld [vmem:[#allocation0] ss:$0 sm:$0xff]
    %17 = vst [vmem:[%s1] sm:$0xf] %v16
    %18 = vsyncpa [#allocation1], 1

// kernel: tile.9
$region0: #{tile.9}
  %s0 = inlined_call_operand.vmem [shape: f32[4,3], index: 0, kind: input, shape index: {}]
  %s1 = inlined_call_operand.vmem [shape: f32[1,12], index: 1, kind: output, shape index: {}]
  $region1: #{tile.9} parent=0
    #allocation0 [shape = 'u8[4096]{0}', space=vmem, size = 0x1000, scoped, tag = 'scoped mem for output reshape']
    #allocation1 [shape = 'u8[4096]{0}', space=vmem, size = 0x1000, scoped, tag = 'scoped mem for input reshape']
    %s3 = sshllo.u32 0, 4
    %v4 = vld [vmem:[%s0] sm:%s3]
    %5 = vst [vmem:[#allocation1] sm:%s3] %v4
    %v6 = vld [vmem:[#allocation1] sm:$0x1]
    %vm7 = vcmask 23552
    %8 = vst.msk [vmem:[#allocation0] sm:$0x1] %vm7, %v6
    %s9 = scalar_lea.vmem [#allocation1], 3
    %v10 = vld [vmem:[%s9] sm:$0x1]
    %11 = vrot.lane.b32.xlu0 %v10, 9
    %v12 = vpop.permute.xlu0 %11
    %vm13 = vcmask 97352
    %14 = vst.msk [vmem:[#allocation0] sm:$0x1] %vm13, %v12
    %s15 = scalar_lea.vmem [#allocation1], 2
    %v16 = vld [vmem:[%s15] sm:$0x1]
    %17 = vrot.lane.b32.xlu0 %v16, 6
    %v18 = vpop.permute.xlu0 %17
    %vm19 = vcmask 72752
    %20 = vst.msk [vmem:[#allocation0] sm:$0x1] %vm19, %v18
    %s21 = scalar_lea.vmem [#allocation1], 1
    %v22 = vld [vmem:[%s21] sm:$0x1]
    %23 = vrot.lane.b32.xlu0 %v22, 3
    %v24 = vpop.permute.xlu0 %23
    %vm25 = vcmask 48152
    %26 = vst.msk [vmem:[#allocation0] sm:$0x1] %vm25, %v24
    %s28 = sshllo.u32 0, 1
    %v30 = vld [vmem:[#allocation0] sm:%s28]
    %s31 = sshllo.u32 0, 1
    %32 = vst [vmem:[%s1] sm:%s31] %v30

// kernel: generator_forward.1
$region0: #{generator_forward.1}
  #allocation0 [shape = 'u32[]', space=smem, size = 0x4, offset = 0x4, fixed_abs, tag = 'smem constant byte address 0x4 - core index']
  #allocation1 [shape = 'u32[144,128]{1,0:T(1,128)}', space=vmem, size = 0x12000, scoped, tag = 'internal scratch']
  %s0 = inlined_call_operand.vmem [shape: bf16[2,1,48], index: 0, kind: input, shape index: {}]
  %s1 = inlined_call_operand.vmem [shape: bf16[48,1024], index: 1, kind: input, shape index: {}]
  %s2 = inlined_call_operand.vmem [shape: bf16[576,128], index: 2, kind: input, shape index: {}]
  %s3 = inlined_call_operand.vmem [shape: bf16[288,64], index: 3, kind: input, shape index: {}]
  %s4 = inlined_call_operand.vmem [shape: bf16[144,12], index: 4, kind: input, shape index: {}]
  %s5 = inlined_call_operand.vmem [shape: f32[1,12], index: 5, kind: input, shape index: {}]
  %s6 = inlined_call_operand.vmem [shape: f32[2,256,12], index: 6, kind: output, shape index: {}]
  %s7 = sld [smem:[#allocation0]]
  $region57: #{generator_forward.1} parent=0
    _
  %s9 = ssub.s32 1, %s7
  %s10 = scalar_select 0, %s9, %s7
  loop: start=0, step=1, limit=4
  $region2: #{generator_forward.1} parent=0 // loop_pre_header
    _
  $region3: #{generator_forward.1} parent=0 // loop_header
    %s12 = sphi 0, %s16
    %p13 = scmp.ge.s32.totalorder %s12, 4
    %s22 = sphi 0, %s24
    %s25 = sphi 0, %s22
    %s26 = sphi 0, %s25
    %s42 = sphi 0, %s26
    %s46 = sphi 0, %s46
    %s48 = sphi 0, %s46
    %s49 = sphi 0, %s48
    %s63 = sphi 0, %s49
    %s67 = sphi 0, %s67
    %s69 = sphi 0, %s67
    %s70 = sphi 0, %s69
    %s84 = sphi 0, %s70
    %s88 = sphi 0, %s88
    %s90 = sphi 0, %s88
    %s91 = sphi 0, %s90
    %s105 = sphi 0, %s91
    %s109 = sphi 0, %s109
    %s111 = sphi 0, %s109
    %s112 = sphi 0, %s111
    %s126 = sphi 0, %s112
    %s130 = sphi 0, %s130
    %s132 = sphi 0, %s130
    %s133 = sphi 0, %s132
    %s147 = sphi 0, %s133
    %s153 = sphi 0, %s155
    %s156 = sphi 0, %s153
    %s157 = sphi 0, %s156
    %s173 = sphi 0, %s157
  $region4: #{generator_forward.1} parent=0 // loop_header_branch
    %15 = sbr.rel (%p13) target = $region8
  $region5: #{generator_forward.1} parent=0 // loop_body
    %s17 = ssub.s32 %s12, 1
    %s18 = ssub.s32 %s12, 2
    %s19 = sadd.s32 %s12, 1
    %s20 = ssub.s32 %s12, %s19
    %p21 = scmp.eq.s32.totalorder %s20, 0
    %s23 = sadd.s32 %s22, 1
    %s24 = scalar_select %p21, %s22, %s23
    %p27 = pneg %p21
    %p28 = scmp.eq.s32.totalorder %s12, 1
    %p29 = por %p27, %p28
    %p30 = scmp.ne.s32.totalorder %s22, %s25
    %p31 = scmp.eq.s32.totalorder %s12, 0
    %p32 = por %p30, %p31
    %p33 = scmp.ne.s32.totalorder %s22, %s25
    %p34 = scmp.eq.s32.totalorder %s17, 1
    %p35 = por %p33, %p34
    %p36 = scmp.ne.s32.totalorder %s25, %s26
    %p37 = scmp.eq.s32.totalorder %s17, 0
    %p38 = por %p36, %p37
    %p39 = scmp.ne.s32.totalorder %s25, %s26
    %p40 = scmp.eq.s32.totalorder %s18, 1
    %p41 = por %p39, %p40
    %p43 = scmp.ne.s32.totalorder %s26, %s42
    %p44 = scmp.eq.s32.totalorder %s18, 0
    %p45 = por %p43, %p44
    %s47 = sadd.s32 %s46, 1
    %p50 = scmp.eq.s32.totalorder %s12, 1
    %p51 = scmp.ne.s32.totalorder %s46, %s48
    %p52 = scmp.eq.s32.totalorder %s12, 0
    %p53 = por %p51, %p52
    %p54 = scmp.ne.s32.totalorder %s46, %s48
    %p55 = scmp.eq.s32.totalorder %s17, 1
    %p56 = por %p54, %p55
    %p57 = scmp.ne.s32.totalorder %s48, %s49
    %p58 = scmp.eq.s32.totalorder %s17, 0
    %p59 = por %p57, %p58
    %p60 = scmp.ne.s32.totalorder %s48, %s49
    %p61 = scmp.eq.s32.totalorder %s18, 1
    %p62 = por %p60, %p61
    %p64 = scmp.ne.s32.totalorder %s49, %s63
    %p65 = scmp.eq.s32.totalorder %s18, 0
    %p66 = por %p64, %p65
    %s68 = sadd.s32 %s67, 1
    %p71 = scmp.eq.s32.totalorder %s12, 1
    %p72 = scmp.ne.s32.totalorder %s67, %s69
    %p73 = scmp.eq.s32.totalorder %s12, 0
    %p74 = por %p72, %p73
    %p75 = scmp.ne.s32.totalorder %s67, %s69
    %p76 = scmp.eq.s32.totalorder %s17, 1
    %p77 = por %p75, %p76
    %p78 = scmp.ne.s32.totalorder %s69, %s70
    %p79 = scmp.eq.s32.totalorder %s17, 0
    %p80 = por %p78, %p79
    %p81 = scmp.ne.s32.totalorder %s69, %s70
    %p82 = scmp.eq.s32.totalorder %s18, 1
    %p83 = por %p81, %p82
    %p85 = scmp.ne.s32.totalorder %s70, %s84
    %p86 = scmp.eq.s32.totalorder %s18, 0
    %p87 = por %p85, %p86
    %s89 = sadd.s32 %s88, 1
    %p92 = scmp.eq.s32.totalorder %s12, 1
    %p93 = scmp.ne.s32.totalorder %s88, %s90
    %p94 = scmp.eq.s32.totalorder %s12, 0
    %p95 = por %p93, %p94
    %p96 = scmp.ne.s32.totalorder %s88, %s90
    %p97 = scmp.eq.s32.totalorder %s17, 1
    %p98 = por %p96, %p97
    %p99 = scmp.ne.s32.totalorder %s90, %s91
    %p100 = scmp.eq.s32.totalorder %s17, 0
    %p101 = por %p99, %p100
    %p102 = scmp.ne.s32.totalorder %s90, %s91
    %p103 = scmp.eq.s32.totalorder %s18, 1
    %p104 = por %p102, %p103
    %p106 = scmp.ne.s32.totalorder %s91, %s105
    %p107 = scmp.eq.s32.totalorder %s18, 0
    %p108 = por %p106, %p107
    %s110 = sadd.s32 %s109, 1
    %p113 = scmp.eq.s32.totalorder %s12, 1
    %p114 = scmp.ne.s32.totalorder %s109, %s111
    %p115 = scmp.eq.s32.totalorder %s12, 0
    %p116 = por %p114, %p115
    %p117 = scmp.ne.s32.totalorder %s109, %s111
    %p118 = scmp.eq.s32.totalorder %s17, 1
    %p119 = por %p117, %p118
    %p120 = scmp.ne.s32.totalorder %s111, %s112
    %p121 = scmp.eq.s32.totalorder %s17, 0
    %p122 = por %p120, %p121
    %p123 = scmp.ne.s32.totalorder %s111, %s112
    %p124 = scmp.eq.s32.totalorder %s18, 1
    %p125 = por %p123, %p124
    %p127 = scmp.ne.s32.totalorder %s112, %s126
    %p128 = scmp.eq.s32.totalorder %s18, 0
    %p129 = por %p127, %p128
    %s131 = sadd.s32 %s130, 1
    %p134 = scmp.eq.s32.totalorder %s12, 1
    %p135 = scmp.ne.s32.totalorder %s130, %s132
    %p136 = scmp.eq.s32.totalorder %s12, 0
    %p137 = por %p135, %p136
    %p138 = scmp.ne.s32.totalorder %s130, %s132
    %p139 = scmp.eq.s32.totalorder %s17, 1
    %p140 = por %p138, %p139
    %p141 = scmp.ne.s32.totalorder %s132, %s133
    %p142 = scmp.eq.s32.totalorder %s17, 0
    %p143 = por %p141, %p142
    %p144 = scmp.ne.s32.totalorder %s132, %s133
    %p145 = scmp.eq.s32.totalorder %s18, 1
    %p146 = por %p144, %p145
    %p148 = scmp.ne.s32.totalorder %s133, %s147
    %p149 = scmp.eq.s32.totalorder %s18, 0
    %p150 = por %p148, %p149
    %s151 = ssub.s32 %s12, %s19
    %p152 = scmp.eq.s32.totalorder %s151, 0
    %s154 = sadd.s32 %s153, 1
    %s155 = scalar_select %p152, %s153, %s154
    %p158 = pneg %p152
    %p159 = scmp.eq.s32.totalorder %s12, 1
    %p160 = por %p158, %p159
    %p161 = scmp.ne.s32.totalorder %s153, %s156
    %p162 = scmp.eq.s32.totalorder %s12, 0
    %p163 = por %p161, %p162
    %p164 = scmp.ne.s32.totalorder %s153, %s156
    %p165 = scmp.eq.s32.totalorder %s17, 1
    %p166 = por %p164, %p165
    %p167 = scmp.ne.s32.totalorder %s156, %s157
    %p168 = scmp.eq.s32.totalorder %s17, 0
    %p169 = por %p167, %p168
    %p170 = scmp.ne.s32.totalorder %s156, %s157
    %p171 = scmp.eq.s32.totalorder %s18, 1
    %p172 = por %p170, %p171
    %p174 = scmp.ne.s32.totalorder %s157, %s173
    %p175 = scmp.eq.s32.totalorder %s18, 0
    %p176 = por %p174, %p175
    %p177 = scmp.le.s32.totalorder 1, %s12
    %p178 = scmp.lt.s32.totalorder %s12, 3
    %p179 = pnand %p177, %p178
    %p180 = pneg %p179
    // Predicated region
    $region9: #{generator_forward.1} parent=5 // pred_check
      _
    $region10: #{generator_forward.1} parent=5 // pred_check_branch
      %182 = sbr.rel (%p179) target = $region12
    $region11: #{generator_forward.1} parent=5 // pred_region
      %s183 = ssub.s32 %s12, 1
      // Predicated region
      $region13: #{generator_forward.1} parent=11 // pred_check
        %p184 = pneg %p59
      $region14: #{generator_forward.1} parent=11 // pred_check_branch
        %186 = sbr.rel (%p184) target = $region16
      $region15: #{generator_forward.1} parent=11 // pred_region
        _
      $region16: #{generator_forward.1} parent=11 // pred_fallthru
        _
      // Predicated region
      $region17: #{generator_forward.1} parent=11 // pred_check
        %p187 = pneg %p80
      $region18: #{generator_forward.1} parent=11 // pred_check_branch
        %189 = sbr.rel (%p187) target = $region20
      $region19: #{generator_forward.1} parent=11 // pred_region
        _
      $region20: #{generator_forward.1} parent=11 // pred_fallthru
        _
      // Predicated region
      $region21: #{generator_forward.1} parent=11 // pred_check
        %p190 = pneg %p101
      $region22: #{generator_forward.1} parent=11 // pred_check_branch
        %192 = sbr.rel (%p190) target = $region24
      $region23: #{generator_forward.1} parent=11 // pred_region
        _
      $region24: #{generator_forward.1} parent=11 // pred_fallthru
        _
      // Predicated region
      $region25: #{generator_forward.1} parent=11 // pred_check
        %p193 = pneg %p122
      $region26: #{generator_forward.1} parent=11 // pred_check_branch
        %195 = sbr.rel (%p193) target = $region28
      $region27: #{generator_forward.1} parent=11 // pred_region
        _
      $region28: #{generator_forward.1} parent=11 // pred_fallthru
        _
      // Predicated region
      $region29: #{generator_forward.1} parent=11 // pred_check
        %p196 = pneg %p143
      $region30: #{generator_forward.1} parent=11 // pred_check_branch
        %198 = sbr.rel (%p196) target = $region32
      $region31: #{generator_forward.1} parent=11 // pred_region
        _
      $region32: #{generator_forward.1} parent=11 // pred_fallthru
        _
    $region12: #{generator_forward.1} parent=5 // pred_fallthru
      _
    %p199 = scmp.lt.s32.totalorder %s12, 2
    // Predicated region
    $region33: #{generator_forward.1} parent=5 // pred_check
      %p200 = pneg %p199
    $region34: #{generator_forward.1} parent=5 // pred_check_branch
      %202 = sbr.rel (%p200) target = $region36
    $region35: #{generator_forward.1} parent=5 // pred_region
      // Predicated region
      $region37: #{generator_forward.1} parent=35 // pred_check
        %p203 = pneg %p32
      $region38: #{generator_forward.1} parent=35 // pred_check_branch
        %205 = sbr.rel (%p203) target = $region40
      $region39: #{generator_forward.1} parent=35 // pred_region
        %p206 = scmp.lt.s32.totalorder %s12, 1
        %s207 = scalar_select %p206, %s12, 1
        %s208 = scalar_lea.vmem %s0, %s207
      $region40: #{generator_forward.1} parent=35 // pred_fallthru
        _
    $region36: #{generator_forward.1} parent=5 // pred_fallthru
      _
    %p209 = scmp.le.s32.totalorder 1, %s12
    %p210 = scmp.lt.s32.totalorder %s12, 3
    %p211 = pnand %p209, %p210
    %p212 = pneg %p211
    // Predicated region
    $region41: #{generator_forward.1} parent=5 // pred_check
      _
    $region42: #{generator_forward.1} parent=5 // pred_check_branch
      %214 = sbr.rel (%p211) target = $region44
    $region43: #{generator_forward.1} parent=5 // pred_region
      %s215 = ssub.s32 %s12, 1
      %p216 = scmp.lt.s32.totalorder %s17, 1
      %s217 = scalar_select %p216, %s17, 1
      %s218 = scalar_lea.vmem %s0, %s217
      %p219 = pneg %p38
      %p220 = pneg %p35
      %p221 = pneg %p59
      %p222 = pneg %p56
      %p223 = pneg %p80
      %p224 = pneg %p77
      %p225 = pneg %p101
      %p226 = pneg %p98
      %p227 = pneg %p122
      %p228 = pneg %p119
      %p229 = pneg %p143
      %p230 = pneg %p140
      %p231 = pneg %p169
      %p232 = pneg %p166
      %p233 = scmp.lt.s32.totalorder %s17, 1
      %s234 = scalar_select %p233, %s17, 1
      %s235 = smul.addr %s234, 32
      %s236 = smul.addr %s235, 8
      %s237 = scalar_lea.vmem %s6, %s236
      %p238 = scmp.lt.s32.totalorder %s17, 1
      %s239 = scalar_select %p238, %s17, 1
      %s240 = scalar_lea.vmem %s0, %s239
      %p241 = scmp.lt.s32.totalorder %s17, 1
      %s242 = scalar_select %p241, %s17, 1
      %s243 = smul.addr %s242, 32
      %s244 = smul.addr %s243, 8
      %s245 = scalar_lea.vmem %s6, %s244
      %v247 = vld [vmem:[%s240] sm:$0x1]
      %v248 = vld [vmem:[%s1] sm:$0xff]
      %v249 = vld [vmem:[%s1 + $0x8] sm:$0xff]
      %v250 = vld [vmem:[%s1 + $0x10] sm:$0xff]
      %v251 = vld [vmem:[%s1 + $0x18] sm:$0xff]
      %v252 = vld [vmem:[%s1 + $0x20] sm:$0xff]
      %v253 = vld [vmem:[%s1 + $0x28] sm:$0xff]
      %v254 = vld [vmem:[%s1 + $0x30] sm:$0xff]
      %v255 = vld [vmem:[%s1 + $0x38] sm:$0xff]
      %v256 = vld [vmem:[%s1 + $0x40] sm:$0xff]
      %v257 = vld [vmem:[%s1 + $0x48] sm:$0xff]
      %v258 = vld [vmem:[%s1 + $0x50] sm:$0xff]
      %v259 = vld [vmem:[%s1 + $0x58] sm:$0xff]
      %v260 = vld [vmem:[%s1 + $0x60] sm:$0xff]
      %v261 = vld [vmem:[%s1 + $0x68] sm:$0xff]
      %v262 = vld [vmem:[%s1 + $0x70] sm:$0xff]
      %v263 = vld [vmem:[%s1 + $0x78] sm:$0xff]
      %v264 = vld [vmem:[%s1 + $0x80] sm:$0xff]
      %v265 = vld [vmem:[%s1 + $0x88] sm:$0xff]
      %v266 = vld [vmem:[%s1 + $0x90] sm:$0xff]
      %v267 = vld [vmem:[%s1 + $0x98] sm:$0xff]
      %v268 = vld [vmem:[%s1 + $0xa0] sm:$0xff]
      %v269 = vld [vmem:[%s1 + $0xa8] sm:$0xff]
      %v270 = vld [vmem:[%s1 + $0xb0] sm:$0xff]
      %v271 = vld [vmem:[%s1 + $0xb8] sm:$0xff]
      %v296 = vunpack.c.l.b16 %v248
      %v297 = vunpack.c.h.b16 %v248
      %v298 = vunpack.c.l.b16 %v249
      %v299 = vunpack.c.h.b16 %v249
      %v300 = vunpack.c.l.b16 %v250
      %v301 = vunpack.c.h.b16 %v250
      %v302 = vunpack.c.l.b16 %v251
      %v303 = vunpack.c.h.b16 %v251
      %v304 = vunpack.c.l.b16 %v252
      %v305 = vunpack.c.h.b16 %v252
      %v306 = vunpack.c.l.b16 %v253
      %v307 = vunpack.c.h.b16 %v253
      %v308 = vunpack.c.l.b16 %v254
      %v309 = vunpack.c.h.b16 %v254
      %v310 = vunpack.c.l.b16 %v255
      %v311 = vunpack.c.h.b16 %v255
      %v312 = vunpack.c.l.b16 %v256
      %v313 = vunpack.c.h.b16 %v256
      %v314 = vunpack.c.l.b16 %v257
      %v315 = vunpack.c.h.b16 %v257
      %v316 = vunpack.c.l.b16 %v258
      %v317 = vunpack.c.h.b16 %v258
      %v318 = vunpack.c.l.b16 %v259
      %v319 = vunpack.c.h.b16 %v259
      %v320 = vunpack.c.l.b16 %v260
      %v321 = vunpack.c.h.b16 %v260
      %v322 = vunpack.c.l.b16 %v261
      %v323 = vunpack.c.h.b16 %v261
      %v324 = vunpack.c.l.b16 %v262
      %v325 = vunpack.c.h.b16 %v262
      %v326 = vunpack.c.l.b16 %v263
      %v327 = vunpack.c.h.b16 %v263
      %v328 = vunpack.c.l.b16 %v264
      %v329 = vunpack.c.h.b16 %v264
      %v330 = vunpack.c.l.b16 %v265
      %v331 = vunpack.c.h.b16 %v265
      %v332 = vunpack.c.l.b16 %v266
      %v333 = vunpack.c.h.b16 %v266
      %v334 = vunpack.c.l.b16 %v267
      %v335 = vunpack.c.h.b16 %v267
      %v336 = vunpack.c.l.b16 %v268
      %v337 = vunpack.c.h.b16 %v268
      %v338 = vunpack.c.l.b16 %v269
      %v339 = vunpack.c.h.b16 %v269
      %v340 = vunpack.c.l.b16 %v270
      %v341 = vunpack.c.h.b16 %v270
      %v342 = vunpack.c.l.b16 %v271
      %v343 = vunpack.c.h.b16 %v271
      %v344 = vpack.c.b16 %v304, %v296
      %v345 = vpack.c.b16 %v305, %v297
      %v346 = vpack.c.b16 %v306, %v298
      %v347 = vpack.c.b16 %v307, %v299
      %v348 = vpack.c.b16 %v308, %v300
      %v349 = vpack.c.b16 %v309, %v301
      %v350 = vpack.c.b16 %v310, %v302
      %v351 = vpack.c.b16 %v311, %v303
      %v352 = vpack.c.b16 %v320, %v312
      %v353 = vpack.c.b16 %v321, %v313
      %v354 = vpack.c.b16 %v322, %v314
      %v355 = vpack.c.b16 %v323, %v315
      %v356 = vpack.c.b16 %v324, %v316
      %v357 = vpack.c.b16 %v325, %v317
      %v358 = vpack.c.b16 %v326, %v318
      %v359 = vpack.c.b16 %v327, %v319
      %v360 = vpack.c.b16 %v336, %v328
      %v361 = vpack.c.b16 %v337, %v329
      %v362 = vpack.c.b16 %v338, %v330
      %v363 = vpack.c.b16 %v339, %v331
      %v364 = vpack.c.b16 %v340, %v332
      %v365 = vpack.c.b16 %v341, %v333
      %v366 = vpack.c.b16 %v342, %v334
      %v367 = vpack.c.b16 %v343, %v335
      %vm392 = vcmask 392192
      %v394 = vsel %vm392, %v247, 0
      %396 = vmatprep.subr.bf16.mxu0 %v345
      %397 = vmatpush1.bf16.msra.mxu0 %v344
      %398 = vmatprep.subr.bf16.mxu0 %v353
      %399 = vmatpush1.bf16.msra.mxu0 %v352
      %400 = vmatprep.subr.bf16.mxu0 %v361
      %401 = vmatpush1.bf16.msra.mxu0 %v360
      %402 = vmatprep.subr.bf16.mxu0 0
      %403 = vmatpush1.bf16.msra.mxu0 0
      %404 = vmatprep.subr.bf16.mxu0 0
      %405 = vmatpush1.bf16.msra.mxu0 0
      %406 = vmatprep.subr.bf16.mxu0 0
      %407 = vmatpush1.bf16.msra.mxu0 0
      %408 = vmatprep.subr.bf16.mxu0 0
      %409 = vmatpush1.bf16.msra.mxu0 0
      %410 = vmatprep.subr.bf16.mxu0 0
      %411 = vmatpush1.bf16.msra.mxu0 0
      %412 = vmatprep.subr.bf16.mxu0 0
      %413 = vmatpush1.bf16.msra.mxu0 0
      %414 = vmatprep.subr.bf16.mxu0 0
      %415 = vmatpush1.bf16.msra.mxu0 0
      %416 = vmatprep.subr.bf16.mxu0 0
      %417 = vmatpush1.bf16.msra.mxu0 0
      %418 = vmatprep.subr.bf16.mxu0 0
      %419 = vmatpush1.bf16.msra.mxu0 0
      %420 = vmatprep.subr.bf16.mxu0 0
      %421 = vmatpush1.bf16.msra.mxu0 0
      %422 = vmatprep.subr.bf16.mxu0 0
      %423 = vmatpush1.bf16.msra.mxu0 0
      %424 = vmatprep.subr.bf16.mxu0 0
      %425 = vmatpush1.bf16.msra.mxu0 0
      %426 = vmatprep.subr.bf16.mxu0 0
      %427 = vmatpush1.bf16.msra.mxu0 0
      %428 = vmatprep.mubr.bf16.mxu0 0
      %429 = vmatmul.mubr.bf16.gmra.mrb[0].mxu0 %v394
      %v430 = vpop.f32.mrb[0].mxu0
      %v431 = vadd.f32 0.0, %v430
      %v432 = vpop.f32.mrb[0].mxu0
      %v433 = vadd.f32 0.0, %v432
      %v434 = vpop.f32.mrb[0].mxu0
      %v435 = vpop.f32.mrb[0].mxu0
      %436 = vdwg.mxu0
      %437 = vmatprep.subr.bf16.mxu0 %v347
      %438 = vmatpush1.bf16.msra.mxu0 %v346
      %439 = vmatprep.subr.bf16.mxu0 %v355
      %440 = vmatpush1.bf16.msra.mxu0 %v354
      %441 = vmatprep.subr.bf16.mxu0 %v363
      %442 = vmatpush1.bf16.msra.mxu0 %v362
      %443 = vmatprep.subr.bf16.mxu0 0
      %444 = vmatpush1.bf16.msra.mxu0 0
      %445 = vmatprep.subr.bf16.mxu0 0
      %446 = vmatpush1.bf16.msra.mxu0 0
      %447 = vmatprep.subr.bf16.mxu0 0
      %448 = vmatpush1.bf16.msra.mxu0 0
      %449 = vmatprep.subr.bf16.mxu0 0
      %450 = vmatpush1.bf16.msra.mxu0 0
      %451 = vmatprep.subr.bf16.mxu0 0
      %452 = vmatpush1.bf16.msra.mxu0 0
      %453 = vmatprep.subr.bf16.mxu0 0
      %454 = vmatpush1.bf16.msra.mxu0 0
      %455 = vmatprep.subr.bf16.mxu0 0
      %456 = vmatpush1.bf16.msra.mxu0 0
      %457 = vmatprep.subr.bf16.mxu0 0
      %458 = vmatpush1.bf16.msra.mxu0 0
      %459 = vmatprep.subr.bf16.mxu0 0
      %460 = vmatpush1.bf16.msra.mxu0 0
      %461 = vmatprep.subr.bf16.mxu0 0
      %462 = vmatpush1.bf16.msra.mxu0 0
      %463 = vmatprep.subr.bf16.mxu0 0
      %464 = vmatpush1.bf16.msra.mxu0 0
      %465 = vmatprep.subr.bf16.mxu0 0
      %466 = vmatpush1.bf16.msra.mxu0 0
      %467 = vmatprep.subr.bf16.mxu0 0
      %468 = vmatpush1.bf16.msra.mxu0 0
      %469 = vmatprep.mubr.bf16.mxu0 0
      %470 = vmatmul.mubr.bf16.gmra.mrb[0].mxu0 %v394
      %v471 = vpop.f32.mrb[0].mxu0
      %v472 = vadd.f32 0.0, %v471
      %v473 = vpop.f32.mrb[0].mxu0
      %v474 = vadd.f32 0.0, %v473
      %v475 = vpop.f32.mrb[0].mxu0
      %v476 = vpop.f32.mrb[0].mxu0
      %477 = vdwg.mxu0
      %478 = vmatprep.subr.bf16.mxu0 %v349
      %479 = vmatpush1.bf16.msra.mxu0 %v348
      %480 = vmatprep.subr.bf16.mxu0 %v357
      %481 = vmatpush1.bf16.msra.mxu0 %v356
      %482 = vmatprep.subr.bf16.mxu0 %v365
      %483 = vmatpush1.bf16.msra.mxu0 %v364
      %484 = vmatprep.subr.bf16.mxu0 0
      %485 = vmatpush1.bf16.msra.mxu0 0
      %486 = vmatprep.subr.bf16.mxu0 0
      %487 = vmatpush1.bf16.msra.mxu0 0
      %488 = vmatprep.subr.bf16.mxu0 0
      %489 = vmatpush1.bf16.msra.mxu0 0
      %490 = vmatprep.subr.bf16.mxu0 0
      %491 = vmatpush1.bf16.msra.mxu0 0
      %492 = vmatprep.subr.bf16.mxu0 0
      %493 = vmatpush1.bf16.msra.mxu0 0
      %494 = vmatprep.subr.bf16.mxu0 0
      %495 = vmatpush1.bf16.msra.mxu0 0
      %496 = vmatprep.subr.bf16.mxu0 0
      %497 = vmatpush1.bf16.msra.mxu0 0
      %498 = vmatprep.subr.bf16.mxu0 0
      %499 = vmatpush1.bf16.msra.mxu0 0
      %500 = vmatprep.subr.bf16.mxu0 0
      %501 = vmatpush1.bf16.msra.mxu0 0
      %502 = vmatprep.subr.bf16.mxu0 0
      %503 = vmatpush1.bf16.msra.mxu0 0
      %504 = vmatprep.subr.bf16.mxu0 0
      %505 = vmatpush1.bf16.msra.mxu0 0
      %506 = vmatprep.subr.bf16.mxu0 0
      %507 = vmatpush1.bf16.msra.mxu0 0
      %508 = vmatprep.subr.bf16.mxu0 0
      %509 = vmatpush1.bf16.msra.mxu0 0
      %510 = vmatprep.mubr.bf16.mxu0 0
      %511 = vmatmul.mubr.bf16.gmra.mrb[0].mxu0 %v394
      %v512 = vpop.f32.mrb[0].mxu0
      %v513 = vadd.f32 0.0, %v512
      %v514 = vpop.f32.mrb[0].mxu0
      %v515 = vadd.f32 0.0, %v514
      %v516 = vpop.f32.mrb[0].mxu0
      %v517 = vpop.f32.mrb[0].mxu0
      %518 = vdwg.mxu0
      %519 = vmatprep.subr.bf16.mxu0 %v351
      %520 = vmatpush1.bf16.msra.mxu0 %v350
      %521 = vmatprep.subr.bf16.mxu0 %v359
      %522 = vmatpush1.bf16.msra.mxu0 %v358
      %523 = vmatprep.subr.bf16.mxu0 %v367
      %524 = vmatpush1.bf16.msra.mxu0 %v366
      %525 = vmatprep.subr.bf16.mxu0 0
      %526 = vmatpush1.bf16.msra.mxu0 0
      %527 = vmatprep.subr.bf16.mxu0 0
      %528 = vmatpush1.bf16.msra.mxu0 0
      %529 = vmatprep.subr.bf16.mxu0 0
      %530 = vmatpush1.bf16.msra.mxu0 0
      %531 = vmatprep.subr.bf16.mxu0 0
      %532 = vmatpush1.bf16.msra.mxu0 0
      %533 = vmatprep.subr.bf16.mxu0 0
      %534 = vmatpush1.bf16.msra.mxu0 0
      %535 = vmatprep.subr.bf16.mxu0 0
      %536 = vmatpush1.bf16.msra.mxu0 0
      %537 = vmatprep.subr.bf16.mxu0 0
      %538 = vmatpush1.bf16.msra.mxu0 0
      %539 = vmatprep.subr.bf16.mxu0 0
      %540 = vmatpush1.bf16.msra.mxu0 0
      %541 = vmatprep.subr.bf16.mxu0 0
      %542 = vmatpush1.bf16.msra.mxu0 0
      %543 = vmatprep.subr.bf16.mxu0 0
      %544 = vmatpush1.bf16.msra.mxu0 0
      %545 = vmatprep.subr.bf16.mxu0 0
      %546 = vmatpush1.bf16.msra.mxu0 0
      %547 = vmatprep.subr.bf16.mxu0 0
      %548 = vmatpush1.bf16.msra.mxu0 0
      %549 = vmatprep.subr.bf16.mxu0 0
      %550 = vmatpush1.bf16.msra.mxu0 0
      %551 = vmatprep.mubr.bf16.mxu0 0
      %552 = vmatmul.mubr.bf16.gmra.mrb[0].mxu0 %v394
      %v553 = vpop.f32.mrb[0].mxu0
      %v554 = vadd.f32 0.0, %v553
      %v555 = vpop.f32.mrb[0].mxu0
      %v556 = vadd.f32 0.0, %v555
      %v557 = vpop.f32.mrb[0].mxu0
      %v558 = vpop.f32.mrb[0].mxu0
      %559 = vdwg.mxu0
      %561 = vrot.lane.b32.xlu0 %v431, 64
      %v562 = vpop.permute.xlu0 %561
      %v564 = vadd.f32 %v431, %v562
      %v565 = vadd.f32 %v564, %v433
      %567 = vrot.lane.b32.xlu0 %v433, 64
      %v568 = vpop.permute.xlu0 %567
      %v570 = vadd.f32 %v565, %v568
      %v571 = vadd.f32 %v570, %v472
      %573 = vrot.lane.b32.xlu0 %v472, 64
      %v574 = vpop.permute.xlu0 %573
      %v576 = vadd.f32 %v571, %v574
      %v577 = vadd.f32 %v576, %v474
      %579 = vrot.lane.b32.xlu0 %v474, 64
      %v580 = vpop.permute.xlu0 %579
      %v582 = vadd.f32 %v577, %v580
      %v583 = vadd.f32 %v582, %v513
      %585 = vrot.lane.b32.xlu0 %v513, 64
      %v586 = vpop.permute.xlu0 %585
      %v588 = vadd.f32 %v583, %v586
      %v589 = vadd.f32 %v588, %v515
      %591 = vrot.lane.b32.xlu0 %v515, 64
      %v592 = vpop.permute.xlu0 %591
      %v594 = vadd.f32 %v589, %v592
      %v595 = vadd.f32 %v594, %v554
      %597 = vrot.lane.b32.xlu0 %v554, 64
      %v598 = vpop.permute.xlu0 %597
      %v600 = vadd.f32 %v595, %v598
      %v601 = vadd.f32 %v600, %v556
      %603 = vrot.lane.b32.xlu0 %v556, 64
      %v604 = vpop.permute.xlu0 %603
      %v606 = vadd.f32 %v601, %v604
      %v607 = vmul.f32 %v606, 0.0625
      %v608 = vsub.f32 %v431, %v607
      %610 = vrot.lane.b32.xlu0 %v607, 64
      %v611 = vpop.permute.xlu0 %610
      %v613 = vsub.f32 %v431, %v611
      %v614 = vsub.f32 %v433, %v607
      %v615 = vsub.f32 %v433, %v611
      %v616 = vsub.f32 %v472, %v607
      %v617 = vsub.f32 %v472, %v611
      %v618 = vsub.f32 %v474, %v607
      %v619 = vsub.f32 %v474, %v611
      %v620 = vsub.f32 %v513, %v607
      %v621 = vsub.f32 %v513, %v611
      %v622 = vsub.f32 %v515, %v607
      %v623 = vsub.f32 %v515, %v611
      %v624 = vsub.f32 %v554, %v607
      %v625 = vsub.f32 %v554, %v611
      %v626 = vsub.f32 %v556, %v607
      %v627 = vsub.f32 %v556, %v611
      %v628 = vmul.f32 %v608, %v608
      %v629 = vmul.f32 %v613, %v613
      %631 = vrot.lane.b32.xlu0 %v629, 64
      %v632 = vpop.permute.xlu0 %631
      %v634 = vadd.f32 %v628, %v632
      %v635 = vmul.f32 %v614, %v614
      %v636 = vadd.f32 %v634, %v635
      %v637 = vmul.f32 %v615, %v615
      %639 = vrot.lane.b32.xlu0 %v637, 64
      %v640 = vpop.permute.xlu0 %639
      %v642 = vadd.f32 %v636, %v640
      %v643 = vmul.f32 %v616, %v616
      %v644 = vadd.f32 %v642, %v643
      %v645 = vmul.f32 %v617, %v617
      %647 = vrot.lane.b32.xlu0 %v645, 64
      %v648 = vpop.permute.xlu0 %647
      %v650 = vadd.f32 %v644, %v648
      %v651 = vmul.f32 %v618, %v618
      %v652 = vadd.f32 %v650, %v651
      %v653 = vmul.f32 %v619, %v619
      %655 = vrot.lane.b32.xlu0 %v653, 64
      %v656 = vpop.permute.xlu0 %655
      %v658 = vadd.f32 %v652, %v656
      %v659 = vmul.f32 %v620, %v620
      %v660 = vadd.f32 %v658, %v659
      %v661 = vmul.f32 %v621, %v621
      %663 = vrot.lane.b32.xlu0 %v661, 64
      %v664 = vpop.permute.xlu0 %663
      %v666 = vadd.f32 %v660, %v664
      %v667 = vmul.f32 %v622, %v622
      %v668 = vadd.f32 %v666, %v667
      %v669 = vmul.f32 %v623, %v623
      %671 = vrot.lane.b32.xlu0 %v669, 64
      %v672 = vpop.permute.xlu0 %671
      %v674 = vadd.f32 %v668, %v672
      %v675 = vmul.f32 %v624, %v624
      %v676 = vadd.f32 %v674, %v675
      %v677 = vmul.f32 %v625, %v625
      %679 = vrot.lane.b32.xlu0 %v677, 64
      %v680 = vpop.permute.xlu0 %679
      %v682 = vadd.f32 %v676, %v680
      %v683 = vmul.f32 %v626, %v626
      %v684 = vadd.f32 %v682, %v683
      %v685 = vmul.f32 %v627, %v627
      %687 = vrot.lane.b32.xlu0 %v685, 64
      %v688 = vpop.permute.xlu0 %687
      %v690 = vadd.f32 %v684, %v688
      %v691 = vmul.f32 %v690, 0.0625
      %v692 = vadd.f32 %v691, 1e-05
      %v693 = vrsqrt.pop %v692
      %v694 = vmul.f32 %v608, %v693
      %v695 = vmax.f32 %v694, 0.0
      %v696 = vpack.c.bf16 %v695, %v695
      %698 = vrot.lane.b32.xlu0 %v693, 64
      %v699 = vpop.permute.xlu0 %698
      %v701 = vmul.f32 %v613, %v699
      %v702 = vmax.f32 %v701, 0.0
      %v703 = vpack.c.bf16 %v702, %v702
      %v704 = vmul.f32 %v614, %v693
      %v705 = vmax.f32 %v704, 0.0
      %v706 = vpack.c.bf16 %v705, %v705
      %v707 = vmul.f32 %v615, %v699
      %v708 = vmax.f32 %v707, 0.0
      %v709 = vpack.c.bf16 %v708, %v708
      %v710 = vmul.f32 %v616, %v693
      %v711 = vmax.f32 %v710, 0.0
      %v712 = vpack.c.bf16 %v711, %v711
      %v713 = vmul.f32 %v617, %v699
      %v714 = vmax.f32 %v713, 0.0
      %v715 = vpack.c.bf16 %v714, %v714
      %v716 = vmul.f32 %v618, %v693
      %v717 = vmax.f32 %v716, 0.0
      %v718 = vpack.c.bf16 %v717, %v717
      %v719 = vmul.f32 %v619, %v699
      %v720 = vmax.f32 %v719, 0.0
      %v721 = vpack.c.bf16 %v720, %v720
      %v722 = vmul.f32 %v620, %v693
      %v723 = vmax.f32 %v722, 0.0
      %v724 = vpack.c.bf16 %v723, %v723
      %v725 = vmul.f32 %v621, %v699
      %v726 = vmax.f32 %v725, 0.0
      %v727 = vpack.c.bf16 %v726, %v726
      %v728 = vmul.f32 %v622, %v693
      %v729 = vmax.f32 %v728, 0.0
      %v730 = vpack.c.bf16 %v729, %v729
      %v731 = vmul.f32 %v623, %v699
      %v732 = vmax.f32 %v731, 0.0
      %v733 = vpack.c.bf16 %v732, %v732
      %v734 = vmul.f32 %v624, %v693
      %v735 = vmax.f32 %v734, 0.0
      %v736 = vpack.c.bf16 %v735, %v735
      %v737 = vmul.f32 %v625, %v699
      %v738 = vmax.f32 %v737, 0.0
      %v739 = vpack.c.bf16 %v738, %v738
      %v740 = vmul.f32 %v626, %v693
      %v741 = vmax.f32 %v740, 0.0
      %v742 = vpack.c.bf16 %v741, %v741
      %v743 = vmul.f32 %v627, %v699
      %v744 = vmax.f32 %v743, 0.0
      %v745 = vpack.c.bf16 %v744, %v744
      %v747 = vshll.u32 %v703, 16
      %749 = vrot.lane.b32.xlu0 %v747, 64
      %v750 = vpop.permute.xlu0 %749
      %v753 = vrot.slane %v706, 7
      %v755 = vshll.u32 %v709, 16
      %v757 = vrot.slane %v755, 7
      %758 = vrot.lane.b32.xlu0 %v757, 64
      %v759 = vpop.permute.xlu0 %758
      %v762 = vrot.slane %v712, 6
      %v764 = vshll.u32 %v715, 16
      %v766 = vrot.slane %v764, 6
      %767 = vrot.lane.b32.xlu0 %v766, 64
      %v768 = vpop.permute.xlu0 %767
      %v771 = vrot.slane %v718, 5
      %v773 = vshll.u32 %v721, 16
      %v775 = vrot.slane %v773, 5
      %776 = vrot.lane.b32.xlu0 %v775, 64
      %v777 = vpop.permute.xlu0 %776
      %v780 = vrot.slane %v724, 4
      %v782 = vshll.u32 %v727, 16
      %v784 = vrot.slane %v782, 4
      %785 = vrot.lane.b32.xlu0 %v784, 64
      %v786 = vpop.permute.xlu0 %785
      %v789 = vrot.slane %v730, 3
      %v791 = vshll.u32 %v733, 16
      %v793 = vrot.slane %v791, 3
      %794 = vrot.lane.b32.xlu0 %v793, 64
      %v795 = vpop.permute.xlu0 %794
      %v798 = vrot.slane %v736, 2
      %v800 = vshll.u32 %v739, 16
      %v802 = vrot.slane %v800, 2
      %803 = vrot.lane.b32.xlu0 %v802, 64
      %v804 = vpop.permute.xlu0 %803
      %v807 = vrot.slane %v742, 1
      %v809 = vshll.u32 %v745, 16
      %v811 = vrot.slane %v809, 1
      %812 = vrot.lane.b32.xlu0 %v811, 64
      %v813 = vpop.permute.xlu0 %812
      %vm815 = vcmask 1040384
      %vm816 = vsmask.f32 256
      %vm817 = vmand %vm815, %vm816
      %v818 = vsel %vm817, %v696, %v750
      %vm819 = vcmask 1040384
      %v822 = vsel %vm819, %v818, %v753
      %vm824 = vcmask 1041408
      %vm825 = vsmask.f32 1280
      %vm826 = vmand %vm824, %vm825
      %v827 = vsel %vm826, %v822, %v759
      %vm828 = vcmask 1041408
      %v831 = vsel %vm828, %v827, %v762
      %vm833 = vcmask 1042432
      %vm834 = vsmask.f32 2304
      %vm835 = vmand %vm833, %vm834
      %v836 = vsel %vm835, %v831, %v768
      %vm837 = vcmask 1042432
      %v840 = vsel %vm837, %v836, %v771
      %vm842 = vcmask 1043456
      %vm843 = vsmask.f32 3328
      %vm844 = vmand %vm842, %vm843
      %v845 = vsel %vm844, %v840, %v777
      %vm846 = vcmask 1043456
      %v849 = vsel %vm846, %v845, %v780
      %vm851 = vcmask 1044480
      %vm852 = vsmask.f32 4352
      %vm853 = vmand %vm851, %vm852
      %v854 = vsel %vm853, %v849, %v786
      %vm855 = vcmask 1044480
      %v858 = vsel %vm855, %v854, %v789
      %vm860 = vcmask 1045504
      %vm861 = vsmask.f32 5376
      %vm862 = vmand %vm860, %vm861
      %v863 = vsel %vm862, %v858, %v795
      %vm864 = vcmask 1045504
      %v867 = vsel %vm864, %v863, %v798
      %vm869 = vcmask 1046528
      %vm870 = vsmask.f32 6400
      %vm871 = vmand %vm869, %vm870
      %v872 = vsel %vm871, %v867, %v804
      %vm873 = vcmask 1046528
      %v876 = vsel %vm873, %v872, %v807
      %vm878 = vcmask 1047552
      %vm879 = vsmask.f32 7424
      %vm880 = vmand %vm878, %vm879
      %v881 = vsel %vm880, %v876, %v813
      %v883 = vcombine.high %v881, %v881
      %v885 = vunpack.c.l.s4 1983009808
      %v886 = vunpack.c.0.s8 %v885
      %v887 = vlaneseq
      %v888 = vshrl.u32 %v887, 7
      %v889 = vsub.s32 %v886, %v888
      %v890 = vrot.slane %v881, %v889
      %v892 = vunpack.c.l.s4 1983009808
      %v893 = vunpack.c.0.s8 %v892
      %v894 = vlaneseq
      %v895 = vshrl.u32 %v894, 7
      %v896 = vsub.s32 %v893, %v895
      %v897 = vrot.slane %v883, %v896
      %v898 = vcombine.high %v890, %v890
      %v899 = vcombine.high %v897, %v897
      %v901 = vunpack.c.l.s4 1983009808
      %v902 = vunpack.c.0.s8 %v901
      %v903 = vlaneseq
      %v904 = vshrl.u32 %v903, 7
      %v905 = vsub.s32 %v902, %v904
      %v906 = vrot.slane %v890, %v905
      %v908 = vunpack.c.l.s4 1983009808
      %v909 = vunpack.c.0.s8 %v908
      %v910 = vlaneseq
      %v911 = vshrl.u32 %v910, 7
      %v912 = vsub.s32 %v909, %v911
      %v913 = vrot.slane %v898, %v912
      %v915 = vunpack.c.l.s4 1983009808
      %v916 = vunpack.c.0.s8 %v915
      %v917 = vlaneseq
      %v918 = vshrl.u32 %v917, 7
      %v919 = vsub.s32 %v916, %v918
      %v920 = vrot.slane %v897, %v919
      %v922 = vunpack.c.l.s4 1983009808
      %v923 = vunpack.c.0.s8 %v922
      %v924 = vlaneseq
      %v925 = vshrl.u32 %v924, 7
      %v926 = vsub.s32 %v923, %v925
      %v927 = vrot.slane %v899, %v926
      %v929 = vshrl.u32 %v906, 16
      %v931 = vrot.slane %v929, 7
      %v932 = vshll.u32 %v906, 16
      %v934 = vor.u32 %v931, %v932
      %v936 = vshrl.u32 %v913, 16
      %v938 = vrot.slane %v936, 7
      %v939 = vshll.u32 %v913, 16
      %v941 = vor.u32 %v938, %v939
      %v943 = vshrl.u32 %v920, 16
      %v945 = vrot.slane %v943, 7
      %v946 = vshll.u32 %v920, 16
      %v948 = vor.u32 %v945, %v946
      %v950 = vshrl.u32 %v927, 16
      %v952 = vrot.slane %v950, 7
      %v953 = vshll.u32 %v927, 16
      %v955 = vor.u32 %v952, %v953
      %v960 = vsel %vm817, 0, %v934
      %v961 = vsel %vm817, 0, %v941
      %v962 = vsel %vm817, 0, %v948
      %v963 = vsel %vm817, 0, %v955
      %v964 = vsel %vm835, %v960, 0
      %v965 = vsel %vm835, %v961, 0
      %v966 = vsel %vm835, %v962, 0
      %v967 = vsel %vm835, %v963, 0
      %v973 = vunpack.c.l.s4 1983009808
      %v974 = vunpack.c.0.s8 %v973
      %v975 = vlaneseq
      %v976 = vshrl.u32 %v975, 7
      %v977 = vsub.s32 %v974, %v976
      %v978 = vrot.slane 0, %v977
      %v979 = vcombine.high %v978, %v978
      %v981 = vunpack.c.l.s4 1983009808
      %v982 = vunpack.c.0.s8 %v981
      %v983 = vlaneseq
      %v984 = vshrl.u32 %v983, 7
      %v985 = vsub.s32 %v982, %v984
      %v986 = vrot.slane %v964, %v985
      %v987 = vcombine.high %v986, %v986
      %v989 = vunpack.c.l.s4 1983009808
      %v990 = vunpack.c.0.s8 %v989
      %v991 = vlaneseq
      %v992 = vshrl.u32 %v991, 7
      %v993 = vsub.s32 %v990, %v992
      %v994 = vrot.slane %v965, %v993
      %v995 = vcombine.high %v994, %v994
      %v997 = vunpack.c.l.s4 1983009808
      %v998 = vunpack.c.0.s8 %v997
      %v999 = vlaneseq
      %v1000 = vshrl.u32 %v999, 7
      %v1001 = vsub.s32 %v998, %v1000
      %v1002 = vrot.slane %v966, %v1001
      %v1003 = vcombine.high %v1002, %v1002
      %vm1004 = vsmask.f32 3336
      %vm1005 = vmor %vm825, %vm1004
      %vm1006 = vsmask.f32 5392
      %vm1007 = vmor %vm1005, %vm1006
      %vm1008 = vsmask.f32 7448
      %vm1009 = vmor %vm1007, %vm1008
      %v1011 = vshrl.u32 %v978, 16
      %v1013 = vrot.slane %v1011, 6
      %v1014 = vshll.u32 %v978, 16
      %v1016 = vrot.slane %v1014, 7
      %v1017 = vor.u32 %v1013, %v1016
      %v1018 = vrot.slane %v1017, 2
      %v1020 = vshll.u32 %v979, 16
      %v1022 = vrot.slane %v1020, 7
      %v1023 = vsel %vm1009, %v1018, %v1022
      %v1025 = vshrl.u32 %v986, 16
      %v1027 = vrot.slane %v1025, 6
      %v1028 = vshll.u32 %v986, 16
      %v1030 = vrot.slane %v1028, 7
      %v1031 = vor.u32 %v1027, %v1030
      %v1032 = vrot.slane %v1031, 2
      %v1034 = vshll.u32 %v987, 16
      %v1036 = vrot.slane %v1034, 7
      %v1037 = vsel %vm1009, %v1032, %v1036
      %v1039 = vshrl.u32 %v994, 16
      %v1041 = vrot.slane %v1039, 6
      %v1042 = vshll.u32 %v994, 16
      %v1044 = vrot.slane %v1042, 7
      %v1045 = vor.u32 %v1041, %v1044
      %v1046 = vrot.slane %v1045, 2
      %v1048 = vshll.u32 %v995, 16
      %v1050 = vrot.slane %v1048, 7
      %v1051 = vsel %vm1009, %v1046, %v1050
      %v1053 = vshrl.u32 %v1002, 16
      %v1055 = vrot.slane %v1053, 6
      %v1056 = vshll.u32 %v1002, 16
      %v1058 = vrot.slane %v1056, 7
      %v1059 = vor.u32 %v1055, %v1058
      %v1060 = vrot.slane %v1059, 2
      %v1062 = vshll.u32 %v1003, 16
      %v1064 = vrot.slane %v1062, 7
      %v1065 = vsel %vm1009, %v1060, %v1064
      %vm1066 = vcmask 1042434
      %vm1067 = vmor %vm815, %vm1066
      %vm1068 = vcmask 1044484
      %vm1069 = vmor %vm1067, %vm1068
      %vm1070 = vcmask 1046534
      %vm1071 = vmor %vm1069, %vm1070
      %v1072 = vrot.slane %v978, 7
      %v1073 = vrot.slane %v1072, 2
      %v1074 = vrot.slane %v979, 7
      %v1075 = vsel %vm1071, %v1073, %v1074
      %v1076 = vrot.slane %v986, 7
      %v1077 = vrot.slane %v1076, 2
      %v1078 = vrot.slane %v987, 7
      %v1079 = vsel %vm1071, %v1077, %v1078
      %v1080 = vrot.slane %v994, 7
      %v1081 = vrot.slane %v1080, 2
      %v1082 = vrot.slane %v995, 7
      %v1083 = vsel %vm1071, %v1081, %v1082
      %v1084 = vrot.slane %v1002, 7
      %v1085 = vrot.slane %v1084, 2
      %v1086 = vrot.slane %v1003, 7
      %v1087 = vsel %vm1071, %v1085, %v1086
      %v1090 = vunpack.c.l.s4 1983009808
      %v1091 = vunpack.c.0.s8 %v1090
      %v1092 = vlaneseq
      %v1093 = vshrl.u32 %v1092, 7
      %v1094 = vsub.s32 %v1091, %v1093
      %v1095 = vrot.slane %v967, %v1094
      %v1096 = vcombine.high %v1095, %v1095
      %v1098 = vshrl.u32 %v1095, 16
      %v1100 = vrot.slane %v1098, 6
      %v1101 = vshll.u32 %v1095, 16
      %v1103 = vrot.slane %v1101, 7
      %v1104 = vor.u32 %v1100, %v1103
      %v1105 = vrot.slane %v1104, 2
      %v1107 = vshll.u32 %v1096, 16
      %v1109 = vrot.slane %v1107, 7
      %v1110 = vsel %vm1009, %v1105, %v1109
      %v1111 = vrot.slane %v1095, 7
      %v1112 = vrot.slane %v1111, 2
      %v1113 = vrot.slane %v1096, 7
      %v1114 = vsel %vm1071, %v1112, %v1113
      %v1115 = vcombine.low 0, %v964
      %v1116 = vcombine.low %v965, %v966
      %v1118 = vunpack.c.l.s4 1983009808
      %v1119 = vunpack.c.0.s8 %v1118
      %v1120 = vlaneseq
      %v1121 = vshrl.u32 %v1120, 7
      %v1122 = vsub.s32 %v1119, %v1121
      %v1123 = vrot.slane %v1115, %v1122
      %v1125 = vunpack.c.l.s4 1983009808
      %v1126 = vunpack.c.0.s8 %v1125
      %v1127 = vlaneseq
      %v1128 = vshrl.u32 %v1127, 7
      %v1129 = vsub.s32 %v1126, %v1128
      %v1130 = vrot.slane %v1116, %v1129
      %v1131 = vcombine.low %v1123, %v1130
      %v1132 = vcombine.low %v1023, %v1037
      %v1133 = vcombine.low %v1051, %v1065
      %v1135 = vunpack.c.l.s4 1983009808
      %v1136 = vunpack.c.0.s8 %v1135
      %v1137 = vlaneseq
      %v1138 = vshrl.u32 %v1137, 7
      %v1139 = vsub.s32 %v1136, %v1138
      %v1140 = vrot.slane %v1132, %v1139
      %v1142 = vunpack.c.l.s4 1983009808
      %v1143 = vunpack.c.0.s8 %v1142
      %v1144 = vlaneseq
      %v1145 = vshrl.u32 %v1144, 7
      %v1146 = vsub.s32 %v1143, %v1145
      %v1147 = vrot.slane %v1133, %v1146
      %v1148 = vcombine.low %v1140, %v1147
      %1149 = vrot.lane.b32.xlu0 %v1148, 64
      %v1150 = vpop.permute.xlu0 %1149
      %v1151 = vcombine.low %v1075, %v1079
      %v1152 = vcombine.low %v1083, %v1087
      %v1154 = vunpack.c.l.s4 1983009808
      %v1155 = vunpack.c.0.s8 %v1154
      %v1156 = vlaneseq
      %v1157 = vshrl.u32 %v1156, 7
      %v1158 = vsub.s32 %v1155, %v1157
      %v1159 = vrot.slane %v1151, %v1158
      %v1161 = vunpack.c.l.s4 1983009808
      %v1162 = vunpack.c.0.s8 %v1161
      %v1163 = vlaneseq
      %v1164 = vshrl.u32 %v1163, 7
      %v1165 = vsub.s32 %v1162, %v1164
      %v1166 = vrot.slane %v1152, %v1165
      %v1167 = vcombine.low %v1159, %v1166
      %v1168 = vcombine.low %v964, %v965
      %v1169 = vcombine.low %v966, %v967
      %v1171 = vunpack.c.l.s4 1983009808
      %v1172 = vunpack.c.0.s8 %v1171
      %v1173 = vlaneseq
      %v1174 = vshrl.u32 %v1173, 7
      %v1175 = vsub.s32 %v1172, %v1174
      %v1176 = vrot.slane %v1168, %v1175
      %v1178 = vunpack.c.l.s4 1983009808
      %v1179 = vunpack.c.0.s8 %v1178
      %v1180 = vlaneseq
      %v1181 = vshrl.u32 %v1180, 7
      %v1182 = vsub.s32 %v1179, %v1181
      %v1183 = vrot.slane %v1169, %v1182
      %v1184 = vcombine.low %v1176, %v1183
      %1185 = vrot.lane.b32.xlu0 %v1184, 64
      %v1186 = vpop.permute.xlu0 %1185
      %v1187 = vcombine.low %v1037, %v1051
      %v1188 = vcombine.low %v1065, %v1110
      %v1190 = vunpack.c.l.s4 1983009808
      %v1191 = vunpack.c.0.s8 %v1190
      %v1192 = vlaneseq
      %v1193 = vshrl.u32 %v1192, 7
      %v1194 = vsub.s32 %v1191, %v1193
      %v1195 = vrot.slane %v1187, %v1194
      %v1197 = vunpack.c.l.s4 1983009808
      %v1198 = vunpack.c.0.s8 %v1197
      %v1199 = vlaneseq
      %v1200 = vshrl.u32 %v1199, 7
      %v1201 = vsub.s32 %v1198, %v1200
      %v1202 = vrot.slane %v1188, %v1201
      %v1203 = vcombine.low %v1195, %v1202
      %v1204 = vcombine.low %v1079, %v1083
      %v1205 = vcombine.low %v1087, %v1114
      %v1207 = vunpack.c.l.s4 1983009808
      %v1208 = vunpack.c.0.s8 %v1207
      %v1209 = vlaneseq
      %v1210 = vshrl.u32 %v1209, 7
      %v1211 = vsub.s32 %v1208, %v1210
      %v1212 = vrot.slane %v1204, %v1211
      %v1214 = vunpack.c.l.s4 1983009808
      %v1215 = vunpack.c.0.s8 %v1214
      %v1216 = vlaneseq
      %v1217 = vshrl.u32 %v1216, 7
      %v1218 = vsub.s32 %v1215, %v1217
      %v1219 = vrot.slane %v1205, %v1218
      %v1220 = vcombine.low %v1212, %v1219
      %1221 = vrot.lane.b32.xlu0 %v1220, 64
      %v1222 = vpop.permute.xlu0 %1221
      %v1223 = vcombine.low %v967, 0
      %v1225 = vunpack.c.l.s4 1983009808
      %v1226 = vunpack.c.0.s8 %v1225
      %v1227 = vlaneseq
      %v1228 = vshrl.u32 %v1227, 7
      %v1229 = vsub.s32 %v1226, %v1228
      %v1230 = vrot.slane %v1223, %v1229
      %v1231 = vcombine.low %v1130, %v1230
      %v1232 = vcombine.low %v1110, %v1023
      %v1234 = vunpack.c.l.s4 1983009808
      %v1235 = vunpack.c.0.s8 %v1234
      %v1236 = vlaneseq
      %v1237 = vshrl.u32 %v1236, 7
      %v1238 = vsub.s32 %v1235, %v1237
      %v1239 = vrot.slane %v1232, %v1238
      %v1240 = vcombine.low %v1147, %v1239
      %1241 = vrot.lane.b32.xlu0 %v1240, 64
      %v1242 = vpop.permute.xlu0 %1241
      %v1243 = vcombine.low %v1114, %v1075
      %v1245 = vunpack.c.l.s4 1983009808
      %v1246 = vunpack.c.0.s8 %v1245
      %v1247 = vlaneseq
      %v1248 = vshrl.u32 %v1247, 7
      %v1249 = vsub.s32 %v1246, %v1248
      %v1250 = vrot.slane %v1243, %v1249
      %v1251 = vcombine.low %v1166, %v1250
      %vm1252 = vcmask 523264
      %v1255 = vsel %vm1252, %v1131, %v1150
      %v1259 = vsel %vm1252, %v1167, %v1186
      %v1263 = vsel %vm1252, %v1203, %v1222
      %v1267 = vsel %vm1252, %v1231, %v1242
      %v1269 = vld [vmem:[%s2] sm:$0xf]
      %v1270 = vld [vmem:[%s2 + $0x4] sm:$0xf]
      %v1271 = vld [vmem:[%s2 + $0x8] sm:$0xf]
      %v1272 = vld [vmem:[%s2 + $0xc] sm:$0xf]
      %v1273 = vld [vmem:[%s2 + $0x10] sm:$0xf]
      %v1274 = vld [vmem:[%s2 + $0x14] sm:$0xf]
      %v1275 = vld [vmem:[%s2 + $0x18] sm:$0xf]
      %v1276 = vld [vmem:[%s2 + $0x1c] sm:$0xf]
      %v1277 = vld [vmem:[%s2 + $0x20] sm:$0xf]
      %v1278 = vld [vmem:[%s2 + $0x24] sm:$0xf]
      %v1279 = vld [vmem:[%s2 + $0x28] sm:$0xf]
      %v1280 = vld [vmem:[%s2 + $0x2c] sm:$0xf]
      %v1281 = vld [vmem:[%s2 + $0x30] sm:$0xf]
      %v1282 = vld [vmem:[%s2 + $0x34] sm:$0xf]
      %v1283 = vld [vmem:[%s2 + $0x38] sm:$0xf]
      %v1284 = vld [vmem:[%s2 + $0x3c] sm:$0xf]
      %v1285 = vld [vmem:[%s2 + $0x40] sm:$0xf]
      %v1286 = vld [vmem:[%s2 + $0x44] sm:$0xf]
      %v1287 = vld [vmem:[%s2 + $0x48] sm:$0xf]
      %v1288 = vld [vmem:[%s2 + $0x4c] sm:$0xf]
      %v1289 = vld [vmem:[%s2 + $0x50] sm:$0xf]
      %v1290 = vld [vmem:[%s2 + $0x54] sm:$0xf]
      %v1291 = vld [vmem:[%s2 + $0x58] sm:$0xf]
      %v1292 = vld [vmem:[%s2 + $0x5c] sm:$0xf]
      %v1293 = vld [vmem:[%s2 + $0x60] sm:$0xf]
      %v1294 = vld [vmem:[%s2 + $0x64] sm:$0xf]
      %v1295 = vld [vmem:[%s2 + $0x68] sm:$0xf]
      %v1296 = vld [vmem:[%s2 + $0x6c] sm:$0xf]
      %v1297 = vld [vmem:[%s2 + $0x70] sm:$0xf]
      %v1298 = vld [vmem:[%s2 + $0x74] sm:$0xf]
      %v1299 = vld [vmem:[%s2 + $0x78] sm:$0xf]
      %v1300 = vld [vmem:[%s2 + $0x7c] sm:$0xf]
      %v1301 = vld [vmem:[%s2 + $0x80] sm:$0xf]
      %v1302 = vld [vmem:[%s2 + $0x84] sm:$0xf]
      %v1303 = vld [vmem:[%s2 + $0x88] sm:$0xf]
      %v1304 = vld [vmem:[%s2 + $0x8c] sm:$0xf]
      %v1305 = vld [vmem:[%s2 + $0x90] sm:$0xf]
      %v1306 = vld [vmem:[%s2 + $0x94] sm:$0xf]
      %v1307 = vld [vmem:[%s2 + $0x98] sm:$0xf]
      %v1308 = vld [vmem:[%s2 + $0x9c] sm:$0xf]
      %v1309 = vld [vmem:[%s2 + $0xa0] sm:$0xf]
      %v1310 = vld [vmem:[%s2 + $0xa4] sm:$0xf]
      %v1311 = vld [vmem:[%s2 + $0xa8] sm:$0xf]
      %v1312 = vld [vmem:[%s2 + $0xac] sm:$0xf]
      %v1313 = vld [vmem:[%s2 + $0xb0] sm:$0xf]
      %v1314 = vld [vmem:[%s2 + $0xb4] sm:$0xf]
      %v1315 = vld [vmem:[%s2 + $0xb8] sm:$0xf]
      %v1316 = vld [vmem:[%s2 + $0xbc] sm:$0xf]
      %v1317 = vld [vmem:[%s2 + $0xc0] sm:$0xf]
      %v1318 = vld [vmem:[%s2 + $0xc4] sm:$0xf]
      %v1319 = vld [vmem:[%s2 + $0xc8] sm:$0xf]
      %v1320 = vld [vmem:[%s2 + $0xcc] sm:$0xf]
      %v1321 = vld [vmem:[%s2 + $0xd0] sm:$0xf]
      %v1322 = vld [vmem:[%s2 + $0xd4] sm:$0xf]
      %v1323 = vld [vmem:[%s2 + $0xd8] sm:$0xf]
      %v1324 = vld [vmem:[%s2 + $0xdc] sm:$0xf]
      %v1325 = vld [vmem:[%s2 + $0xe0] sm:$0xf]
      %v1326 = vld [vmem:[%s2 + $0xe4] sm:$0xf]
      %v1327 = vld [vmem:[%s2 + $0xe8] sm:$0xf]
      %v1328 = vld [vmem:[%s2 + $0xec] sm:$0xf]
      %v1329 = vld [vmem:[%s2 + $0xf0] sm:$0xf]
      %v1330 = vld [vmem:[%s2 + $0xf4] sm:$0xf]
      %v1331 = vld [vmem:[%s2 + $0xf8] sm:$0xf]
      %v1332 = vld [vmem:[%s2 + $0xfc] sm:$0xf]
      %v1333 = vld [vmem:[%s2 + $0x100] sm:$0xf]
      %v1334 = vld [vmem:[%s2 + $0x104] sm:$0xf]
      %v1335 = vld [vmem:[%s2 + $0x108] sm:$0xf]
      %v1336 = vld [vmem:[%s2 + $0x10c] sm:$0xf]
      %v1337 = vld [vmem:[%s2 + $0x110] sm:$0xf]
      %v1338 = vld [vmem:[%s2 + $0x114] sm:$0xf]
      %v1339 = vld [vmem:[%s2 + $0x118] sm:$0xf]
      %v1340 = vld [vmem:[%s2 + $0x11c] sm:$0xf]
      %v1413 = vunpack.c.l.b16 %v1269
      %v1414 = vunpack.c.l.b16 %v1270
      %v1415 = vunpack.c.l.b16 %v1271
      %v1416 = vunpack.c.l.b16 %v1272
      %v1417 = vunpack.c.l.b16 %v1273
      %v1418 = vunpack.c.l.b16 %v1274
      %v1419 = vunpack.c.l.b16 %v1275
      %v1420 = vunpack.c.l.b16 %v1276
      %v1421 = vunpack.c.l.b16 %v1277
      %v1422 = vunpack.c.l.b16 %v1278
      %v1423 = vunpack.c.l.b16 %v1279
      %v1424 = vunpack.c.l.b16 %v1280
      %v1425 = vunpack.c.l.b16 %v1281
      %v1426 = vunpack.c.l.b16 %v1282
      %v1427 = vunpack.c.l.b16 %v1283
      %v1428 = vunpack.c.l.b16 %v1284
      %v1429 = vunpack.c.l.b16 %v1285
      %v1430 = vunpack.c.l.b16 %v1286
      %v1431 = vunpack.c.l.b16 %v1287
      %v1432 = vunpack.c.l.b16 %v1288
      %v1433 = vunpack.c.l.b16 %v1289
      %v1434 = vunpack.c.l.b16 %v1290
      %v1435 = vunpack.c.l.b16 %v1291
      %v1436 = vunpack.c.l.b16 %v1292
      %v1437 = vunpack.c.l.b16 %v1293
      %v1438 = vunpack.c.l.b16 %v1294
      %v1439 = vunpack.c.l.b16 %v1295
      %v1440 = vunpack.c.l.b16 %v1296
      %v1441 = vunpack.c.l.b16 %v1297
      %v1442 = vunpack.c.l.b16 %v1298
      %v1443 = vunpack.c.l.b16 %v1299
      %v1444 = vunpack.c.l.b16 %v1300
      %v1445 = vunpack.c.l.b16 %v1301
      %v1446 = vunpack.c.l.b16 %v1302
      %v1447 = vunpack.c.l.b16 %v1303
      %v1448 = vunpack.c.l.b16 %v1304
      %v1449 = vunpack.c.l.b16 %v1305
      %v1450 = vunpack.c.l.b16 %v1306
      %v1451 = vunpack.c.l.b16 %v1307
      %v1452 = vunpack.c.l.b16 %v1308
      %v1453 = vunpack.c.l.b16 %v1309
      %v1454 = vunpack.c.l.b16 %v1310
      %v1455 = vunpack.c.l.b16 %v1311
      %v1456 = vunpack.c.l.b16 %v1312
      %v1457 = vunpack.c.l.b16 %v1313
      %v1458 = vunpack.c.l.b16 %v1314
      %v1459 = vunpack.c.l.b16 %v1315
      %v1460 = vunpack.c.l.b16 %v1316
      %v1461 = vunpack.c.l.b16 %v1317
      %v1462 = vunpack.c.l.b16 %v1318
      %v1463 = vunpack.c.l.b16 %v1319
      %v1464 = vunpack.c.l.b16 %v1320
      %v1465 = vunpack.c.l.b16 %v1321
      %v1466 = vunpack.c.l.b16 %v1322
      %v1467 = vunpack.c.l.b16 %v1323
      %v1468 = vunpack.c.l.b16 %v1324
      %v1469 = vunpack.c.l.b16 %v1325
      %v1470 = vunpack.c.l.b16 %v1326
      %v1471 = vunpack.c.l.b16 %v1327
      %v1472 = vunpack.c.l.b16 %v1328
      %v1473 = vunpack.c.l.b16 %v1329
      %v1474 = vunpack.c.l.b16 %v1330
      %v1475 = vunpack.c.l.b16 %v1331
      %v1476 = vunpack.c.l.b16 %v1332
      %v1477 = vunpack.c.l.b16 %v1333
      %v1478 = vunpack.c.l.b16 %v1334
      %v1479 = vunpack.c.l.b16 %v1335
      %v1480 = vunpack.c.l.b16 %v1336
      %v1481 = vunpack.c.l.b16 %v1337
      %v1482 = vunpack.c.l.b16 %v1338
      %v1483 = vunpack.c.l.b16 %v1339
      %v1484 = vunpack.c.l.b16 %v1340
      %v1485 = vpack.c.b16 %v1414, %v1413
      %v1486 = vpack.c.b16 %v1416, %v1415
      %v1487 = vpack.c.b16 %v1418, %v1417
      %v1488 = vpack.c.b16 %v1420, %v1419
      %v1489 = vpack.c.b16 %v1422, %v1421
      %v1490 = vpack.c.b16 %v1424, %v1423
      %v1491 = vpack.c.b16 %v1426, %v1425
      %v1492 = vpack.c.b16 %v1428, %v1427
      %v1493 = vpack.c.b16 %v1430, %v1429
      %v1494 = vpack.c.b16 %v1432, %v1431
      %v1495 = vpack.c.b16 %v1434, %v1433
      %v1496 = vpack.c.b16 %v1436, %v1435
      %v1497 = vpack.c.b16 %v1438, %v1437
      %v1498 = vpack.c.b16 %v1440, %v1439
      %v1499 = vpack.c.b16 %v1442, %v1441
      %v1500 = vpack.c.b16 %v1444, %v1443
      %v1501 = vpack.c.b16 %v1446, %v1445
      %v1502 = vpack.c.b16 %v1448, %v1447
      %v1503 = vpack.c.b16 %v1450, %v1449
      %v1504 = vpack.c.b16 %v1452, %v1451
      %v1505 = vpack.c.b16 %v1454, %v1453
      %v1506 = vpack.c.b16 %v1456, %v1455
      %v1507 = vpack.c.b16 %v1458, %v1457
      %v1508 = vpack.c.b16 %v1460, %v1459
      %v1509 = vpack.c.b16 %v1462, %v1461
      %v1510 = vpack.c.b16 %v1464, %v1463
      %v1511 = vpack.c.b16 %v1466, %v1465
      %v1512 = vpack.c.b16 %v1468, %v1467
      %v1513 = vpack.c.b16 %v1470, %v1469
      %v1514 = vpack.c.b16 %v1472, %v1471
      %v1515 = vpack.c.b16 %v1474, %v1473
      %v1516 = vpack.c.b16 %v1476, %v1475
      %v1517 = vpack.c.b16 %v1478, %v1477
      %v1518 = vpack.c.b16 %v1480, %v1479
      %v1519 = vpack.c.b16 %v1482, %v1481
      %v1520 = vpack.c.b16 %v1484, %v1483
      %v1558 = vsel %vm1252, %v1251, 0
      %1560 = vmatprep.subr.bf16.mxu0 0
      %1561 = vmatpush1.bf16.msra.mxu0 %v1485
      %1562 = vmatprep.subr.bf16.mxu0 0
      %1563 = vmatpush1.bf16.msra.mxu0 %v1486
      %1564 = vmatprep.subr.bf16.mxu0 0
      %1565 = vmatpush1.bf16.msra.mxu0 %v1487
      %1566 = vmatprep.subr.bf16.mxu0 0
      %1567 = vmatpush1.bf16.msra.mxu0 %v1488
      %1568 = vmatprep.subr.bf16.mxu0 0
      %1569 = vmatpush1.bf16.msra.mxu0 %v1489
      %1570 = vmatprep.subr.bf16.mxu0 0
      %1571 = vmatpush1.bf16.msra.mxu0 %v1490
      %1572 = vmatprep.subr.bf16.mxu0 0
      %1573 = vmatpush1.bf16.msra.mxu0 %v1491
      %1574 = vmatprep.subr.bf16.mxu0 0
      %1575 = vmatpush1.bf16.msra.mxu0 %v1492
      %1576 = vmatprep.subr.bf16.mxu0 0
      %1577 = vmatpush1.bf16.msra.mxu0 %v1493
      %1578 = vmatprep.subr.bf16.mxu0 0
      %1579 = vmatpush1.bf16.msra.mxu0 %v1494
      %1580 = vmatprep.subr.bf16.mxu0 0
      %1581 = vmatpush1.bf16.msra.mxu0 %v1495
      %1582 = vmatprep.subr.bf16.mxu0 0
      %1583 = vmatpush1.bf16.msra.mxu0 %v1496
      %1584 = vmatprep.subr.bf16.mxu0 0
      %1585 = vmatpush1.bf16.msra.mxu0 %v1497
      %1586 = vmatprep.subr.bf16.mxu0 0
      %1587 = vmatpush1.bf16.msra.mxu0 %v1498
      %1588 = vmatprep.subr.bf16.mxu0 0
      %1589 = vmatpush1.bf16.msra.mxu0 %v1499
      %1590 = vmatprep.subr.bf16.mxu0 0
      %1591 = vmatpush1.bf16.msra.mxu0 %v1500
      %1592 = vmatprep.mubr.bf16.mxu0 %v1259
      %1593 = vmatmul.mubr.bf16.gmra.mrb[0].mxu0 %v1255
      %v1594 = vpop.f32.mrb[0].mxu0
      %v1595 = vadd.f32 0.0, %v1594
      %v1596 = vpop.f32.mrb[0].mxu0
      %v1597 = vpop.f32.mrb[0].mxu0
      %v1598 = vadd.f32 0.0, %v1597
      %v1599 = vpop.f32.mrb[0].mxu0
      %1600 = vdwg.mxu0
      %1601 = vmatprep.subr.bf16.mxu0 0
      %1602 = vmatpush1.bf16.msra.mxu0 %v1501
      %1603 = vmatprep.subr.bf16.mxu0 0
      %1604 = vmatpush1.bf16.msra.mxu0 %v1502
      %1605 = vmatprep.subr.bf16.mxu0 0
      %1606 = vmatpush1.bf16.msra.mxu0 %v1503
      %1607 = vmatprep.subr.bf16.mxu0 0
      %1608 = vmatpush1.bf16.msra.mxu0 %v1504
      %1609 = vmatprep.subr.bf16.mxu0 0
      %1610 = vmatpush1.bf16.msra.mxu0 %v1505
      %1611 = vmatprep.subr.bf16.mxu0 0
      %1612 = vmatpush1.bf16.msra.mxu0 %v1506
      %1613 = vmatprep.subr.bf16.mxu0 0
      %1614 = vmatpush1.bf16.msra.mxu0 %v1507
      %1615 = vmatprep.subr.bf16.mxu0 0
      %1616 = vmatpush1.bf16.msra.mxu0 %v1508
      %1617 = vmatprep.subr.bf16.mxu0 0
      %1618 = vmatpush1.bf16.msra.mxu0 %v1509
      %1619 = vmatprep.subr.bf16.mxu0 0
      %1620 = vmatpush1.bf16.msra.mxu0 %v1510
      %1621 = vmatprep.subr.bf16.mxu0 0
      %1622 = vmatpush1.bf16.msra.mxu0 %v1511
      %1623 = vmatprep.subr.bf16.mxu0 0
      %1624 = vmatpush1.bf16.msra.mxu0 %v1512
      %1625 = vmatprep.subr.bf16.mxu0 0
      %1626 = vmatpush1.bf16.msra.mxu0 %v1513
      %1627 = vmatprep.subr.bf16.mxu0 0
      %1628 = vmatpush1.bf16.msra.mxu0 %v1514
      %1629 = vmatprep.subr.bf16.mxu0 0
      %1630 = vmatpush1.bf16.msra.mxu0 %v1515
      %1631 = vmatprep.subr.bf16.mxu0 0
      %1632 = vmatpush1.bf16.msra.mxu0 %v1516
      %1633 = vmatprep.mubr.bf16.mxu0 %v1267
      %1634 = vmatmul.mubr.bf16.gmra.mrb[0].mxu0 %v1263
      %v1635 = vpop.f32.mrb[0].mxu0
      %v1636 = vadd.f32 %v1595, %v1635
      %v1637 = vpop.f32.mrb[0].mxu0
      %v1638 = vpop.f32.mrb[0].mxu0
      %v1639 = vadd.f32 %v1598, %v1638
      %v1640 = vpop.f32.mrb[0].mxu0
      %1641 = vdwg.mxu0
      %1642 = vmatprep.subr.bf16.mxu0 0
      %1643 = vmatpush1.bf16.msra.mxu0 %v1517
      %1644 = vmatprep.subr.bf16.mxu0 0
      %1645 = vmatpush1.bf16.msra.mxu0 %v1518
      %1646 = vmatprep.subr.bf16.mxu0 0
      %1647 = vmatpush1.bf16.msra.mxu0 %v1519
      %1648 = vmatprep.subr.bf16.mxu0 0
      %1649 = vmatpush1.bf16.msra.mxu0 %v1520
      %1650 = vmatprep.subr.bf16.mxu0 0
      %1651 = vmatpush1.bf16.msra.mxu0 0
      %1652 = vmatprep.subr.bf16.mxu0 0
      %1653 = vmatpush1.bf16.msra.mxu0 0
      %1654 = vmatprep.subr.bf16.mxu0 0
      %1655 = vmatpush1.bf16.msra.mxu0 0
      %1656 = vmatprep.subr.bf16.mxu0 0
      %1657 = vmatpush1.bf16.msra.mxu0 0
      %1658 = vmatprep.subr.bf16.mxu0 0
      %1659 = vmatpush1.bf16.msra.mxu0 0
      %1660 = vmatprep.subr.bf16.mxu0 0
      %1661 = vmatpush1.bf16.msra.mxu0 0
      %1662 = vmatprep.subr.bf16.mxu0 0
      %1663 = vmatpush1.bf16.msra.mxu0 0
      %1664 = vmatprep.subr.bf16.mxu0 0
      %1665 = vmatpush1.bf16.msra.mxu0 0
      %1666 = vmatprep.subr.bf16.mxu0 0
      %1667 = vmatpush1.bf16.msra.mxu0 0
      %1668 = vmatprep.subr.bf16.mxu0 0
      %1669 = vmatpush1.bf16.msra.mxu0 0
      %1670 = vmatprep.subr.bf16.mxu0 0
      %1671 = vmatpush1.bf16.msra.mxu0 0
      %1672 = vmatprep.subr.bf16.mxu0 0
      %1673 = vmatpush1.bf16.msra.mxu0 0
      %1674 = vmatprep.mubr.bf16.mxu0 0
      %1675 = vmatmul.mubr.bf16.gmra.mrb[0].mxu0 %v1558
      %v1676 = vpop.f32.mrb[0].mxu0
      %v1677 = vadd.f32 %v1636, %v1676
      %v1678 = vpop.f32.mrb[0].mxu0
      %v1679 = vpop.f32.mrb[0].mxu0
      %v1680 = vadd.f32 %v1639, %v1679
      %v1681 = vpop.f32.mrb[0].mxu0
      %1682 = vdwg.mxu0
      %v1683 = vadd.f32 %v1677, %v1680
      %v1684 = vrot.slane %v1683, 4
      %v1685 = vadd.f32 %v1683, %v1684
      %v1686 = vrot.slane %v1685, 2
      %v1687 = vadd.f32 %v1685, %v1686
      %v1688 = vrot.slane %v1687, 1
      %v1689 = vadd.f32 %v1687, %v1688
      %1691 = vrot.lane.b32.xlu0 %v1689, 96
      %v1692 = vpop.permute.xlu0 %1691
      %v1694 = vadd.f32 %v1689, %v1692
      %1695 = vrot.lane.b32.xlu0 %v1689, 64
      %v1696 = vpop.permute.xlu0 %1695
      %v1698 = vadd.f32 %v1694, %v1696
      %1699 = vrot.lane.b32.xlu0 %v1689, 32
      %v1700 = vpop.permute.xlu0 %1699
      %v1702 = vadd.f32 %v1698, %v1700
      %v1703 = vmul.f32 %v1702, 0.015625
      %1705 = vrot.lane.b32.xlu0 %v1703, 32
      %v1706 = vpop.permute.xlu0 %1705
      %1708 = vrot.lane.b32.xlu0 %v1703, 64
      %v1709 = vpop.permute.xlu0 %1708
      %1711 = vrot.lane.b32.xlu0 %v1703, 96
      %v1712 = vpop.permute.xlu0 %1711
      %vm1714 = vcmask 261120
      %v1715 = vsel %vm1714, %v1703, %v1706
      %v1716 = vsel %vm1252, %v1715, %v1709
      %vm1717 = vcmask 785408
      %v1718 = vsel %vm1717, %v1716, %v1712
      %v1719 = vlaneseq
      %v1720 = vshrl.u32 %v1719, 7
      %v1721 = vsub.s32 0, %v1720
      %v1722 = vrot.slane %v1718, %v1721
      %v1723 = vsub.f32 %v1677, %v1722
      %v1724 = vsub.f32 %v1680, %v1722
      %v1725 = vmul.f32 %v1723, %v1723
      %v1726 = vmul.f32 %v1724, %v1724
      %v1727 = vadd.f32 %v1725, %v1726
      %v1728 = vrot.slane %v1727, 4
      %v1729 = vadd.f32 %v1727, %v1728
      %v1730 = vrot.slane %v1729, 2
      %v1731 = vadd.f32 %v1729, %v1730
      %v1732 = vrot.slane %v1731, 1
      %v1733 = vadd.f32 %v1731, %v1732
      %1735 = vrot.lane.b32.xlu0 %v1733, 96
      %v1736 = vpop.permute.xlu0 %1735
      %v1738 = vadd.f32 %v1733, %v1736
      %1739 = vrot.lane.b32.xlu0 %v1733, 64
      %v1740 = vpop.permute.xlu0 %1739
      %v1742 = vadd.f32 %v1738, %v1740
      %1743 = vrot.lane.b32.xlu0 %v1733, 32
      %v1744 = vpop.permute.xlu0 %1743
      %v1746 = vadd.f32 %v1742, %v1744
      %v1747 = vmul.f32 %v1746, 0.015625
      %v1748 = vadd.f32 %v1747, 1e-05
      %v1749 = vrsqrt.pop %v1748
      %1751 = vrot.lane.b32.xlu0 %v1749, 32
      %v1752 = vpop.permute.xlu0 %1751
      %1754 = vrot.lane.b32.xlu0 %v1749, 64
      %v1755 = vpop.permute.xlu0 %1754
      %1757 = vrot.lane.b32.xlu0 %v1749, 96
      %v1758 = vpop.permute.xlu0 %1757
      %v1760 = vsel %vm1714, %v1749, %v1752
      %v1761 = vsel %vm1252, %v1760, %v1755
      %v1762 = vsel %vm1717, %v1761, %v1758
      %v1763 = vlaneseq
      %v1764 = vshrl.u32 %v1763, 7
      %v1765 = vsub.s32 0, %v1764
      %v1766 = vrot.slane %v1762, %v1765
      %v1767 = vmul.f32 %v1723, %v1766
      %v1768 = vmul.f32 %v1724, %v1766
      %v1769 = vmax.f32 %v1767, 0.0
      %v1770 = vmax.f32 %v1768, 0.0
      %v1771 = vpack.c.bf16 %v1770, %v1769
      %v1773 = vcombine.high %v1771, %v1771
      %v1775 = vunpack.c.l.s4 1966171168
      %v1776 = vunpack.c.0.s8 %v1775
      %v1777 = vlaneseq
      %v1778 = vshrl.u32 %v1777, 7
      %v1779 = vsub.s32 %v1776, %v1778
      %v1780 = vrot.slane %v1771, %v1779
      %v1782 = vunpack.c.l.s4 1966171168
      %v1783 = vunpack.c.0.s8 %v1782
      %v1784 = vlaneseq
      %v1785 = vshrl.u32 %v1784, 7
      %v1786 = vsub.s32 %v1783, %v1785
      %v1787 = vrot.slane %v1773, %v1786
      %v1788 = vcombine.high %v1780, %v1780
      %v1789 = vcombine.high %v1787, %v1787
      %v1791 = vunpack.c.l.s4 1966171168
      %v1792 = vunpack.c.0.s8 %v1791
      %v1793 = vlaneseq
      %v1794 = vshrl.u32 %v1793, 7
      %v1795 = vsub.s32 %v1792, %v1794
      %v1796 = vrot.slane %v1780, %v1795
      %v1798 = vunpack.c.l.s4 1966171168
      %v1799 = vunpack.c.0.s8 %v1798
      %v1800 = vlaneseq
      %v1801 = vshrl.u32 %v1800, 7
      %v1802 = vsub.s32 %v1799, %v1801
      %v1803 = vrot.slane %v1787, %v1802
      %v1805 = vunpack.c.l.s4 1966171168
      %v1806 = vunpack.c.0.s8 %v1805
      %v1807 = vlaneseq
      %v1808 = vshrl.u32 %v1807, 7
      %v1809 = vsub.s32 %v1806, %v1808
      %v1810 = vrot.slane %v1788, %v1809
      %v1812 = vunpack.c.l.s4 1966171168
      %v1813 = vunpack.c.0.s8 %v1812
      %v1814 = vlaneseq
      %v1815 = vshrl.u32 %v1814, 7
      %v1816 = vsub.s32 %v1813, %v1815
      %v1817 = vrot.slane %v1789, %v1816
      %v1818 = vcombine.high %v1796, %v1796
      %v1819 = vcombine.high %v1803, %v1803
      %v1820 = vcombine.high %v1810, %v1810
      %v1821 = vcombine.high %v1817, %v1817
      %v1822 = vunpack.i.l.s16 %v1796
      %v1823 = vunpack.i.h.s16 %v1796
      %v1824 = vunpack.i.l.s16 %v1810
      %v1825 = vunpack.i.h.s16 %v1810
      %v1826 = vunpack.i.l.s16 %v1818
      %v1827 = vunpack.i.h.s16 %v1818
      %v1828 = vunpack.i.l.s16 %v1820
      %v1829 = vunpack.i.h.s16 %v1820
      %v1830 = vunpack.i.l.s16 %v1803
      %v1831 = vunpack.i.h.s16 %v1803
      %v1832 = vunpack.i.l.s16 %v1817
      %v1833 = vunpack.i.h.s16 %v1817
      %v1834 = vunpack.i.l.s16 %v1819
      %v1835 = vunpack.i.h.s16 %v1819
      %v1836 = vunpack.i.l.s16 %v1821
      %v1837 = vunpack.i.h.s16 %v1821
      %v1838 = vpack.i.b16 %v1822, %v1822
      %v1839 = vpack.i.b16 %v1823, %v1823
      %v1840 = vpack.i.b16 %v1824, %v1824
      %v1841 = vpack.i.b16 %v1825, %v1825
      %v1842 = vpack.i.b16 %v1826, %v1826
      %v1843 = vpack.i.b16 %v1827, %v1827
      %v1844 = vpack.i.b16 %v1828, %v1828
      %v1845 = vpack.i.b16 %v1829, %v1829
      %v1846 = vpack.i.b16 %v1830, %v1830
      %v1847 = vpack.i.b16 %v1831, %v1831
      %v1848 = vpack.i.b16 %v1832, %v1832
      %v1849 = vpack.i.b16 %v1833, %v1833
      %v1850 = vpack.i.b16 %v1834, %v1834
      %v1851 = vpack.i.b16 %v1835, %v1835
      %v1852 = vpack.i.b16 %v1836, %v1836
      %v1853 = vpack.i.b16 %v1837, %v1837
      %v1854 = vlaneseq
      %v1855 = vshrl.u32 %v1854, 7
      %v1856 = vsub.s32 0, %v1855
      %v1857 = vrot.slane %v1838, %v1856
      %v1858 = vlaneseq
      %v1859 = vshrl.u32 %v1858, 7
      %v1860 = vsub.s32 0, %v1859
      %v1861 = vrot.slane %v1839, %v1860
      %v1862 = vlaneseq
      %v1863 = vshrl.u32 %v1862, 7
      %v1864 = vsub.s32 0, %v1863
      %v1865 = vrot.slane %v1840, %v1864
      %v1866 = vlaneseq
      %v1867 = vshrl.u32 %v1866, 7
      %v1868 = vsub.s32 0, %v1867
      %v1869 = vrot.slane %v1841, %v1868
      %v1870 = vlaneseq
      %v1871 = vshrl.u32 %v1870, 7
      %v1872 = vsub.s32 0, %v1871
      %v1873 = vrot.slane %v1842, %v1872
      %v1874 = vlaneseq
      %v1875 = vshrl.u32 %v1874, 7
      %v1876 = vsub.s32 0, %v1875
      %v1877 = vrot.slane %v1843, %v1876
      %v1878 = vlaneseq
      %v1879 = vshrl.u32 %v1878, 7
      %v1880 = vsub.s32 0, %v1879
      %v1881 = vrot.slane %v1844, %v1880
      %v1882 = vlaneseq
      %v1883 = vshrl.u32 %v1882, 7
      %v1884 = vsub.s32 0, %v1883
      %v1885 = vrot.slane %v1845, %v1884
      %v1886 = vlaneseq
      %v1887 = vshrl.u32 %v1886, 7
      %v1888 = vsub.s32 0, %v1887
      %v1889 = vrot.slane %v1846, %v1888
      %v1890 = vlaneseq
      %v1891 = vshrl.u32 %v1890, 7
      %v1892 = vsub.s32 0, %v1891
      %v1893 = vrot.slane %v1847, %v1892
      %v1894 = vlaneseq
      %v1895 = vshrl.u32 %v1894, 7
      %v1896 = vsub.s32 0, %v1895
      %v1897 = vrot.slane %v1848, %v1896
      %v1898 = vlaneseq
      %v1899 = vshrl.u32 %v1898, 7
      %v1900 = vsub.s32 0, %v1899
      %v1901 = vrot.slane %v1849, %v1900
      %v1902 = vlaneseq
      %v1903 = vshrl.u32 %v1902, 7
      %v1904 = vsub.s32 0, %v1903
      %v1905 = vrot.slane %v1850, %v1904
      %v1906 = vlaneseq
      %v1907 = vshrl.u32 %v1906, 7
      %v1908 = vsub.s32 0, %v1907
      %v1909 = vrot.slane %v1851, %v1908
      %v1910 = vlaneseq
      %v1911 = vshrl.u32 %v1910, 7
      %v1912 = vsub.s32 0, %v1911
      %v1913 = vrot.slane %v1852, %v1912
      %v1914 = vlaneseq
      %v1915 = vshrl.u32 %v1914, 7
      %v1916 = vsub.s32 0, %v1915
      %v1917 = vrot.slane %v1853, %v1916
      %1934 = vrot.lane.b32.xlu0 %v1857, 96
      %v1935 = vpop.permute.xlu0 %1934
      %1936 = vrot.lane.b32.xlu0 %v1861, 96
      %v1937 = vpop.permute.xlu0 %1936
      %1938 = vrot.lane.b32.xlu0 %v1865, 96
      %v1939 = vpop.permute.xlu0 %1938
      %1940 = vrot.lane.b32.xlu0 %v1869, 96
      %v1941 = vpop.permute.xlu0 %1940
      %1942 = vrot.lane.b32.xlu0 %v1873, 96
      %v1943 = vpop.permute.xlu0 %1942
      %1944 = vrot.lane.b32.xlu0 %v1877, 96
      %v1945 = vpop.permute.xlu0 %1944
      %1946 = vrot.lane.b32.xlu0 %v1881, 96
      %v1947 = vpop.permute.xlu0 %1946
      %1948 = vrot.lane.b32.xlu0 %v1885, 96
      %v1949 = vpop.permute.xlu0 %1948
      %1950 = vrot.lane.b32.xlu0 %v1889, 96
      %v1951 = vpop.permute.xlu0 %1950
      %1952 = vrot.lane.b32.xlu0 %v1893, 96
      %v1953 = vpop.permute.xlu0 %1952
      %1954 = vrot.lane.b32.xlu0 %v1897, 96
      %v1955 = vpop.permute.xlu0 %1954
      %1956 = vrot.lane.b32.xlu0 %v1901, 96
      %v1957 = vpop.permute.xlu0 %1956
      %1958 = vrot.lane.b32.xlu0 %v1905, 96
      %v1959 = vpop.permute.xlu0 %1958
      %1960 = vrot.lane.b32.xlu0 %v1909, 96
      %v1961 = vpop.permute.xlu0 %1960
      %1962 = vrot.lane.b32.xlu0 %v1913, 96
      %v1963 = vpop.permute.xlu0 %1962
      %1964 = vrot.lane.b32.xlu0 %v1917, 96
      %v1965 = vpop.permute.xlu0 %1964
      %v1982 = vsel %vm817, %v1857, %v1935
      %v1983 = vsel %vm817, %v1861, %v1937
      %v1984 = vsel %vm817, %v1865, %v1939
      %v1985 = vsel %vm817, %v1869, %v1941
      %v1986 = vsel %vm817, %v1873, %v1943
      %v1987 = vsel %vm817, %v1877, %v1945
      %v1988 = vsel %vm817, %v1881, %v1947
      %v1989 = vsel %vm817, %v1885, %v1949
      %v1990 = vsel %vm817, %v1889, %v1951
      %v1991 = vsel %vm817, %v1893, %v1953
      %v1992 = vsel %vm817, %v1897, %v1955
      %v1993 = vsel %vm817, %v1901, %v1957
      %v1994 = vsel %vm817, %v1905, %v1959
      %v1995 = vsel %vm817, %v1909, %v1961
      %v1996 = vsel %vm817, %v1913, %v1963
      %v1997 = vsel %vm817, %v1917, %v1965
      %2014 = vrot.lane.b32.xlu0 %v1982, 64
      %v2015 = vpop.permute.xlu0 %2014
      %2016 = vrot.lane.b32.xlu0 %v1983, 64
      %v2017 = vpop.permute.xlu0 %2016
      %2018 = vrot.lane.b32.xlu0 %v1984, 64
      %v2019 = vpop.permute.xlu0 %2018
      %2020 = vrot.lane.b32.xlu0 %v1985, 64
      %v2021 = vpop.permute.xlu0 %2020
      %2022 = vrot.lane.b32.xlu0 %v1986, 64
      %v2023 = vpop.permute.xlu0 %2022
      %2024 = vrot.lane.b32.xlu0 %v1987, 64
      %v2025 = vpop.permute.xlu0 %2024
      %2026 = vrot.lane.b32.xlu0 %v1988, 64
      %v2027 = vpop.permute.xlu0 %2026
      %2028 = vrot.lane.b32.xlu0 %v1989, 64
      %v2029 = vpop.permute.xlu0 %2028
      %2030 = vrot.lane.b32.xlu0 %v1990, 64
      %v2031 = vpop.permute.xlu0 %2030
      %2032 = vrot.lane.b32.xlu0 %v1991, 64
      %v2033 = vpop.permute.xlu0 %2032
      %2034 = vrot.lane.b32.xlu0 %v1992, 64
      %v2035 = vpop.permute.xlu0 %2034
      %2036 = vrot.lane.b32.xlu0 %v1993, 64
      %v2037 = vpop.permute.xlu0 %2036
      %2038 = vrot.lane.b32.xlu0 %v1994, 64
      %v2039 = vpop.permute.xlu0 %2038
      %2040 = vrot.lane.b32.xlu0 %v1995, 64
      %v2041 = vpop.permute.xlu0 %2040
      %2042 = vrot.lane.b32.xlu0 %v1996, 64
      %v2043 = vpop.permute.xlu0 %2042
      %2044 = vrot.lane.b32.xlu0 %v1997, 64
      %v2045 = vpop.permute.xlu0 %2044
      %v2046 = vcombine.low %v1982, %v1983
      %v2047 = vcombine.low %v1984, %v1985
      %v2049 = vunpack.c.l.s4 1966171168
      %v2050 = vunpack.c.0.s8 %v2049
      %v2051 = vlaneseq
      %v2052 = vshrl.u32 %v2051, 7
      %v2053 = vsub.s32 %v2050, %v2052
      %v2054 = vrot.slane %v2046, %v2053
      %v2056 = vunpack.c.l.s4 1966171168
      %v2057 = vunpack.c.0.s8 %v2056
      %v2058 = vlaneseq
      %v2059 = vshrl.u32 %v2058, 7
      %v2060 = vsub.s32 %v2057, %v2059
      %v2061 = vrot.slane %v2047, %v2060
      %v2062 = vcombine.low %v2054, %v2061
      %v2064 = vunpack.c.l.s4 1966171168
      %v2065 = vunpack.c.0.s8 %v2064
      %v2066 = vlaneseq
      %v2067 = vshrl.u32 %v2066, 7
      %v2068 = vsub.s32 %v2065, %v2067
      %v2069 = vrot.slane %v2062, %v2068
      %v2070 = vcombine.low %v2015, %v2017
      %v2071 = vcombine.low %v2019, %v2021
      %v2073 = vunpack.c.l.s4 1966171168
      %v2074 = vunpack.c.0.s8 %v2073
      %v2075 = vlaneseq
      %v2076 = vshrl.u32 %v2075, 7
      %v2077 = vsub.s32 %v2074, %v2076
      %v2078 = vrot.slane %v2070, %v2077
      %v2080 = vunpack.c.l.s4 1966171168
      %v2081 = vunpack.c.0.s8 %v2080
      %v2082 = vlaneseq
      %v2083 = vshrl.u32 %v2082, 7
      %v2084 = vsub.s32 %v2081, %v2083
      %v2085 = vrot.slane %v2071, %v2084
      %v2086 = vcombine.low %v2078, %v2085
      %v2088 = vunpack.c.l.s4 1966171168
      %v2089 = vunpack.c.0.s8 %v2088
      %v2090 = vlaneseq
      %v2091 = vshrl.u32 %v2090, 7
      %v2092 = vsub.s32 %v2089, %v2091
      %v2093 = vrot.slane %v2086, %v2092
      %v2094 = vcombine.low %v1986, %v1987
      %v2095 = vcombine.low %v1988, %v1989
      %v2097 = vunpack.c.l.s4 1966171168
      %v2098 = vunpack.c.0.s8 %v2097
      %v2099 = vlaneseq
      %v2100 = vshrl.u32 %v2099, 7
      %v2101 = vsub.s32 %v2098, %v2100
      %v2102 = vrot.slane %v2094, %v2101
      %v2104 = vunpack.c.l.s4 1966171168
      %v2105 = vunpack.c.0.s8 %v2104
      %v2106 = vlaneseq
      %v2107 = vshrl.u32 %v2106, 7
      %v2108 = vsub.s32 %v2105, %v2107
      %v2109 = vrot.slane %v2095, %v2108
      %v2110 = vcombine.low %v2102, %v2109
      %v2112 = vunpack.c.l.s4 1966171168
      %v2113 = vunpack.c.0.s8 %v2112
      %v2114 = vlaneseq
      %v2115 = vshrl.u32 %v2114, 7
      %v2116 = vsub.s32 %v2113, %v2115
      %v2117 = vrot.slane %v2110, %v2116
      %v2118 = vcombine.low %v2023, %v2025
      %v2119 = vcombine.low %v2027, %v2029
      %v2121 = vunpack.c.l.s4 1966171168
      %v2122 = vunpack.c.0.s8 %v2121
      %v2123 = vlaneseq
      %v2124 = vshrl.u32 %v2123, 7
      %v2125 = vsub.s32 %v2122, %v2124
      %v2126 = vrot.slane %v2118, %v2125
      %v2128 = vunpack.c.l.s4 1966171168
      %v2129 = vunpack.c.0.s8 %v2128
      %v2130 = vlaneseq
      %v2131 = vshrl.u32 %v2130, 7
      %v2132 = vsub.s32 %v2129, %v2131
      %v2133 = vrot.slane %v2119, %v2132
      %v2134 = vcombine.low %v2126, %v2133
      %v2136 = vunpack.c.l.s4 1966171168
      %v2137 = vunpack.c.0.s8 %v2136
      %v2138 = vlaneseq
      %v2139 = vshrl.u32 %v2138, 7
      %v2140 = vsub.s32 %v2137, %v2139
      %v2141 = vrot.slane %v2134, %v2140
      %v2142 = vcombine.low %v1990, %v1991
      %v2143 = vcombine.low %v1992, %v1993
      %v2145 = vunpack.c.l.s4 1966171168
      %v2146 = vunpack.c.0.s8 %v2145
      %v2147 = vlaneseq
      %v2148 = vshrl.u32 %v2147, 7
      %v2149 = vsub.s32 %v2146, %v2148
      %v2150 = vrot.slane %v2142, %v2149
      %v2152 = vunpack.c.l.s4 1966171168
      %v2153 = vunpack.c.0.s8 %v2152
      %v2154 = vlaneseq
      %v2155 = vshrl.u32 %v2154, 7
      %v2156 = vsub.s32 %v2153, %v2155
      %v2157 = vrot.slane %v2143, %v2156
      %v2158 = vcombine.low %v2150, %v2157
      %v2160 = vunpack.c.l.s4 1966171168
      %v2161 = vunpack.c.0.s8 %v2160
      %v2162 = vlaneseq
      %v2163 = vshrl.u32 %v2162, 7
      %v2164 = vsub.s32 %v2161, %v2163
      %v2165 = vrot.slane %v2158, %v2164
      %v2166 = vcombine.low %v2031, %v2033
      %v2167 = vcombine.low %v2035, %v2037
      %v2169 = vunpack.c.l.s4 1966171168
      %v2170 = vunpack.c.0.s8 %v2169
      %v2171 = vlaneseq
      %v2172 = vshrl.u32 %v2171, 7
      %v2173 = vsub.s32 %v2170, %v2172
      %v2174 = vrot.slane %v2166, %v2173
      %v2176 = vunpack.c.l.s4 1966171168
      %v2177 = vunpack.c.0.s8 %v2176
      %v2178 = vlaneseq
      %v2179 = vshrl.u32 %v2178, 7
      %v2180 = vsub.s32 %v2177, %v2179
      %v2181 = vrot.slane %v2167, %v2180
      %v2182 = vcombine.low %v2174, %v2181
      %v2184 = vunpack.c.l.s4 1966171168
      %v2185 = vunpack.c.0.s8 %v2184
      %v2186 = vlaneseq
      %v2187 = vshrl.u32 %v2186, 7
      %v2188 = vsub.s32 %v2185, %v2187
      %v2189 = vrot.slane %v2182, %v2188
      %v2190 = vcombine.low %v1994, %v1995
      %v2191 = vcombine.low %v1996, %v1997
      %v2193 = vunpack.c.l.s4 1966171168
      %v2194 = vunpack.c.0.s8 %v2193
      %v2195 = vlaneseq
      %v2196 = vshrl.u32 %v2195, 7
      %v2197 = vsub.s32 %v2194, %v2196
      %v2198 = vrot.slane %v2190, %v2197
      %v2200 = vunpack.c.l.s4 1966171168
      %v2201 = vunpack.c.0.s8 %v2200
      %v2202 = vlaneseq
      %v2203 = vshrl.u32 %v2202, 7
      %v2204 = vsub.s32 %v2201, %v2203
      %v2205 = vrot.slane %v2191, %v2204
      %v2206 = vcombine.low %v2198, %v2205
      %v2208 = vunpack.c.l.s4 1966171168
      %v2209 = vunpack.c.0.s8 %v2208
      %v2210 = vlaneseq
      %v2211 = vshrl.u32 %v2210, 7
      %v2212 = vsub.s32 %v2209, %v2211
      %v2213 = vrot.slane %v2206, %v2212
      %v2214 = vcombine.low %v2039, %v2041
      %v2215 = vcombine.low %v2043, %v2045
      %v2217 = vunpack.c.l.s4 1966171168
      %v2218 = vunpack.c.0.s8 %v2217
      %v2219 = vlaneseq
      %v2220 = vshrl.u32 %v2219, 7
      %v2221 = vsub.s32 %v2218, %v2220
      %v2222 = vrot.slane %v2214, %v2221
      %v2224 = vunpack.c.l.s4 1966171168
      %v2225 = vunpack.c.0.s8 %v2224
      %v2226 = vlaneseq
      %v2227 = vshrl.u32 %v2226, 7
      %v2228 = vsub.s32 %v2225, %v2227
      %v2229 = vrot.slane %v2215, %v2228
      %v2230 = vcombine.low %v2222, %v2229
      %v2232 = vunpack.c.l.s4 1966171168
      %v2233 = vunpack.c.0.s8 %v2232
      %v2234 = vlaneseq
      %v2235 = vshrl.u32 %v2234, 7
      %v2236 = vsub.s32 %v2233, %v2235
      %v2237 = vrot.slane %v2230, %v2236
      %v2239 = vshrl.u32 %v2069, 16
      %v2241 = vrot.slane %v2239, 7
      %v2242 = vshll.u32 %v2069, 16
      %v2244 = vor.u32 %v2241, %v2242
      %v2246 = vshrl.u32 %v2093, 16
      %v2248 = vrot.slane %v2246, 7
      %v2249 = vshll.u32 %v2093, 16
      %v2251 = vor.u32 %v2248, %v2249
      %v2253 = vshrl.u32 %v2117, 16
      %v2255 = vrot.slane %v2253, 7
      %v2256 = vshll.u32 %v2117, 16
      %v2258 = vor.u32 %v2255, %v2256
      %v2260 = vshrl.u32 %v2141, 16
      %v2262 = vrot.slane %v2260, 7
      %v2263 = vshll.u32 %v2141, 16
      %v2265 = vor.u32 %v2262, %v2263
      %v2267 = vshrl.u32 %v2165, 16
      %v2269 = vrot.slane %v2267, 7
      %v2270 = vshll.u32 %v2165, 16
      %v2272 = vor.u32 %v2269, %v2270
      %v2274 = vshrl.u32 %v2189, 16
      %v2276 = vrot.slane %v2274, 7
      %v2277 = vshll.u32 %v2189, 16
      %v2279 = vor.u32 %v2276, %v2277
      %v2281 = vshrl.u32 %v2213, 16
      %v2283 = vrot.slane %v2281, 7
      %v2284 = vshll.u32 %v2213, 16
      %v2286 = vor.u32 %v2283, %v2284
      %v2288 = vshrl.u32 %v2237, 16
      %v2290 = vrot.slane %v2288, 7
      %v2291 = vshll.u32 %v2237, 16
      %v2293 = vor.u32 %v2290, %v2291
      %v2302 = vsel %vm817, 0, %v2244
      %v2303 = vsel %vm817, 0, %v2251
      %v2304 = vsel %vm817, 0, %v2258
      %v2305 = vsel %vm817, 0, %v2265
      %v2306 = vsel %vm817, 0, %v2272
      %v2307 = vsel %vm817, 0, %v2279
      %v2308 = vsel %vm817, 0, %v2286
      %v2309 = vsel %vm817, 0, %v2293
      %v2310 = vsel %vm853, %v2302, 0
      %v2311 = vsel %vm853, %v2303, 0
      %v2312 = vsel %vm853, %v2304, 0
      %v2313 = vsel %vm853, %v2305, 0
      %v2314 = vsel %vm853, %v2306, 0
      %v2315 = vsel %vm853, %v2307, 0
      %v2316 = vsel %vm853, %v2308, 0
      %v2317 = vsel %vm853, %v2309, 0
      %v2325 = vunpack.c.l.b16 0
      %v2326 = vunpack.c.h.b16 0
      %v2327 = vunpack.c.l.b16 %v2310
      %v2328 = vunpack.c.h.b16 %v2310
      %v2329 = vunpack.c.l.b16 %v2311
      %v2330 = vunpack.c.h.b16 %v2311
      %v2331 = vunpack.c.l.b16 %v2312
      %v2332 = vunpack.c.h.b16 %v2312
      %v2333 = vunpack.c.l.b16 %v2313
      %v2334 = vunpack.c.h.b16 %v2313
      %v2335 = vunpack.c.l.b16 %v2314
      %v2336 = vunpack.c.h.b16 %v2314
      %v2337 = vunpack.c.l.b16 %v2315
      %v2338 = vunpack.c.h.b16 %v2315
      %v2339 = vunpack.c.l.b16 %v2316
      %v2340 = vunpack.c.h.b16 %v2316
      %v2341 = vpack.c.b16 %v2325, %v2325
      %v2342 = vpack.c.b16 %v2326, %v2326
      %v2343 = vpack.c.b16 %v2327, %v2327
      %v2344 = vpack.c.b16 %v2328, %v2328
      %v2345 = vpack.c.b16 %v2329, %v2329
      %v2346 = vpack.c.b16 %v2330, %v2330
      %v2347 = vpack.c.b16 %v2331, %v2331
      %v2348 = vpack.c.b16 %v2332, %v2332
      %v2349 = vpack.c.b16 %v2333, %v2333
      %v2350 = vpack.c.b16 %v2334, %v2334
      %v2351 = vpack.c.b16 %v2335, %v2335
      %v2352 = vpack.c.b16 %v2336, %v2336
      %v2353 = vpack.c.b16 %v2337, %v2337
      %v2354 = vpack.c.b16 %v2338, %v2338
      %v2355 = vpack.c.b16 %v2339, %v2339
      %v2356 = vpack.c.b16 %v2340, %v2340
      %vm2357 = vsmask.f32 7440
      %vm2358 = vmor %vm843, %vm2357
      %v2360 = vshrl.u32 %v2341, 16
      %v2362 = vrot.slane %v2360, 4
      %v2363 = vshll.u32 %v2341, 16
      %v2365 = vrot.slane %v2363, 5
      %v2366 = vor.u32 %v2362, %v2365
      %v2367 = vrot.slane %v2366, 4
      %v2369 = vshll.u32 %v2342, 16
      %v2371 = vrot.slane %v2369, 5
      %v2372 = vsel %vm2358, %v2367, %v2371
      %v2374 = vshrl.u32 %v2343, 16
      %v2376 = vrot.slane %v2374, 4
      %v2377 = vshll.u32 %v2343, 16
      %v2379 = vrot.slane %v2377, 5
      %v2380 = vor.u32 %v2376, %v2379
      %v2381 = vrot.slane %v2380, 4
      %v2383 = vshll.u32 %v2344, 16
      %v2385 = vrot.slane %v2383, 5
      %v2386 = vsel %vm2358, %v2381, %v2385
      %v2388 = vshrl.u32 %v2345, 16
      %v2390 = vrot.slane %v2388, 4
      %v2391 = vshll.u32 %v2345, 16
      %v2393 = vrot.slane %v2391, 5
      %v2394 = vor.u32 %v2390, %v2393
      %v2395 = vrot.slane %v2394, 4
      %v2397 = vshll.u32 %v2346, 16
      %v2399 = vrot.slane %v2397, 5
      %v2400 = vsel %vm2358, %v2395, %v2399
      %v2402 = vshrl.u32 %v2347, 16
      %v2404 = vrot.slane %v2402, 4
      %v2405 = vshll.u32 %v2347, 16
      %v2407 = vrot.slane %v2405, 5
      %v2408 = vor.u32 %v2404, %v2407
      %v2409 = vrot.slane %v2408, 4
      %v2411 = vshll.u32 %v2348, 16
      %v2413 = vrot.slane %v2411, 5
      %v2414 = vsel %vm2358, %v2409, %v2413
      %v2416 = vshrl.u32 %v2349, 16
      %v2418 = vrot.slane %v2416, 4
      %v2419 = vshll.u32 %v2349, 16
      %v2421 = vrot.slane %v2419, 5
      %v2422 = vor.u32 %v2418, %v2421
      %v2423 = vrot.slane %v2422, 4
      %v2425 = vshll.u32 %v2350, 16
      %v2427 = vrot.slane %v2425, 5
      %v2428 = vsel %vm2358, %v2423, %v2427
      %v2430 = vshrl.u32 %v2351, 16
      %v2432 = vrot.slane %v2430, 4
      %v2433 = vshll.u32 %v2351, 16
      %v2435 = vrot.slane %v2433, 5
      %v2436 = vor.u32 %v2432, %v2435
      %v2437 = vrot.slane %v2436, 4
      %v2439 = vshll.u32 %v2352, 16
      %v2441 = vrot.slane %v2439, 5
      %v2442 = vsel %vm2358, %v2437, %v2441
      %v2444 = vshrl.u32 %v2353, 16
      %v2446 = vrot.slane %v2444, 4
      %v2447 = vshll.u32 %v2353, 16
      %v2449 = vrot.slane %v2447, 5
      %v2450 = vor.u32 %v2446, %v2449
      %v2451 = vrot.slane %v2450, 4
      %v2453 = vshll.u32 %v2354, 16
      %v2455 = vrot.slane %v2453, 5
      %v2456 = vsel %vm2358, %v2451, %v2455
      %v2458 = vshrl.u32 %v2355, 16
      %v2460 = vrot.slane %v2458, 4
      %v2461 = vshll.u32 %v2355, 16
      %v2463 = vrot.slane %v2461, 5
      %v2464 = vor.u32 %v2460, %v2463
      %v2465 = vrot.slane %v2464, 4
      %v2467 = vshll.u32 %v2356, 16
      %v2469 = vrot.slane %v2467, 5
      %v2470 = vsel %vm2358, %v2465, %v2469
      %vm2471 = vcmask 1046532
      %vm2472 = vmor %vm833, %vm2471
      %v2473 = vrot.slane %v2341, 5
      %v2474 = vrot.slane %v2473, 4
      %v2475 = vrot.slane %v2342, 5
      %v2476 = vsel %vm2472, %v2474, %v2475
      %v2477 = vrot.slane %v2343, 5
      %v2478 = vrot.slane %v2477, 4
      %v2479 = vrot.slane %v2344, 5
      %v2480 = vsel %vm2472, %v2478, %v2479
      %v2481 = vrot.slane %v2345, 5
      %v2482 = vrot.slane %v2481, 4
      %v2483 = vrot.slane %v2346, 5
      %v2484 = vsel %vm2472, %v2482, %v2483
      %v2485 = vrot.slane %v2347, 5
      %v2486 = vrot.slane %v2485, 4
      %v2487 = vrot.slane %v2348, 5
      %v2488 = vsel %vm2472, %v2486, %v2487
      %v2489 = vrot.slane %v2349, 5
      %v2490 = vrot.slane %v2489, 4
      %v2491 = vrot.slane %v2350, 5
      %v2492 = vsel %vm2472, %v2490, %v2491
      %v2493 = vrot.slane %v2351, 5
      %v2494 = vrot.slane %v2493, 4
      %v2495 = vrot.slane %v2352, 5
      %v2496 = vsel %vm2472, %v2494, %v2495
      %v2497 = vrot.slane %v2353, 5
      %v2498 = vrot.slane %v2497, 4
      %v2499 = vrot.slane %v2354, 5
      %v2500 = vsel %vm2472, %v2498, %v2499
      %v2501 = vrot.slane %v2355, 5
      %v2502 = vrot.slane %v2501, 4
      %v2503 = vrot.slane %v2356, 5
      %v2504 = vsel %vm2472, %v2502, %v2503
      %v2506 = vunpack.c.l.b16 %v2317
      %v2507 = vunpack.c.h.b16 %v2317
      %v2508 = vpack.c.b16 %v2506, %v2506
      %v2509 = vpack.c.b16 %v2507, %v2507
      %v2511 = vshrl.u32 %v2508, 16
      %v2513 = vrot.slane %v2511, 4
      %v2514 = vshll.u32 %v2508, 16
      %v2516 = vrot.slane %v2514, 5
      %v2517 = vor.u32 %v2513, %v2516
      %v2518 = vrot.slane %v2517, 4
      %v2520 = vshll.u32 %v2509, 16
      %v2522 = vrot.slane %v2520, 5
      %v2523 = vsel %vm2358, %v2518, %v2522
      %v2524 = vrot.slane %v2508, 5
      %v2525 = vrot.slane %v2524, 4
      %v2526 = vrot.slane %v2509, 5
      %v2527 = vsel %vm2472, %v2525, %v2526
      %v2528 = vpack.c.b16 %v2327, %v2325
      %v2529 = vpack.c.b16 %v2331, %v2329
      %v2530 = vpack.c.b16 %v2335, %v2333
      %v2531 = vpack.c.b16 %v2339, %v2337
      %v2532 = vunpack.c.l.b16 %v2372
      %v2533 = vunpack.c.l.b16 %v2386
      %v2534 = vunpack.c.l.b16 %v2400
      %v2535 = vunpack.c.l.b16 %v2414
      %v2536 = vunpack.c.l.b16 %v2428
      %v2537 = vunpack.c.l.b16 %v2442
      %v2538 = vunpack.c.l.b16 %v2456
      %v2539 = vunpack.c.l.b16 %v2470
      %v2540 = vpack.c.b16 %v2533, %v2532
      %v2541 = vpack.c.b16 %v2535, %v2534
      %v2542 = vpack.c.b16 %v2537, %v2536
      %v2543 = vpack.c.b16 %v2539, %v2538
      %2544 = vrot.lane.b32.xlu0 %v2540, 32
      %v2545 = vpop.permute.xlu0 %2544
      %2546 = vrot.lane.b32.xlu0 %v2541, 32
      %v2547 = vpop.permute.xlu0 %2546
      %2548 = vrot.lane.b32.xlu0 %v2542, 32
      %v2549 = vpop.permute.xlu0 %2548
      %2550 = vrot.lane.b32.xlu0 %v2543, 32
      %v2551 = vpop.permute.xlu0 %2550
      %v2552 = vunpack.c.l.b16 %v2476
      %v2553 = vunpack.c.l.b16 %v2480
      %v2554 = vunpack.c.l.b16 %v2484
      %v2555 = vunpack.c.l.b16 %v2488
      %v2556 = vunpack.c.l.b16 %v2492
      %v2557 = vunpack.c.l.b16 %v2496
      %v2558 = vunpack.c.l.b16 %v2500
      %v2559 = vunpack.c.l.b16 %v2504
      %v2560 = vpack.c.b16 %v2553, %v2552
      %v2561 = vpack.c.b16 %v2555, %v2554
      %v2562 = vpack.c.b16 %v2557, %v2556
      %v2563 = vpack.c.b16 %v2559, %v2558
      %2564 = vrot.lane.b32.xlu0 %v2560, 64
      %v2565 = vpop.permute.xlu0 %2564
      %2566 = vrot.lane.b32.xlu0 %v2561, 64
      %v2567 = vpop.permute.xlu0 %2566
      %2568 = vrot.lane.b32.xlu0 %v2562, 64
      %v2569 = vpop.permute.xlu0 %2568
      %2570 = vrot.lane.b32.xlu0 %v2563, 64
      %v2571 = vpop.permute.xlu0 %2570
      %v2572 = vpack.c.b16 %v2329, %v2327
      %v2573 = vpack.c.b16 %v2333, %v2331
      %v2574 = vpack.c.b16 %v2337, %v2335
      %v2575 = vpack.c.b16 %v2506, %v2339
      %2576 = vrot.lane.b32.xlu0 %v2572, 96
      %v2577 = vpop.permute.xlu0 %2576
      %2578 = vrot.lane.b32.xlu0 %v2573, 96
      %v2579 = vpop.permute.xlu0 %2578
      %2580 = vrot.lane.b32.xlu0 %v2574, 96
      %v2581 = vpop.permute.xlu0 %2580
      %2582 = vrot.lane.b32.xlu0 %v2575, 96
      %v2583 = vpop.permute.xlu0 %2582
      %v2584 = vunpack.c.l.b16 %v2523
      %v2585 = vpack.c.b16 %v2534, %v2533
      %v2586 = vpack.c.b16 %v2536, %v2535
      %v2587 = vpack.c.b16 %v2538, %v2537
      %v2588 = vpack.c.b16 %v2584, %v2539
      %v2589 = vunpack.c.l.b16 %v2527
      %v2590 = vpack.c.b16 %v2554, %v2553
      %v2591 = vpack.c.b16 %v2556, %v2555
      %v2592 = vpack.c.b16 %v2558, %v2557
      %v2593 = vpack.c.b16 %v2589, %v2559
      %2594 = vrot.lane.b32.xlu0 %v2590, 32
      %v2595 = vpop.permute.xlu0 %2594
      %2596 = vrot.lane.b32.xlu0 %v2591, 32
      %v2597 = vpop.permute.xlu0 %2596
      %2598 = vrot.lane.b32.xlu0 %v2592, 32
      %v2599 = vpop.permute.xlu0 %2598
      %2600 = vrot.lane.b32.xlu0 %v2593, 32
      %v2601 = vpop.permute.xlu0 %2600
      %v2602 = vpack.c.b16 %v2325, %v2506
      %2603 = vrot.lane.b32.xlu0 %v2529, 64
      %v2604 = vpop.permute.xlu0 %2603
      %2605 = vrot.lane.b32.xlu0 %v2530, 64
      %v2606 = vpop.permute.xlu0 %2605
      %2607 = vrot.lane.b32.xlu0 %v2531, 64
      %v2608 = vpop.permute.xlu0 %2607
      %2609 = vrot.lane.b32.xlu0 %v2602, 64
      %v2610 = vpop.permute.xlu0 %2609
      %v2611 = vpack.c.b16 %v2532, %v2584
      %2612 = vrot.lane.b32.xlu0 %v2541, 96
      %v2613 = vpop.permute.xlu0 %2612
      %2614 = vrot.lane.b32.xlu0 %v2542, 96
      %v2615 = vpop.permute.xlu0 %2614
      %2616 = vrot.lane.b32.xlu0 %v2543, 96
      %v2617 = vpop.permute.xlu0 %2616
      %2618 = vrot.lane.b32.xlu0 %v2611, 96
      %v2619 = vpop.permute.xlu0 %2618
      %v2620 = vpack.c.b16 %v2552, %v2589
      %v2623 = vsel %vm1714, %v2528, %v2545
      %v2626 = vsel %vm1714, %v2529, %v2547
      %v2629 = vsel %vm1714, %v2530, %v2549
      %v2632 = vsel %vm1714, %v2531, %v2551
      %v2634 = vsel %vm1252, %v2623, %v2565
      %v2636 = vsel %vm1252, %v2626, %v2567
      %v2638 = vsel %vm1252, %v2629, %v2569
      %v2640 = vsel %vm1252, %v2632, %v2571
      %v2642 = vsel %vm1717, %v2634, %v2577
      %v2645 = vsel %vm1717, %v2636, %v2579
      %v2648 = vsel %vm1717, %v2638, %v2581
      %v2651 = vsel %vm1717, %v2640, %v2583
      %v2655 = vsel %vm1714, %v2585, %v2595
      %v2658 = vsel %vm1714, %v2586, %v2597
      %v2661 = vsel %vm1714, %v2587, %v2599
      %v2664 = vsel %vm1714, %v2588, %v2601
      %v2666 = vsel %vm1252, %v2655, %v2604
      %v2668 = vsel %vm1252, %v2658, %v2606
      %v2670 = vsel %vm1252, %v2661, %v2608
      %v2672 = vsel %vm1252, %v2664, %v2610
      %v2674 = vsel %vm1717, %v2666, %v2613
      %v2677 = vsel %vm1717, %v2668, %v2615
      %v2680 = vsel %vm1717, %v2670, %v2617
      %v2683 = vsel %vm1717, %v2672, %v2619
      %v2685 = vld [vmem:[%s3] sm:$0xf]
      %v2686 = vld [vmem:[%s3 + $0x4] sm:$0xf]
      %v2687 = vld [vmem:[%s3 + $0x8] sm:$0xf]
      %v2688 = vld [vmem:[%s3 + $0xc] sm:$0xf]
      %v2689 = vld [vmem:[%s3 + $0x10] sm:$0xf]
      %v2690 = vld [vmem:[%s3 + $0x14] sm:$0xf]
      %v2691 = vld [vmem:[%s3 + $0x18] sm:$0xf]
      %v2692 = vld [vmem:[%s3 + $0x1c] sm:$0xf]
      %v2693 = vld [vmem:[%s3 + $0x20] sm:$0xf]
      %v2694 = vld [vmem:[%s3 + $0x24] sm:$0xf]
      %v2695 = vld [vmem:[%s3 + $0x28] sm:$0xf]
      %v2696 = vld [vmem:[%s3 + $0x2c] sm:$0xf]
      %v2697 = vld [vmem:[%s3 + $0x30] sm:$0xf]
      %v2698 = vld [vmem:[%s3 + $0x34] sm:$0xf]
      %v2699 = vld [vmem:[%s3 + $0x38] sm:$0xf]
      %v2700 = vld [vmem:[%s3 + $0x3c] sm:$0xf]
      %v2701 = vld [vmem:[%s3 + $0x40] sm:$0xf]
      %v2702 = vld [vmem:[%s3 + $0x44] sm:$0xf]
      %v2703 = vld [vmem:[%s3 + $0x48] sm:$0xf]
      %v2704 = vld [vmem:[%s3 + $0x4c] sm:$0xf]
      %v2705 = vld [vmem:[%s3 + $0x50] sm:$0xf]
      %v2706 = vld [vmem:[%s3 + $0x54] sm:$0xf]
      %v2707 = vld [vmem:[%s3 + $0x58] sm:$0xf]
      %v2708 = vld [vmem:[%s3 + $0x5c] sm:$0xf]
      %v2709 = vld [vmem:[%s3 + $0x60] sm:$0xf]
      %v2710 = vld [vmem:[%s3 + $0x64] sm:$0xf]
      %v2711 = vld [vmem:[%s3 + $0x68] sm:$0xf]
      %v2712 = vld [vmem:[%s3 + $0x6c] sm:$0xf]
      %v2713 = vld [vmem:[%s3 + $0x70] sm:$0xf]
      %v2714 = vld [vmem:[%s3 + $0x74] sm:$0xf]
      %v2715 = vld [vmem:[%s3 + $0x78] sm:$0xf]
      %v2716 = vld [vmem:[%s3 + $0x7c] sm:$0xf]
      %v2717 = vld [vmem:[%s3 + $0x80] sm:$0xf]
      %v2718 = vld [vmem:[%s3 + $0x84] sm:$0xf]
      %v2719 = vld [vmem:[%s3 + $0x88] sm:$0xf]
      %v2720 = vld [vmem:[%s3 + $0x8c] sm:$0xf]
      %v2757 = vunpack.c.l.b16 %v2685
      %v2758 = vunpack.c.l.b16 %v2686
      %v2759 = vunpack.c.l.b16 %v2687
      %v2760 = vunpack.c.l.b16 %v2688
      %v2761 = vunpack.c.l.b16 %v2689
      %v2762 = vunpack.c.l.b16 %v2690
      %v2763 = vunpack.c.l.b16 %v2691
      %v2764 = vunpack.c.l.b16 %v2692
      %v2765 = vunpack.c.l.b16 %v2693
      %v2766 = vunpack.c.l.b16 %v2694
      %v2767 = vunpack.c.l.b16 %v2695
      %v2768 = vunpack.c.l.b16 %v2696
      %v2769 = vunpack.c.l.b16 %v2697
      %v2770 = vunpack.c.l.b16 %v2698
      %v2771 = vunpack.c.l.b16 %v2699
      %v2772 = vunpack.c.l.b16 %v2700
      %v2773 = vunpack.c.l.b16 %v2701
      %v2774 = vunpack.c.l.b16 %v2702
      %v2775 = vunpack.c.l.b16 %v2703
      %v2776 = vunpack.c.l.b16 %v2704
      %v2777 = vunpack.c.l.b16 %v2705
      %v2778 = vunpack.c.l.b16 %v2706
      %v2779 = vunpack.c.l.b16 %v2707
      %v2780 = vunpack.c.l.b16 %v2708
      %v2781 = vunpack.c.l.b16 %v2709
      %v2782 = vunpack.c.l.b16 %v2710
      %v2783 = vunpack.c.l.b16 %v2711
      %v2784 = vunpack.c.l.b16 %v2712
      %v2785 = vunpack.c.l.b16 %v2713
      %v2786 = vunpack.c.l.b16 %v2714
      %v2787 = vunpack.c.l.b16 %v2715
      %v2788 = vunpack.c.l.b16 %v2716
      %v2789 = vunpack.c.l.b16 %v2717
      %v2790 = vunpack.c.l.b16 %v2718
      %v2791 = vunpack.c.l.b16 %v2719
      %v2792 = vunpack.c.l.b16 %v2720
      %v2793 = vpack.c.b16 %v2758, %v2757
      %v2794 = vpack.c.b16 %v2760, %v2759
      %v2795 = vpack.c.b16 %v2762, %v2761
      %v2796 = vpack.c.b16 %v2764, %v2763
      %v2797 = vpack.c.b16 %v2766, %v2765
      %v2798 = vpack.c.b16 %v2768, %v2767
      %v2799 = vpack.c.b16 %v2770, %v2769
      %v2800 = vpack.c.b16 %v2772, %v2771
      %v2801 = vpack.c.b16 %v2774, %v2773
      %v2802 = vpack.c.b16 %v2776, %v2775
      %v2803 = vpack.c.b16 %v2778, %v2777
      %v2804 = vpack.c.b16 %v2780, %v2779
      %v2805 = vpack.c.b16 %v2782, %v2781
      %v2806 = vpack.c.b16 %v2784, %v2783
      %v2807 = vpack.c.b16 %v2786, %v2785
      %v2808 = vpack.c.b16 %v2788, %v2787
      %v2809 = vpack.c.b16 %v2790, %v2789
      %v2810 = vpack.c.b16 %v2792, %v2791
      %v2830 = vsel %vm1714, %v2561, 0
      %v2833 = vsel %vm1714, %v2562, 0
      %v2836 = vsel %vm1714, %v2563, 0
      %v2839 = vsel %vm1714, %v2620, 0
      %2841 = vmatprep.subr.bf16.mxu0 0
      %2842 = vmatpush1.bf16.msra.mxu0 %v2793
      %2843 = vmatprep.subr.bf16.mxu0 0
      %2844 = vmatpush1.bf16.msra.mxu0 %v2794
      %2845 = vmatprep.subr.bf16.mxu0 0
      %2846 = vmatpush1.bf16.msra.mxu0 %v2795
      %2847 = vmatprep.subr.bf16.mxu0 0
      %2848 = vmatpush1.bf16.msra.mxu0 %v2796
      %2849 = vmatprep.subr.bf16.mxu0 0
      %2850 = vmatpush1.bf16.msra.mxu0 %v2797
      %2851 = vmatprep.subr.bf16.mxu0 0
      %2852 = vmatpush1.bf16.msra.mxu0 %v2798
      %2853 = vmatprep.subr.bf16.mxu0 0
      %2854 = vmatpush1.bf16.msra.mxu0 %v2799
      %2855 = vmatprep.subr.bf16.mxu0 0
      %2856 = vmatpush1.bf16.msra.mxu0 %v2800
      %2857 = vmatprep.subr.bf16.mxu0 0
      %2858 = vmatpush1.bf16.msra.mxu0 %v2801
      %2859 = vmatprep.subr.bf16.mxu0 0
      %2860 = vmatpush1.bf16.msra.mxu0 %v2802
      %2861 = vmatprep.subr.bf16.mxu0 0
      %2862 = vmatpush1.bf16.msra.mxu0 %v2803
      %2863 = vmatprep.subr.bf16.mxu0 0
      %2864 = vmatpush1.bf16.msra.mxu0 %v2804
      %2865 = vmatprep.subr.bf16.mxu0 0
      %2866 = vmatpush1.bf16.msra.mxu0 %v2805
      %2867 = vmatprep.subr.bf16.mxu0 0
      %2868 = vmatpush1.bf16.msra.mxu0 %v2806
      %2869 = vmatprep.subr.bf16.mxu0 0
      %2870 = vmatpush1.bf16.msra.mxu0 %v2807
      %2871 = vmatprep.subr.bf16.mxu0 0
      %2872 = vmatpush1.bf16.msra.mxu0 %v2808
      %2873 = vmatprep.mubr.bf16.mxu0 %v2674
      %2874 = vmatmul.mubr.bf16.gmra.mrb[0].mxu0 %v2642
      %v2875 = vpop.f32.mrb[0].mxu0
      %v2876 = vadd.f32 0.0, %v2875
      %v2877 = vpop.f32.mrb[0].mxu0
      %v2878 = vpop.f32.mrb[0].mxu0
      %v2879 = vadd.f32 0.0, %v2878
      %v2880 = vpop.f32.mrb[0].mxu0
      %2881 = vmatprep.mubr.bf16.mxu0 %v2677
      %2882 = vmatmul.mubr.bf16.gmra.mrb[0].mxu0 %v2645
      %v2883 = vpop.f32.mrb[0].mxu0
      %v2884 = vadd.f32 0.0, %v2883
      %v2885 = vpop.f32.mrb[0].mxu0
      %v2886 = vpop.f32.mrb[0].mxu0
      %v2887 = vadd.f32 0.0, %v2886
      %v2888 = vpop.f32.mrb[0].mxu0
      %2889 = vmatprep.mubr.bf16.mxu0 %v2680
      %2890 = vmatmul.mubr.bf16.gmra.mrb[0].mxu0 %v2648
      %v2891 = vpop.f32.mrb[0].mxu0
      %v2892 = vadd.f32 0.0, %v2891
      %v2893 = vpop.f32.mrb[0].mxu0
      %v2894 = vpop.f32.mrb[0].mxu0
      %v2895 = vadd.f32 0.0, %v2894
      %v2896 = vpop.f32.mrb[0].mxu0
      %2897 = vmatprep.mubr.bf16.mxu0 %v2683
      %2898 = vmatmul.mubr.bf16.gmra.mrb[0].mxu0 %v2651
      %v2899 = vpop.f32.mrb[0].mxu0
      %v2900 = vadd.f32 0.0, %v2899
      %v2901 = vpop.f32.mrb[0].mxu0
      %v2902 = vpop.f32.mrb[0].mxu0
      %v2903 = vadd.f32 0.0, %v2902
      %v2904 = vpop.f32.mrb[0].mxu0
      %2905 = vdwg.mxu0
      %2906 = vmatprep.subr.bf16.mxu0 0
      %2907 = vmatpush1.bf16.msra.mxu0 %v2809
      %2908 = vmatprep.subr.bf16.mxu0 0
      %2909 = vmatpush1.bf16.msra.mxu0 %v2810
      %2910 = vmatprep.subr.bf16.mxu0 0
      %2911 = vmatpush1.bf16.msra.mxu0 0
      %2912 = vmatprep.subr.bf16.mxu0 0
      %2913 = vmatpush1.bf16.msra.mxu0 0
      %2914 = vmatprep.subr.bf16.mxu0 0
      %2915 = vmatpush1.bf16.msra.mxu0 0
      %2916 = vmatprep.subr.bf16.mxu0 0
      %2917 = vmatpush1.bf16.msra.mxu0 0
      %2918 = vmatprep.subr.bf16.mxu0 0
      %2919 = vmatpush1.bf16.msra.mxu0 0
      %2920 = vmatprep.subr.bf16.mxu0 0
      %2921 = vmatpush1.bf16.msra.mxu0 0
      %2922 = vmatprep.subr.bf16.mxu0 0
      %2923 = vmatpush1.bf16.msra.mxu0 0
      %2924 = vmatprep.subr.bf16.mxu0 0
      %2925 = vmatpush1.bf16.msra.mxu0 0
      %2926 = vmatprep.subr.bf16.mxu0 0
      %2927 = vmatpush1.bf16.msra.mxu0 0
      %2928 = vmatprep.subr.bf16.mxu0 0
      %2929 = vmatpush1.bf16.msra.mxu0 0
      %2930 = vmatprep.subr.bf16.mxu0 0
      %2931 = vmatpush1.bf16.msra.mxu0 0
      %2932 = vmatprep.subr.bf16.mxu0 0
      %2933 = vmatpush1.bf16.msra.mxu0 0
      %2934 = vmatprep.subr.bf16.mxu0 0
      %2935 = vmatpush1.bf16.msra.mxu0 0
      %2936 = vmatprep.subr.bf16.mxu0 0
      %2937 = vmatpush1.bf16.msra.mxu0 0
      %2938 = vmatprep.mubr.bf16.mxu0 0
      %2939 = vmatmul.mubr.bf16.gmra.mrb[0].mxu0 %v2830
      %v2940 = vpop.f32.mrb[0].mxu0
      %v2941 = vadd.f32 %v2876, %v2940
      %v2942 = vpop.f32.mrb[0].mxu0
      %v2943 = vpop.f32.mrb[0].mxu0
      %v2944 = vadd.f32 %v2879, %v2943
      %v2945 = vpop.f32.mrb[0].mxu0
      %2946 = vmatprep.mubr.bf16.mxu0 0
      %2947 = vmatmul.mubr.bf16.gmra.mrb[0].mxu0 %v2833
      %v2948 = vpop.f32.mrb[0].mxu0
      %v2949 = vadd.f32 %v2884, %v2948
      %v2950 = vpop.f32.mrb[0].mxu0
      %v2951 = vpop.f32.mrb[0].mxu0
      %v2952 = vadd.f32 %v2887, %v2951
      %v2953 = vpop.f32.mrb[0].mxu0
      %2954 = vmatprep.mubr.bf16.mxu0 0
      %2955 = vmatmul.mubr.bf16.gmra.mrb[0].mxu0 %v2836
      %v2956 = vpop.f32.mrb[0].mxu0
      %v2957 = vadd.f32 %v2892, %v2956
      %v2958 = vpop.f32.mrb[0].mxu0
      %v2959 = vpop.f32.mrb[0].mxu0
      %v2960 = vadd.f32 %v2895, %v2959
      %v2961 = vpop.f32.mrb[0].mxu0
      %2962 = vmatprep.mubr.bf16.mxu0 0
      %2963 = vmatmul.mubr.bf16.gmra.mrb[0].mxu0 %v2839
      %v2964 = vpop.f32.mrb[0].mxu0
      %v2965 = vadd.f32 %v2900, %v2964
      %v2966 = vpop.f32.mrb[0].mxu0
      %v2967 = vpop.f32.mrb[0].mxu0
      %v2968 = vadd.f32 %v2903, %v2967
      %v2969 = vpop.f32.mrb[0].mxu0
      %2970 = vdwg.mxu0
      %v2971 = vsel %vm1252, %v2941, 0.0
      %v2972 = vsel %vm1252, %v2944, 0.0
      %v2973 = vadd.f32 %v2971, %v2972
      %v2974 = vsel %vm1252, %v2949, 0.0
      %v2975 = vadd.f32 %v2973, %v2974
      %v2976 = vsel %vm1252, %v2952, 0.0
      %v2977 = vadd.f32 %v2975, %v2976
      %v2978 = vsel %vm1252, %v2957, 0.0
      %v2979 = vadd.f32 %v2977, %v2978
      %v2980 = vsel %vm1252, %v2960, 0.0
      %v2981 = vadd.f32 %v2979, %v2980
      %v2982 = vsel %vm1252, %v2965, 0.0
      %v2983 = vadd.f32 %v2981, %v2982
      %v2984 = vsel %vm1252, %v2968, 0.0
      %v2985 = vadd.f32 %v2983, %v2984
      %v2986 = vrot.slane %v2985, 4
      %v2987 = vadd.f32 %v2985, %v2986
      %v2988 = vrot.slane %v2987, 2
      %v2989 = vadd.f32 %v2987, %v2988
      %v2990 = vrot.slane %v2989, 1
      %v2991 = vadd.f32 %v2989, %v2990
      %2993 = vrot.lane.b32.xlu0 %v2991, 112
      %v2994 = vpop.permute.xlu0 %2993
      %v2996 = vadd.f32 %v2991, %v2994
      %2997 = vrot.lane.b32.xlu0 %v2991, 96
      %v2998 = vpop.permute.xlu0 %2997
      %v3000 = vadd.f32 %v2996, %v2998
      %3001 = vrot.lane.b32.xlu0 %v2991, 80
      %v3002 = vpop.permute.xlu0 %3001
      %v3004 = vadd.f32 %v3000, %v3002
      %v3005 = vmul.f32 %v3004, 0.00390625
      %3007 = vrot.lane.b32.xlu0 %v3005, 16
      %v3008 = vpop.permute.xlu0 %3007
      %3010 = vrot.lane.b32.xlu0 %v3005, 32
      %v3011 = vpop.permute.xlu0 %3010
      %3013 = vrot.lane.b32.xlu0 %v3005, 48
      %v3014 = vpop.permute.xlu0 %3013
      %vm3016 = vcmask 130048
      %v3017 = vsel %vm3016, %v3005, %v3008
      %v3018 = vsel %vm1714, %v3017, %v3011
      %v3019 = vsel %vm392, %v3018, %v3014
      %v3020 = vlaneseq
      %v3021 = vshrl.u32 %v3020, 7
      %v3022 = vsub.s32 0, %v3021
      %v3023 = vrot.slane %v3019, %v3022
      %v3024 = vsub.f32 %v2941, %v3023
      %v3025 = vsub.f32 %v2944, %v3023
      %v3026 = vsub.f32 %v2949, %v3023
      %v3027 = vsub.f32 %v2952, %v3023
      %v3028 = vsub.f32 %v2957, %v3023
      %v3029 = vsub.f32 %v2960, %v3023
      %v3030 = vsub.f32 %v2965, %v3023
      %v3031 = vsub.f32 %v2968, %v3023
      %v3032 = vmul.f32 %v3024, %v3024
      %v3033 = vmul.f32 %v3025, %v3025
      %v3034 = vmul.f32 %v3026, %v3026
      %v3035 = vmul.f32 %v3027, %v3027
      %v3036 = vmul.f32 %v3028, %v3028
      %v3037 = vmul.f32 %v3029, %v3029
      %v3038 = vmul.f32 %v3030, %v3030
      %v3039 = vmul.f32 %v3031, %v3031
      %v3040 = vsel %vm1252, %v3032, 0.0
      %v3041 = vsel %vm1252, %v3033, 0.0
      %v3042 = vadd.f32 %v3040, %v3041
      %v3043 = vsel %vm1252, %v3034, 0.0
      %v3044 = vadd.f32 %v3042, %v3043
      %v3045 = vsel %vm1252, %v3035, 0.0
      %v3046 = vadd.f32 %v3044, %v3045
      %v3047 = vsel %vm1252, %v3036, 0.0
      %v3048 = vadd.f32 %v3046, %v3047
      %v3049 = vsel %vm1252, %v3037, 0.0
      %v3050 = vadd.f32 %v3048, %v3049
      %v3051 = vsel %vm1252, %v3038, 0.0
      %v3052 = vadd.f32 %v3050, %v3051
      %v3053 = vsel %vm1252, %v3039, 0.0
      %v3054 = vadd.f32 %v3052, %v3053
      %v3055 = vrot.slane %v3054, 4
      %v3056 = vadd.f32 %v3054, %v3055
      %v3057 = vrot.slane %v3056, 2
      %v3058 = vadd.f32 %v3056, %v3057
      %v3059 = vrot.slane %v3058, 1
      %v3060 = vadd.f32 %v3058, %v3059
      %3062 = vrot.lane.b32.xlu0 %v3060, 112
      %v3063 = vpop.permute.xlu0 %3062
      %v3065 = vadd.f32 %v3060, %v3063
      %3066 = vrot.lane.b32.xlu0 %v3060, 96
      %v3067 = vpop.permute.xlu0 %3066
      %v3069 = vadd.f32 %v3065, %v3067
      %3070 = vrot.lane.b32.xlu0 %v3060, 80
      %v3071 = vpop.permute.xlu0 %3070
      %v3073 = vadd.f32 %v3069, %v3071
      %v3074 = vmul.f32 %v3073, 0.00390625
      %v3075 = vadd.f32 %v3074, 1e-05
      %v3076 = vrsqrt.pop %v3075
      %3078 = vrot.lane.b32.xlu0 %v3076, 16
      %v3079 = vpop.permute.xlu0 %3078
      %3081 = vrot.lane.b32.xlu0 %v3076, 32
      %v3082 = vpop.permute.xlu0 %3081
      %3084 = vrot.lane.b32.xlu0 %v3076, 48
      %v3085 = vpop.permute.xlu0 %3084
      %v3087 = vsel %vm3016, %v3076, %v3079
      %v3088 = vsel %vm1714, %v3087, %v3082
      %v3089 = vsel %vm392, %v3088, %v3085
      %v3090 = vlaneseq
      %v3091 = vshrl.u32 %v3090, 7
      %v3092 = vsub.s32 0, %v3091
      %v3093 = vrot.slane %v3089, %v3092
      %v3094 = vmul.f32 %v3024, %v3093
      %v3095 = vmul.f32 %v3025, %v3093
      %v3096 = vmul.f32 %v3026, %v3093
      %v3097 = vmul.f32 %v3027, %v3093
      %v3098 = vmul.f32 %v3028, %v3093
      %v3099 = vmul.f32 %v3029, %v3093
      %v3100 = vmul.f32 %v3030, %v3093
      %v3101 = vmul.f32 %v3031, %v3093
      %v3102 = vmax.f32 %v3094, 0.0
      %v3103 = vmax.f32 %v3095, 0.0
      %v3104 = vmax.f32 %v3096, 0.0
      %v3105 = vmax.f32 %v3097, 0.0
      %v3106 = vmax.f32 %v3098, 0.0
      %v3107 = vmax.f32 %v3099, 0.0
      %v3108 = vmax.f32 %v3100, 0.0
      %v3109 = vmax.f32 %v3101, 0.0
      %v3110 = vpack.c.bf16 %v3103, %v3102
      %v3111 = vpack.c.bf16 %v3105, %v3104
      %v3112 = vpack.c.bf16 %v3107, %v3106
      %v3113 = vpack.c.bf16 %v3109, %v3108
      %v3118 = vcombine.high %v3110, %v3110
      %v3120 = vunpack.c.l.s4 1966171168
      %v3121 = vunpack.c.0.s8 %v3120
      %v3122 = vlaneseq
      %v3123 = vshrl.u32 %v3122, 7
      %v3124 = vsub.s32 %v3121, %v3123
      %v3125 = vrot.slane %v3110, %v3124
      %v3127 = vunpack.c.l.s4 1966171168
      %v3128 = vunpack.c.0.s8 %v3127
      %v3129 = vlaneseq
      %v3130 = vshrl.u32 %v3129, 7
      %v3131 = vsub.s32 %v3128, %v3130
      %v3132 = vrot.slane %v3118, %v3131
      %v3133 = vcombine.high %v3125, %v3125
      %v3134 = vcombine.high %v3132, %v3132
      %v3136 = vunpack.c.l.s4 1966171168
      %v3137 = vunpack.c.0.s8 %v3136
      %v3138 = vlaneseq
      %v3139 = vshrl.u32 %v3138, 7
      %v3140 = vsub.s32 %v3137, %v3139
      %v3141 = vrot.slane %v3125, %v3140
      %v3143 = vunpack.c.l.s4 1966171168
      %v3144 = vunpack.c.0.s8 %v3143
      %v3145 = vlaneseq
      %v3146 = vshrl.u32 %v3145, 7
      %v3147 = vsub.s32 %v3144, %v3146
      %v3148 = vrot.slane %v3132, %v3147
      %v3150 = vunpack.c.l.s4 1966171168
      %v3151 = vunpack.c.0.s8 %v3150
      %v3152 = vlaneseq
      %v3153 = vshrl.u32 %v3152, 7
      %v3154 = vsub.s32 %v3151, %v3153
      %v3155 = vrot.slane %v3133, %v3154
      %v3157 = vunpack.c.l.s4 1966171168
      %v3158 = vunpack.c.0.s8 %v3157
      %v3159 = vlaneseq
      %v3160 = vshrl.u32 %v3159, 7
      %v3161 = vsub.s32 %v3158, %v3160
      %v3162 = vrot.slane %v3134, %v3161
      %v3163 = vcombine.high %v3141, %v3141
      %v3164 = vcombine.high %v3148, %v3148
      %v3165 = vcombine.high %v3155, %v3155
      %v3166 = vcombine.high %v3162, %v3162
      %v3167 = vcombine.high %v3111, %v3111
      %v3169 = vunpack.c.l.s4 1966171168
      %v3170 = vunpack.c.0.s8 %v3169
      %v3171 = vlaneseq
      %v3172 = vshrl.u32 %v3171, 7
      %v3173 = vsub.s32 %v3170, %v3172
      %v3174 = vrot.slane %v3111, %v3173
      %v3176 = vunpack.c.l.s4 1966171168
      %v3177 = vunpack.c.0.s8 %v3176
      %v3178 = vlaneseq
      %v3179 = vshrl.u32 %v3178, 7
      %v3180 = vsub.s32 %v3177, %v3179
      %v3181 = vrot.slane %v3167, %v3180
      %v3182 = vcombine.high %v3174, %v3174
      %v3183 = vcombine.high %v3181, %v3181
      %v3185 = vunpack.c.l.s4 1966171168
      %v3186 = vunpack.c.0.s8 %v3185
      %v3187 = vlaneseq
      %v3188 = vshrl.u32 %v3187, 7
      %v3189 = vsub.s32 %v3186, %v3188
      %v3190 = vrot.slane %v3174, %v3189
      %v3192 = vunpack.c.l.s4 1966171168
      %v3193 = vunpack.c.0.s8 %v3192
      %v3194 = vlaneseq
      %v3195 = vshrl.u32 %v3194, 7
      %v3196 = vsub.s32 %v3193, %v3195
      %v3197 = vrot.slane %v3181, %v3196
      %v3199 = vunpack.c.l.s4 1966171168
      %v3200 = vunpack.c.0.s8 %v3199
      %v3201 = vlaneseq
      %v3202 = vshrl.u32 %v3201, 7
      %v3203 = vsub.s32 %v3200, %v3202
      %v3204 = vrot.slane %v3182, %v3203
      %v3206 = vunpack.c.l.s4 1966171168
      %v3207 = vunpack.c.0.s8 %v3206
      %v3208 = vlaneseq
      %v3209 = vshrl.u32 %v3208, 7
      %v3210 = vsub.s32 %v3207, %v3209
      %v3211 = vrot.slane %v3183, %v3210
      %v3212 = vcombine.high %v3190, %v3190
      %v3213 = vcombine.high %v3197, %v3197
      %v3214 = vcombine.high %v3204, %v3204
      %v3215 = vcombine.high %v3211, %v3211
      %v3216 = vcombine.high %v3112, %v3112
      %v3218 = vunpack.c.l.s4 1966171168
      %v3219 = vunpack.c.0.s8 %v3218
      %v3220 = vlaneseq
      %v3221 = vshrl.u32 %v3220, 7
      %v3222 = vsub.s32 %v3219, %v3221
      %v3223 = vrot.slane %v3112, %v3222
      %v3225 = vunpack.c.l.s4 1966171168
      %v3226 = vunpack.c.0.s8 %v3225
      %v3227 = vlaneseq
      %v3228 = vshrl.u32 %v3227, 7
      %v3229 = vsub.s32 %v3226, %v3228
      %v3230 = vrot.slane %v3216, %v3229
      %v3231 = vcombine.high %v3223, %v3223
      %v3232 = vcombine.high %v3230, %v3230
      %v3234 = vunpack.c.l.s4 1966171168
      %v3235 = vunpack.c.0.s8 %v3234
      %v3236 = vlaneseq
      %v3237 = vshrl.u32 %v3236, 7
      %v3238 = vsub.s32 %v3235, %v3237
      %v3239 = vrot.slane %v3223, %v3238
      %v3241 = vunpack.c.l.s4 1966171168
      %v3242 = vunpack.c.0.s8 %v3241
      %v3243 = vlaneseq
      %v3244 = vshrl.u32 %v3243, 7
      %v3245 = vsub.s32 %v3242, %v3244
      %v3246 = vrot.slane %v3230, %v3245
      %v3248 = vunpack.c.l.s4 1966171168
      %v3249 = vunpack.c.0.s8 %v3248
      %v3250 = vlaneseq
      %v3251 = vshrl.u32 %v3250, 7
      %v3252 = vsub.s32 %v3249, %v3251
      %v3253 = vrot.slane %v3231, %v3252
      %v3255 = vunpack.c.l.s4 1966171168
      %v3256 = vunpack.c.0.s8 %v3255
      %v3257 = vlaneseq
      %v3258 = vshrl.u32 %v3257, 7
      %v3259 = vsub.s32 %v3256, %v3258
      %v3260 = vrot.slane %v3232, %v3259
      %v3261 = vcombine.high %v3239, %v3239
      %v3262 = vcombine.high %v3246, %v3246
      %v3263 = vcombine.high %v3253, %v3253
      %v3264 = vcombine.high %v3260, %v3260
      %v3265 = vcombine.high %v3113, %v3113
      %v3267 = vunpack.c.l.s4 1966171168
      %v3268 = vunpack.c.0.s8 %v3267
      %v3269 = vlaneseq
      %v3270 = vshrl.u32 %v3269, 7
      %v3271 = vsub.s32 %v3268, %v3270
      %v3272 = vrot.slane %v3113, %v3271
      %v3274 = vunpack.c.l.s4 1966171168
      %v3275 = vunpack.c.0.s8 %v3274
      %v3276 = vlaneseq
      %v3277 = vshrl.u32 %v3276, 7
      %v3278 = vsub.s32 %v3275, %v3277
      %v3279 = vrot.slane %v3265, %v3278
      %v3280 = vcombine.high %v3272, %v3272
      %v3281 = vcombine.high %v3279, %v3279
      %v3283 = vunpack.c.l.s4 1966171168
      %v3284 = vunpack.c.0.s8 %v3283
      %v3285 = vlaneseq
      %v3286 = vshrl.u32 %v3285, 7
      %v3287 = vsub.s32 %v3284, %v3286
      %v3288 = vrot.slane %v3272, %v3287
      %v3290 = vunpack.c.l.s4 1966171168
      %v3291 = vunpack.c.0.s8 %v3290
      %v3292 = vlaneseq
      %v3293 = vshrl.u32 %v3292, 7
      %v3294 = vsub.s32 %v3291, %v3293
      %v3295 = vrot.slane %v3279, %v3294
      %v3297 = vunpack.c.l.s4 1966171168
      %v3298 = vunpack.c.0.s8 %v3297
      %v3299 = vlaneseq
      %v3300 = vshrl.u32 %v3299, 7
      %v3301 = vsub.s32 %v3298, %v3300
      %v3302 = vrot.slane %v3280, %v3301
      %v3304 = vunpack.c.l.s4 1966171168
      %v3305 = vunpack.c.0.s8 %v3304
      %v3306 = vlaneseq
      %v3307 = vshrl.u32 %v3306, 7
      %v3308 = vsub.s32 %v3305, %v3307
      %v3309 = vrot.slane %v3281, %v3308
      %v3310 = vcombine.high %v3288, %v3288
      %v3311 = vcombine.high %v3295, %v3295
      %v3312 = vcombine.high %v3302, %v3302
      %v3313 = vcombine.high %v3309, %v3309
      %v3314 = vunpack.i.l.s16 %v3141
      %v3315 = vunpack.i.h.s16 %v3141
      %v3316 = vunpack.i.l.s16 %v3155
      %v3317 = vunpack.i.h.s16 %v3155
      %v3318 = vunpack.i.l.s16 %v3163
      %v3319 = vunpack.i.h.s16 %v3163
      %v3320 = vunpack.i.l.s16 %v3165
      %v3321 = vunpack.i.h.s16 %v3165
      %v3322 = vunpack.i.l.s16 %v3148
      %v3323 = vunpack.i.h.s16 %v3148
      %v3324 = vunpack.i.l.s16 %v3162
      %v3325 = vunpack.i.h.s16 %v3162
      %v3326 = vunpack.i.l.s16 %v3164
      %v3327 = vunpack.i.h.s16 %v3164
      %v3328 = vunpack.i.l.s16 %v3166
      %v3329 = vunpack.i.h.s16 %v3166
      %v3330 = vunpack.i.l.s16 %v3190
      %v3331 = vunpack.i.h.s16 %v3190
      %v3332 = vunpack.i.l.s16 %v3204
      %v3333 = vunpack.i.h.s16 %v3204
      %v3334 = vunpack.i.l.s16 %v3212
      %v3335 = vunpack.i.h.s16 %v3212
      %v3336 = vunpack.i.l.s16 %v3214
      %v3337 = vunpack.i.h.s16 %v3214
      %v3338 = vunpack.i.l.s16 %v3197
      %v3339 = vunpack.i.h.s16 %v3197
      %v3340 = vunpack.i.l.s16 %v3211
      %v3341 = vunpack.i.h.s16 %v3211
      %v3342 = vunpack.i.l.s16 %v3213
      %v3343 = vunpack.i.h.s16 %v3213
      %v3344 = vunpack.i.l.s16 %v3215
      %v3345 = vunpack.i.h.s16 %v3215
      %v3346 = vunpack.i.l.s16 %v3239
      %v3347 = vunpack.i.h.s16 %v3239
      %v3348 = vunpack.i.l.s16 %v3253
      %v3349 = vunpack.i.h.s16 %v3253
      %v3350 = vunpack.i.l.s16 %v3261
      %v3351 = vunpack.i.h.s16 %v3261
      %v3352 = vunpack.i.l.s16 %v3263
      %v3353 = vunpack.i.h.s16 %v3263
      %v3354 = vunpack.i.l.s16 %v3246
      %v3355 = vunpack.i.h.s16 %v3246
      %v3356 = vunpack.i.l.s16 %v3260
      %v3357 = vunpack.i.h.s16 %v3260
      %v3358 = vunpack.i.l.s16 %v3262
      %v3359 = vunpack.i.h.s16 %v3262
      %v3360 = vunpack.i.l.s16 %v3264
      %v3361 = vunpack.i.h.s16 %v3264
      %v3362 = vunpack.i.l.s16 %v3288
      %v3363 = vunpack.i.h.s16 %v3288
      %v3364 = vunpack.i.l.s16 %v3302
      %v3365 = vunpack.i.h.s16 %v3302
      %v3366 = vunpack.i.l.s16 %v3310
      %v3367 = vunpack.i.h.s16 %v3310
      %v3368 = vunpack.i.l.s16 %v3312
      %v3369 = vunpack.i.h.s16 %v3312
      %v3370 = vunpack.i.l.s16 %v3295
      %v3371 = vunpack.i.h.s16 %v3295
      %v3372 = vunpack.i.l.s16 %v3309
      %v3373 = vunpack.i.h.s16 %v3309
      %v3374 = vunpack.i.l.s16 %v3311
      %v3375 = vunpack.i.h.s16 %v3311
      %v3376 = vunpack.i.l.s16 %v3313
      %v3377 = vunpack.i.h.s16 %v3313
      %v3378 = vpack.i.b16 %v3314, %v3314
      %v3379 = vpack.i.b16 %v3315, %v3315
      %v3380 = vpack.i.b16 %v3316, %v3316
      %v3381 = vpack.i.b16 %v3317, %v3317
      %v3382 = vpack.i.b16 %v3318, %v3318
      %v3383 = vpack.i.b16 %v3319, %v3319
      %v3384 = vpack.i.b16 %v3320, %v3320
      %v3385 = vpack.i.b16 %v3321, %v3321
      %v3386 = vpack.i.b16 %v3322, %v3322
      %v3387 = vpack.i.b16 %v3323, %v3323
      %v3388 = vpack.i.b16 %v3324, %v3324
      %v3389 = vpack.i.b16 %v3325, %v3325
      %v3390 = vpack.i.b16 %v3326, %v3326
      %v3391 = vpack.i.b16 %v3327, %v3327
      %v3392 = vpack.i.b16 %v3328, %v3328
      %v3393 = vpack.i.b16 %v3329, %v3329
      %v3394 = vpack.i.b16 %v3330, %v3330
      %v3395 = vpack.i.b16 %v3331, %v3331
      %v3396 = vpack.i.b16 %v3332, %v3332
      %v3397 = vpack.i.b16 %v3333, %v3333
      %v3398 = vpack.i.b16 %v3334, %v3334
      %v3399 = vpack.i.b16 %v3335, %v3335
      %v3400 = vpack.i.b16 %v3336, %v3336
      %v3401 = vpack.i.b16 %v3337, %v3337
      %v3402 = vpack.i.b16 %v3338, %v3338
      %v3403 = vpack.i.b16 %v3339, %v3339
      %v3404 = vpack.i.b16 %v3340, %v3340
      %v3405 = vpack.i.b16 %v3341, %v3341
      %v3406 = vpack.i.b16 %v3342, %v3342
      %v3407 = vpack.i.b16 %v3343, %v3343
      %v3408 = vpack.i.b16 %v3344, %v3344
      %v3409 = vpack.i.b16 %v3345, %v3345
      %v3410 = vpack.i.b16 %v3346, %v3346
      %v3411 = vpack.i.b16 %v3347, %v3347
      %v3412 = vpack.i.b16 %v3348, %v3348
      %v3413 = vpack.i.b16 %v3349, %v3349
      %v3414 = vpack.i.b16 %v3350, %v3350
      %v3415 = vpack.i.b16 %v3351, %v3351
      %v3416 = vpack.i.b16 %v3352, %v3352
      %v3417 = vpack.i.b16 %v3353, %v3353
      %v3418 = vpack.i.b16 %v3354, %v3354
      %v3419 = vpack.i.b16 %v3355, %v3355
      %v3420 = vpack.i.b16 %v3356, %v3356
      %v3421 = vpack.i.b16 %v3357, %v3357
      %v3422 = vpack.i.b16 %v3358, %v3358
      %v3423 = vpack.i.b16 %v3359, %v3359
      %v3424 = vpack.i.b16 %v3360, %v3360
      %v3425 = vpack.i.b16 %v3361, %v3361
      %v3426 = vpack.i.b16 %v3362, %v3362
      %v3427 = vpack.i.b16 %v3363, %v3363
      %v3428 = vpack.i.b16 %v3364, %v3364
      %v3429 = vpack.i.b16 %v3365, %v3365
      %v3430 = vpack.i.b16 %v3366, %v3366
      %v3431 = vpack.i.b16 %v3367, %v3367
      %v3432 = vpack.i.b16 %v3368, %v3368
      %v3433 = vpack.i.b16 %v3369, %v3369
      %v3434 = vpack.i.b16 %v3370, %v3370
      %v3435 = vpack.i.b16 %v3371, %v3371
      %v3436 = vpack.i.b16 %v3372, %v3372
      %v3437 = vpack.i.b16 %v3373, %v3373
      %v3438 = vpack.i.b16 %v3374, %v3374
      %v3439 = vpack.i.b16 %v3375, %v3375
      %v3440 = vpack.i.b16 %v3376, %v3376
      %v3441 = vpack.i.b16 %v3377, %v3377
      %v3442 = vlaneseq
      %v3443 = vshrl.u32 %v3442, 7
      %v3444 = vsub.s32 0, %v3443
      %v3445 = vrot.slane %v3378, %v3444
      %v3446 = vlaneseq
      %v3447 = vshrl.u32 %v3446, 7
      %v3448 = vsub.s32 0, %v3447
      %v3449 = vrot.slane %v3379, %v3448
      %v3450 = vlaneseq
      %v3451 = vshrl.u32 %v3450, 7
      %v3452 = vsub.s32 0, %v3451
      %v3453 = vrot.slane %v3380, %v3452
      %v3454 = vlaneseq
      %v3455 = vshrl.u32 %v3454, 7
      %v3456 = vsub.s32 0, %v3455
      %v3457 = vrot.slane %v3381, %v3456
      %v3458 = vlaneseq
      %v3459 = vshrl.u32 %v3458, 7
      %v3460 = vsub.s32 0, %v3459
      %v3461 = vrot.slane %v3382, %v3460
      %v3462 = vlaneseq
      %v3463 = vshrl.u32 %v3462, 7
      %v3464 = vsub.s32 0, %v3463
      %v3465 = vrot.slane %v3383, %v3464
      %v3466 = vlaneseq
      %v3467 = vshrl.u32 %v3466, 7
      %v3468 = vsub.s32 0, %v3467
      %v3469 = vrot.slane %v3384, %v3468
      %v3470 = vlaneseq
      %v3471 = vshrl.u32 %v3470, 7
      %v3472 = vsub.s32 0, %v3471
      %v3473 = vrot.slane %v3385, %v3472
      %v3474 = vlaneseq
      %v3475 = vshrl.u32 %v3474, 7
      %v3476 = vsub.s32 0, %v3475
      %v3477 = vrot.slane %v3386, %v3476
      %v3478 = vlaneseq
      %v3479 = vshrl.u32 %v3478, 7
      %v3480 = vsub.s32 0, %v3479
      %v3481 = vrot.slane %v3387, %v3480
      %v3482 = vlaneseq
      %v3483 = vshrl.u32 %v3482, 7
      %v3484 = vsub.s32 0, %v3483
      %v3485 = vrot.slane %v3388, %v3484
      %v3486 = vlaneseq
      %v3487 = vshrl.u32 %v3486, 7
      %v3488 = vsub.s32 0, %v3487
      %v3489 = vrot.slane %v3389, %v3488
      %v3490 = vlaneseq
      %v3491 = vshrl.u32 %v3490, 7
      %v3492 = vsub.s32 0, %v3491
      %v3493 = vrot.slane %v3390, %v3492
      %v3494 = vlaneseq
      %v3495 = vshrl.u32 %v3494, 7
      %v3496 = vsub.s32 0, %v3495
      %v3497 = vrot.slane %v3391, %v3496
      %v3498 = vlaneseq
      %v3499 = vshrl.u32 %v3498, 7
      %v3500 = vsub.s32 0, %v3499
      %v3501 = vrot.slane %v3392, %v3500
      %v3502 = vlaneseq
      %v3503 = vshrl.u32 %v3502, 7
      %v3504 = vsub.s32 0, %v3503
      %v3505 = vrot.slane %v3393, %v3504
      %v3506 = vlaneseq
      %v3507 = vshrl.u32 %v3506, 7
      %v3508 = vsub.s32 0, %v3507
      %v3509 = vrot.slane %v3394, %v3508
      %v3510 = vlaneseq
      %v3511 = vshrl.u32 %v3510, 7
      %v3512 = vsub.s32 0, %v3511
      %v3513 = vrot.slane %v3395, %v3512
      %v3514 = vlaneseq
      %v3515 = vshrl.u32 %v3514, 7
      %v3516 = vsub.s32 0, %v3515
      %v3517 = vrot.slane %v3396, %v3516
      %v3518 = vlaneseq
      %v3519 = vshrl.u32 %v3518, 7
      %v3520 = vsub.s32 0, %v3519
      %v3521 = vrot.slane %v3397, %v3520
      %v3522 = vlaneseq
      %v3523 = vshrl.u32 %v3522, 7
      %v3524 = vsub.s32 0, %v3523
      %v3525 = vrot.slane %v3398, %v3524
      %v3526 = vlaneseq
      %v3527 = vshrl.u32 %v3526, 7
      %v3528 = vsub.s32 0, %v3527
      %v3529 = vrot.slane %v3399, %v3528
      %v3530 = vlaneseq
      %v3531 = vshrl.u32 %v3530, 7
      %v3532 = vsub.s32 0, %v3531
      %v3533 = vrot.slane %v3400, %v3532
      %v3534 = vlaneseq
      %v3535 = vshrl.u32 %v3534, 7
      %v3536 = vsub.s32 0, %v3535
      %v3537 = vrot.slane %v3401, %v3536
      %v3538 = vlaneseq
      %v3539 = vshrl.u32 %v3538, 7
      %v3540 = vsub.s32 0, %v3539
      %v3541 = vrot.slane %v3402, %v3540
      %v3542 = vlaneseq
      %v3543 = vshrl.u32 %v3542, 7
      %v3544 = vsub.s32 0, %v3543
      %v3545 = vrot.slane %v3403, %v3544
      %v3546 = vlaneseq
      %v3547 = vshrl.u32 %v3546, 7
      %v3548 = vsub.s32 0, %v3547
      %v3549 = vrot.slane %v3404, %v3548
      %v3550 = vlaneseq
      %v3551 = vshrl.u32 %v3550, 7
      %v3552 = vsub.s32 0, %v3551
      %v3553 = vrot.slane %v3405, %v3552
      %v3554 = vlaneseq
      %v3555 = vshrl.u32 %v3554, 7
      %v3556 = vsub.s32 0, %v3555
      %v3557 = vrot.slane %v3406, %v3556
      %v3558 = vlaneseq
      %v3559 = vshrl.u32 %v3558, 7
      %v3560 = vsub.s32 0, %v3559
      %v3561 = vrot.slane %v3407, %v3560
      %v3562 = vlaneseq
      %v3563 = vshrl.u32 %v3562, 7
      %v3564 = vsub.s32 0, %v3563
      %v3565 = vrot.slane %v3408, %v3564
      %v3566 = vlaneseq
      %v3567 = vshrl.u32 %v3566, 7
      %v3568 = vsub.s32 0, %v3567
      %v3569 = vrot.slane %v3409, %v3568
      %v3570 = vlaneseq
      %v3571 = vshrl.u32 %v3570, 7
      %v3572 = vsub.s32 0, %v3571
      %v3573 = vrot.slane %v3410, %v3572
      %v3574 = vlaneseq
      %v3575 = vshrl.u32 %v3574, 7
      %v3576 = vsub.s32 0, %v3575
      %v3577 = vrot.slane %v3411, %v3576
      %v3578 = vlaneseq
      %v3579 = vshrl.u32 %v3578, 7
      %v3580 = vsub.s32 0, %v3579
      %v3581 = vrot.slane %v3412, %v3580
      %v3582 = vlaneseq
      %v3583 = vshrl.u32 %v3582, 7
      %v3584 = vsub.s32 0, %v3583
      %v3585 = vrot.slane %v3413, %v3584
      %v3586 = vlaneseq
      %v3587 = vshrl.u32 %v3586, 7
      %v3588 = vsub.s32 0, %v3587
      %v3589 = vrot.slane %v3414, %v3588
      %v3590 = vlaneseq
      %v3591 = vshrl.u32 %v3590, 7
      %v3592 = vsub.s32 0, %v3591
      %v3593 = vrot.slane %v3415, %v3592
      %v3594 = vlaneseq
      %v3595 = vshrl.u32 %v3594, 7
      %v3596 = vsub.s32 0, %v3595
      %v3597 = vrot.slane %v3416, %v3596
      %v3598 = vlaneseq
      %v3599 = vshrl.u32 %v3598, 7
      %v3600 = vsub.s32 0, %v3599
      %v3601 = vrot.slane %v3417, %v3600
      %v3602 = vlaneseq
      %v3603 = vshrl.u32 %v3602, 7
      %v3604 = vsub.s32 0, %v3603
      %v3605 = vrot.slane %v3418, %v3604
      %v3606 = vlaneseq
      %v3607 = vshrl.u32 %v3606, 7
      %v3608 = vsub.s32 0, %v3607
      %v3609 = vrot.slane %v3419, %v3608
      %v3610 = vlaneseq
      %v3611 = vshrl.u32 %v3610, 7
      %v3612 = vsub.s32 0, %v3611
      %v3613 = vrot.slane %v3420, %v3612
      %v3614 = vlaneseq
      %v3615 = vshrl.u32 %v3614, 7
      %v3616 = vsub.s32 0, %v3615
      %v3617 = vrot.slane %v3421, %v3616
      %v3618 = vlaneseq
      %v3619 = vshrl.u32 %v3618, 7
      %v3620 = vsub.s32 0, %v3619
      %v3621 = vrot.slane %v3422, %v3620
      %v3622 = vlaneseq
      %v3623 = vshrl.u32 %v3622, 7
      %v3624 = vsub.s32 0, %v3623
      %v3625 = vrot.slane %v3423, %v3624
      %v3626 = vlaneseq
      %v3627 = vshrl.u32 %v3626, 7
      %v3628 = vsub.s32 0, %v3627
      %v3629 = vrot.slane %v3424, %v3628
      %v3630 = vlaneseq
      %v3631 = vshrl.u32 %v3630, 7
      %v3632 = vsub.s32 0, %v3631
      %v3633 = vrot.slane %v3425, %v3632
      %v3634 = vlaneseq
      %v3635 = vshrl.u32 %v3634, 7
      %v3636 = vsub.s32 0, %v3635
      %v3637 = vrot.slane %v3426, %v3636
      %v3638 = vlaneseq
      %v3639 = vshrl.u32 %v3638, 7
      %v3640 = vsub.s32 0, %v3639
      %v3641 = vrot.slane %v3427, %v3640
      %v3642 = vlaneseq
      %v3643 = vshrl.u32 %v3642, 7
      %v3644 = vsub.s32 0, %v3643
      %v3645 = vrot.slane %v3428, %v3644
      %v3646 = vlaneseq
      %v3647 = vshrl.u32 %v3646, 7
      %v3648 = vsub.s32 0, %v3647
      %v3649 = vrot.slane %v3429, %v3648
      %v3650 = vlaneseq
      %v3651 = vshrl.u32 %v3650, 7
      %v3652 = vsub.s32 0, %v3651
      %v3653 = vrot.slane %v3430, %v3652
      %v3654 = vlaneseq
      %v3655 = vshrl.u32 %v3654, 7
      %v3656 = vsub.s32 0, %v3655
      %v3657 = vrot.slane %v3431, %v3656
      %v3658 = vlaneseq
      %v3659 = vshrl.u32 %v3658, 7
      %v3660 = vsub.s32 0, %v3659
      %v3661 = vrot.slane %v3432, %v3660
      %v3662 = vlaneseq
      %v3663 = vshrl.u32 %v3662, 7
      %v3664 = vsub.s32 0, %v3663
      %v3665 = vrot.slane %v3433, %v3664
      %v3666 = vlaneseq
      %v3667 = vshrl.u32 %v3666, 7
      %v3668 = vsub.s32 0, %v3667
      %v3669 = vrot.slane %v3434, %v3668
      %v3670 = vlaneseq
      %v3671 = vshrl.u32 %v3670, 7
      %v3672 = vsub.s32 0, %v3671
      %v3673 = vrot.slane %v3435, %v3672
      %v3674 = vlaneseq
      %v3675 = vshrl.u32 %v3674, 7
      %v3676 = vsub.s32 0, %v3675
      %v3677 = vrot.slane %v3436, %v3676
      %v3678 = vlaneseq
      %v3679 = vshrl.u32 %v3678, 7
      %v3680 = vsub.s32 0, %v3679
      %v3681 = vrot.slane %v3437, %v3680
      %v3682 = vlaneseq
      %v3683 = vshrl.u32 %v3682, 7
      %v3684 = vsub.s32 0, %v3683
      %v3685 = vrot.slane %v3438, %v3684
      %v3686 = vlaneseq
      %v3687 = vshrl.u32 %v3686, 7
      %v3688 = vsub.s32 0, %v3687
      %v3689 = vrot.slane %v3439, %v3688
      %v3690 = vlaneseq
      %v3691 = vshrl.u32 %v3690, 7
      %v3692 = vsub.s32 0, %v3691
      %v3693 = vrot.slane %v3440, %v3692
      %v3694 = vlaneseq
      %v3695 = vshrl.u32 %v3694, 7
      %v3696 = vsub.s32 0, %v3695
      %v3697 = vrot.slane %v3441, %v3696
      %3762 = vrot.lane.b32.xlu0 %v3445, 112
      %v3763 = vpop.permute.xlu0 %3762
      %3764 = vrot.lane.b32.xlu0 %v3449, 112
      %v3765 = vpop.permute.xlu0 %3764
      %3766 = vrot.lane.b32.xlu0 %v3453, 112
      %v3767 = vpop.permute.xlu0 %3766
      %3768 = vrot.lane.b32.xlu0 %v3457, 112
      %v3769 = vpop.permute.xlu0 %3768
      %3770 = vrot.lane.b32.xlu0 %v3461, 112
      %v3771 = vpop.permute.xlu0 %3770
      %3772 = vrot.lane.b32.xlu0 %v3465, 112
      %v3773 = vpop.permute.xlu0 %3772
      %3774 = vrot.lane.b32.xlu0 %v3469, 112
      %v3775 = vpop.permute.xlu0 %3774
      %3776 = vrot.lane.b32.xlu0 %v3473, 112
      %v3777 = vpop.permute.xlu0 %3776
      %3778 = vrot.lane.b32.xlu0 %v3477, 112
      %v3779 = vpop.permute.xlu0 %3778
      %3780 = vrot.lane.b32.xlu0 %v3481, 112
      %v3781 = vpop.permute.xlu0 %3780
      %3782 = vrot.lane.b32.xlu0 %v3485, 112
      %v3783 = vpop.permute.xlu0 %3782
      %3784 = vrot.lane.b32.xlu0 %v3489, 112
      %v3785 = vpop.permute.xlu0 %3784
      %3786 = vrot.lane.b32.xlu0 %v3493, 112
      %v3787 = vpop.permute.xlu0 %3786
      %3788 = vrot.lane.b32.xlu0 %v3497, 112
      %v3789 = vpop.permute.xlu0 %3788
      %3790 = vrot.lane.b32.xlu0 %v3501, 112
      %v3791 = vpop.permute.xlu0 %3790
      %3792 = vrot.lane.b32.xlu0 %v3505, 112
      %v3793 = vpop.permute.xlu0 %3792
      %3794 = vrot.lane.b32.xlu0 %v3509, 112
      %v3795 = vpop.permute.xlu0 %3794
      %3796 = vrot.lane.b32.xlu0 %v3513, 112
      %v3797 = vpop.permute.xlu0 %3796
      %3798 = vrot.lane.b32.xlu0 %v3517, 112
      %v3799 = vpop.permute.xlu0 %3798
      %3800 = vrot.lane.b32.xlu0 %v3521, 112
      %v3801 = vpop.permute.xlu0 %3800
      %3802 = vrot.lane.b32.xlu0 %v3525, 112
      %v3803 = vpop.permute.xlu0 %3802
      %3804 = vrot.lane.b32.xlu0 %v3529, 112
      %v3805 = vpop.permute.xlu0 %3804
      %3806 = vrot.lane.b32.xlu0 %v3533, 112
      %v3807 = vpop.permute.xlu0 %3806
      %3808 = vrot.lane.b32.xlu0 %v3537, 112
      %v3809 = vpop.permute.xlu0 %3808
      %3810 = vrot.lane.b32.xlu0 %v3541, 112
      %v3811 = vpop.permute.xlu0 %3810
      %3812 = vrot.lane.b32.xlu0 %v3545, 112
      %v3813 = vpop.permute.xlu0 %3812
      %3814 = vrot.lane.b32.xlu0 %v3549, 112
      %v3815 = vpop.permute.xlu0 %3814
      %3816 = vrot.lane.b32.xlu0 %v3553, 112
      %v3817 = vpop.permute.xlu0 %3816
      %3818 = vrot.lane.b32.xlu0 %v3557, 112
      %v3819 = vpop.permute.xlu0 %3818
      %3820 = vrot.lane.b32.xlu0 %v3561, 112
      %v3821 = vpop.permute.xlu0 %3820
      %3822 = vrot.lane.b32.xlu0 %v3565, 112
      %v3823 = vpop.permute.xlu0 %3822
      %3824 = vrot.lane.b32.xlu0 %v3569, 112
      %v3825 = vpop.permute.xlu0 %3824
      %3826 = vrot.lane.b32.xlu0 %v3573, 112
      %v3827 = vpop.permute.xlu0 %3826
      %3828 = vrot.lane.b32.xlu0 %v3577, 112
      %v3829 = vpop.permute.xlu0 %3828
      %3830 = vrot.lane.b32.xlu0 %v3581, 112
      %v3831 = vpop.permute.xlu0 %3830
      %3832 = vrot.lane.b32.xlu0 %v3585, 112
      %v3833 = vpop.permute.xlu0 %3832
      %3834 = vrot.lane.b32.xlu0 %v3589, 112
      %v3835 = vpop.permute.xlu0 %3834
      %3836 = vrot.lane.b32.xlu0 %v3593, 112
      %v3837 = vpop.permute.xlu0 %3836
      %3838 = vrot.lane.b32.xlu0 %v3597, 112
      %v3839 = vpop.permute.xlu0 %3838
      %3840 = vrot.lane.b32.xlu0 %v3601, 112
      %v3841 = vpop.permute.xlu0 %3840
      %3842 = vrot.lane.b32.xlu0 %v3605, 112
      %v3843 = vpop.permute.xlu0 %3842
      %3844 = vrot.lane.b32.xlu0 %v3609, 112
      %v3845 = vpop.permute.xlu0 %3844
      %3846 = vrot.lane.b32.xlu0 %v3613, 112
      %v3847 = vpop.permute.xlu0 %3846
      %3848 = vrot.lane.b32.xlu0 %v3617, 112
      %v3849 = vpop.permute.xlu0 %3848
      %3850 = vrot.lane.b32.xlu0 %v3621, 112
      %v3851 = vpop.permute.xlu0 %3850
      %3852 = vrot.lane.b32.xlu0 %v3625, 112
      %v3853 = vpop.permute.xlu0 %3852
      %3854 = vrot.lane.b32.xlu0 %v3629, 112
      %v3855 = vpop.permute.xlu0 %3854
      %3856 = vrot.lane.b32.xlu0 %v3633, 112
      %v3857 = vpop.permute.xlu0 %3856
      %3858 = vrot.lane.b32.xlu0 %v3637, 112
      %v3859 = vpop.permute.xlu0 %3858
      %3860 = vrot.lane.b32.xlu0 %v3641, 112
      %v3861 = vpop.permute.xlu0 %3860
      %3862 = vrot.lane.b32.xlu0 %v3645, 112
      %v3863 = vpop.permute.xlu0 %3862
      %3864 = vrot.lane.b32.xlu0 %v3649, 112
      %v3865 = vpop.permute.xlu0 %3864
      %3866 = vrot.lane.b32.xlu0 %v3653, 112
      %v3867 = vpop.permute.xlu0 %3866
      %3868 = vrot.lane.b32.xlu0 %v3657, 112
      %v3869 = vpop.permute.xlu0 %3868
      %3870 = vrot.lane.b32.xlu0 %v3661, 112
      %v3871 = vpop.permute.xlu0 %3870
      %3872 = vrot.lane.b32.xlu0 %v3665, 112
      %v3873 = vpop.permute.xlu0 %3872
      %3874 = vrot.lane.b32.xlu0 %v3669, 112
      %v3875 = vpop.permute.xlu0 %3874
      %3876 = vrot.lane.b32.xlu0 %v3673, 112
      %v3877 = vpop.permute.xlu0 %3876
      %3878 = vrot.lane.b32.xlu0 %v3677, 112
      %v3879 = vpop.permute.xlu0 %3878
      %3880 = vrot.lane.b32.xlu0 %v3681, 112
      %v3881 = vpop.permute.xlu0 %3880
      %3882 = vrot.lane.b32.xlu0 %v3685, 112
      %v3883 = vpop.permute.xlu0 %3882
      %3884 = vrot.lane.b32.xlu0 %v3689, 112
      %v3885 = vpop.permute.xlu0 %3884
      %3886 = vrot.lane.b32.xlu0 %v3693, 112
      %v3887 = vpop.permute.xlu0 %3886
      %3888 = vrot.lane.b32.xlu0 %v3697, 112
      %v3889 = vpop.permute.xlu0 %3888
      %v3954 = vsel %vm817, %v3445, %v3763
      %v3955 = vsel %vm817, %v3449, %v3765
      %v3956 = vsel %vm817, %v3453, %v3767
      %v3957 = vsel %vm817, %v3457, %v3769
      %v3958 = vsel %vm817, %v3461, %v3771
      %v3959 = vsel %vm817, %v3465, %v3773
      %v3960 = vsel %vm817, %v3469, %v3775
      %v3961 = vsel %vm817, %v3473, %v3777
      %v3962 = vsel %vm817, %v3477, %v3779
      %v3963 = vsel %vm817, %v3481, %v3781
      %v3964 = vsel %vm817, %v3485, %v3783
      %v3965 = vsel %vm817, %v3489, %v3785
      %v3966 = vsel %vm817, %v3493, %v3787
      %v3967 = vsel %vm817, %v3497, %v3789
      %v3968 = vsel %vm817, %v3501, %v3791
      %v3969 = vsel %vm817, %v3505, %v3793
      %v3970 = vsel %vm817, %v3509, %v3795
      %v3971 = vsel %vm817, %v3513, %v3797
      %v3972 = vsel %vm817, %v3517, %v3799
      %v3973 = vsel %vm817, %v3521, %v3801
      %v3974 = vsel %vm817, %v3525, %v3803
      %v3975 = vsel %vm817, %v3529, %v3805
      %v3976 = vsel %vm817, %v3533, %v3807
      %v3977 = vsel %vm817, %v3537, %v3809
      %v3978 = vsel %vm817, %v3541, %v3811
      %v3979 = vsel %vm817, %v3545, %v3813
      %v3980 = vsel %vm817, %v3549, %v3815
      %v3981 = vsel %vm817, %v3553, %v3817
      %v3982 = vsel %vm817, %v3557, %v3819
      %v3983 = vsel %vm817, %v3561, %v3821
      %v3984 = vsel %vm817, %v3565, %v3823
      %v3985 = vsel %vm817, %v3569, %v3825
      %v3986 = vsel %vm817, %v3573, %v3827
      %v3987 = vsel %vm817, %v3577, %v3829
      %v3988 = vsel %vm817, %v3581, %v3831
      %v3989 = vsel %vm817, %v3585, %v3833
      %v3990 = vsel %vm817, %v3589, %v3835
      %v3991 = vsel %vm817, %v3593, %v3837
      %v3992 = vsel %vm817, %v3597, %v3839
      %v3993 = vsel %vm817, %v3601, %v3841
      %v3994 = vsel %vm817, %v3605, %v3843
      %v3995 = vsel %vm817, %v3609, %v3845
      %v3996 = vsel %vm817, %v3613, %v3847
      %v3997 = vsel %vm817, %v3617, %v3849
      %v3998 = vsel %vm817, %v3621, %v3851
      %v3999 = vsel %vm817, %v3625, %v3853
      %v4000 = vsel %vm817, %v3629, %v3855
      %v4001 = vsel %vm817, %v3633, %v3857
      %v4002 = vsel %vm817, %v3637, %v3859
      %v4003 = vsel %vm817, %v3641, %v3861
      %v4004 = vsel %vm817, %v3645, %v3863
      %v4005 = vsel %vm817, %v3649, %v3865
      %v4006 = vsel %vm817, %v3653, %v3867
      %v4007 = vsel %vm817, %v3657, %v3869
      %v4008 = vsel %vm817, %v3661, %v3871
      %v4009 = vsel %vm817, %v3665, %v3873
      %v4010 = vsel %vm817, %v3669, %v3875
      %v4011 = vsel %vm817, %v3673, %v3877
      %v4012 = vsel %vm817, %v3677, %v3879
      %v4013 = vsel %vm817, %v3681, %v3881
      %v4014 = vsel %vm817, %v3685, %v3883
      %v4015 = vsel %vm817, %v3689, %v3885
      %v4016 = vsel %vm817, %v3693, %v3887
      %v4017 = vsel %vm817, %v3697, %v3889
      %4082 = vrot.lane.b32.xlu0 %v3954, 96
      %v4083 = vpop.permute.xlu0 %4082
      %4084 = vrot.lane.b32.xlu0 %v3955, 96
      %v4085 = vpop.permute.xlu0 %4084
      %4086 = vrot.lane.b32.xlu0 %v3956, 96
      %v4087 = vpop.permute.xlu0 %4086
      %4088 = vrot.lane.b32.xlu0 %v3957, 96
      %v4089 = vpop.permute.xlu0 %4088
      %4090 = vrot.lane.b32.xlu0 %v3958, 96
      %v4091 = vpop.permute.xlu0 %4090
      %4092 = vrot.lane.b32.xlu0 %v3959, 96
      %v4093 = vpop.permute.xlu0 %4092
      %4094 = vrot.lane.b32.xlu0 %v3960, 96
      %v4095 = vpop.permute.xlu0 %4094
      %4096 = vrot.lane.b32.xlu0 %v3961, 96
      %v4097 = vpop.permute.xlu0 %4096
      %4098 = vrot.lane.b32.xlu0 %v3962, 96
      %v4099 = vpop.permute.xlu0 %4098
      %4100 = vrot.lane.b32.xlu0 %v3963, 96
      %v4101 = vpop.permute.xlu0 %4100
      %4102 = vrot.lane.b32.xlu0 %v3964, 96
      %v4103 = vpop.permute.xlu0 %4102
      %4104 = vrot.lane.b32.xlu0 %v3965, 96
      %v4105 = vpop.permute.xlu0 %4104
      %4106 = vrot.lane.b32.xlu0 %v3966, 96
      %v4107 = vpop.permute.xlu0 %4106
      %4108 = vrot.lane.b32.xlu0 %v3967, 96
      %v4109 = vpop.permute.xlu0 %4108
      %4110 = vrot.lane.b32.xlu0 %v3968, 96
      %v4111 = vpop.permute.xlu0 %4110
      %4112 = vrot.lane.b32.xlu0 %v3969, 96
      %v4113 = vpop.permute.xlu0 %4112
      %4114 = vrot.lane.b32.xlu0 %v3970, 96
      %v4115 = vpop.permute.xlu0 %4114
      %4116 = vrot.lane.b32.xlu0 %v3971, 96
      %v4117 = vpop.permute.xlu0 %4116
      %4118 = vrot.lane.b32.xlu0 %v3972, 96
      %v4119 = vpop.permute.xlu0 %4118
      %4120 = vrot.lane.b32.xlu0 %v3973, 96
      %v4121 = vpop.permute.xlu0 %4120
      %4122 = vrot.lane.b32.xlu0 %v3974, 96
      %v4123 = vpop.permute.xlu0 %4122
      %4124 = vrot.lane.b32.xlu0 %v3975, 96
      %v4125 = vpop.permute.xlu0 %4124
      %4126 = vrot.lane.b32.xlu0 %v3976, 96
      %v4127 = vpop.permute.xlu0 %4126
      %4128 = vrot.lane.b32.xlu0 %v3977, 96
      %v4129 = vpop.permute.xlu0 %4128
      %4130 = vrot.lane.b32.xlu0 %v3978, 96
      %v4131 = vpop.permute.xlu0 %4130
      %4132 = vrot.lane.b32.xlu0 %v3979, 96
      %v4133 = vpop.permute.xlu0 %4132
      %4134 = vrot.lane.b32.xlu0 %v3980, 96
      %v4135 = vpop.permute.xlu0 %4134
      %4136 = vrot.lane.b32.xlu0 %v3981, 96
      %v4137 = vpop.permute.xlu0 %4136
      %4138 = vrot.lane.b32.xlu0 %v3982, 96
      %v4139 = vpop.permute.xlu0 %4138
      %4140 = vrot.lane.b32.xlu0 %v3983, 96
      %v4141 = vpop.permute.xlu0 %4140
      %4142 = vrot.lane.b32.xlu0 %v3984, 96
      %v4143 = vpop.permute.xlu0 %4142
      %4144 = vrot.lane.b32.xlu0 %v3985, 96
      %v4145 = vpop.permute.xlu0 %4144
      %4146 = vrot.lane.b32.xlu0 %v3986, 96
      %v4147 = vpop.permute.xlu0 %4146
      %4148 = vrot.lane.b32.xlu0 %v3987, 96
      %v4149 = vpop.permute.xlu0 %4148
      %4150 = vrot.lane.b32.xlu0 %v3988, 96
      %v4151 = vpop.permute.xlu0 %4150
      %4152 = vrot.lane.b32.xlu0 %v3989, 96
      %v4153 = vpop.permute.xlu0 %4152
      %4154 = vrot.lane.b32.xlu0 %v3990, 96
      %v4155 = vpop.permute.xlu0 %4154
      %4156 = vrot.lane.b32.xlu0 %v3991, 96
      %v4157 = vpop.permute.xlu0 %4156
      %4158 = vrot.lane.b32.xlu0 %v3992, 96
      %v4159 = vpop.permute.xlu0 %4158
      %4160 = vrot.lane.b32.xlu0 %v3993, 96
      %v4161 = vpop.permute.xlu0 %4160
      %4162 = vrot.lane.b32.xlu0 %v3994, 96
      %v4163 = vpop.permute.xlu0 %4162
      %4164 = vrot.lane.b32.xlu0 %v3995, 96
      %v4165 = vpop.permute.xlu0 %4164
      %4166 = vrot.lane.b32.xlu0 %v3996, 96
      %v4167 = vpop.permute.xlu0 %4166
      %4168 = vrot.lane.b32.xlu0 %v3997, 96
      %v4169 = vpop.permute.xlu0 %4168
      %4170 = vrot.lane.b32.xlu0 %v3998, 96
      %v4171 = vpop.permute.xlu0 %4170
      %4172 = vrot.lane.b32.xlu0 %v3999, 96
      %v4173 = vpop.permute.xlu0 %4172
      %4174 = vrot.lane.b32.xlu0 %v4000, 96
      %v4175 = vpop.permute.xlu0 %4174
      %4176 = vrot.lane.b32.xlu0 %v4001, 96
      %v4177 = vpop.permute.xlu0 %4176
      %4178 = vrot.lane.b32.xlu0 %v4002, 96
      %v4179 = vpop.permute.xlu0 %4178
      %4180 = vrot.lane.b32.xlu0 %v4003, 96
      %v4181 = vpop.permute.xlu0 %4180
      %4182 = vrot.lane.b32.xlu0 %v4004, 96
      %v4183 = vpop.permute.xlu0 %4182
      %4184 = vrot.lane.b32.xlu0 %v4005, 96
      %v4185 = vpop.permute.xlu0 %4184
      %4186 = vrot.lane.b32.xlu0 %v4006, 96
      %v4187 = vpop.permute.xlu0 %4186
      %4188 = vrot.lane.b32.xlu0 %v4007, 96
      %v4189 = vpop.permute.xlu0 %4188
      %4190 = vrot.lane.b32.xlu0 %v4008, 96
      %v4191 = vpop.permute.xlu0 %4190
      %4192 = vrot.lane.b32.xlu0 %v4009, 96
      %v4193 = vpop.permute.xlu0 %4192
      %4194 = vrot.lane.b32.xlu0 %v4010, 96
      %v4195 = vpop.permute.xlu0 %4194
      %4196 = vrot.lane.b32.xlu0 %v4011, 96
      %v4197 = vpop.permute.xlu0 %4196
      %4198 = vrot.lane.b32.xlu0 %v4012, 96
      %v4199 = vpop.permute.xlu0 %4198
      %4200 = vrot.lane.b32.xlu0 %v4013, 96
      %v4201 = vpop.permute.xlu0 %4200
      %4202 = vrot.lane.b32.xlu0 %v4014, 96
      %v4203 = vpop.permute.xlu0 %4202
      %4204 = vrot.lane.b32.xlu0 %v4015, 96
      %v4205 = vpop.permute.xlu0 %4204
      %4206 = vrot.lane.b32.xlu0 %v4016, 96
      %v4207 = vpop.permute.xlu0 %4206
      %4208 = vrot.lane.b32.xlu0 %v4017, 96
      %v4209 = vpop.permute.xlu0 %4208
      %v4210 = vcombine.low %v3954, %v3955
      %v4211 = vcombine.low %v3956, %v3957
      %v4212 = vcombine.low %v3958, %v3959
      %v4213 = vcombine.low %v3960, %v3961
      %v4215 = vunpack.c.l.s4 1966171168
      %v4216 = vunpack.c.0.s8 %v4215
      %v4217 = vlaneseq
      %v4218 = vshrl.u32 %v4217, 7
      %v4219 = vsub.s32 %v4216, %v4218
      %v4220 = vrot.slane %v4210, %v4219
      %v4222 = vunpack.c.l.s4 1966171168
      %v4223 = vunpack.c.0.s8 %v4222
      %v4224 = vlaneseq
      %v4225 = vshrl.u32 %v4224, 7
      %v4226 = vsub.s32 %v4223, %v4225
      %v4227 = vrot.slane %v4211, %v4226
      %v4229 = vunpack.c.l.s4 1966171168
      %v4230 = vunpack.c.0.s8 %v4229
      %v4231 = vlaneseq
      %v4232 = vshrl.u32 %v4231, 7
      %v4233 = vsub.s32 %v4230, %v4232
      %v4234 = vrot.slane %v4212, %v4233
      %v4236 = vunpack.c.l.s4 1966171168
      %v4237 = vunpack.c.0.s8 %v4236
      %v4238 = vlaneseq
      %v4239 = vshrl.u32 %v4238, 7
      %v4240 = vsub.s32 %v4237, %v4239
      %v4241 = vrot.slane %v4213, %v4240
      %v4242 = vcombine.low %v4220, %v4227
      %v4243 = vcombine.low %v4234, %v4241
      %v4245 = vunpack.c.l.s4 1966171168
      %v4246 = vunpack.c.0.s8 %v4245
      %v4247 = vlaneseq
      %v4248 = vshrl.u32 %v4247, 7
      %v4249 = vsub.s32 %v4246, %v4248
      %v4250 = vrot.slane %v4242, %v4249
      %v4252 = vunpack.c.l.s4 1966171168
      %v4253 = vunpack.c.0.s8 %v4252
      %v4254 = vlaneseq
      %v4255 = vshrl.u32 %v4254, 7
      %v4256 = vsub.s32 %v4253, %v4255
      %v4257 = vrot.slane %v4243, %v4256
      %v4258 = vcombine.low %v4250, %v4257
      %v4259 = vcombine.low %v4083, %v4085
      %v4260 = vcombine.low %v4087, %v4089
      %v4261 = vcombine.low %v4091, %v4093
      %v4262 = vcombine.low %v4095, %v4097
      %v4264 = vunpack.c.l.s4 1966171168
      %v4265 = vunpack.c.0.s8 %v4264
      %v4266 = vlaneseq
      %v4267 = vshrl.u32 %v4266, 7
      %v4268 = vsub.s32 %v4265, %v4267
      %v4269 = vrot.slane %v4259, %v4268
      %v4271 = vunpack.c.l.s4 1966171168
      %v4272 = vunpack.c.0.s8 %v4271
      %v4273 = vlaneseq
      %v4274 = vshrl.u32 %v4273, 7
      %v4275 = vsub.s32 %v4272, %v4274
      %v4276 = vrot.slane %v4260, %v4275
      %v4278 = vunpack.c.l.s4 1966171168
      %v4279 = vunpack.c.0.s8 %v4278
      %v4280 = vlaneseq
      %v4281 = vshrl.u32 %v4280, 7
      %v4282 = vsub.s32 %v4279, %v4281
      %v4283 = vrot.slane %v4261, %v4282
      %v4285 = vunpack.c.l.s4 1966171168
      %v4286 = vunpack.c.0.s8 %v4285
      %v4287 = vlaneseq
      %v4288 = vshrl.u32 %v4287, 7
      %v4289 = vsub.s32 %v4286, %v4288
      %v4290 = vrot.slane %v4262, %v4289
      %v4291 = vcombine.low %v4269, %v4276
      %v4292 = vcombine.low %v4283, %v4290
      %v4294 = vunpack.c.l.s4 1966171168
      %v4295 = vunpack.c.0.s8 %v4294
      %v4296 = vlaneseq
      %v4297 = vshrl.u32 %v4296, 7
      %v4298 = vsub.s32 %v4295, %v4297
      %v4299 = vrot.slane %v4291, %v4298
      %v4301 = vunpack.c.l.s4 1966171168
      %v4302 = vunpack.c.0.s8 %v4301
      %v4303 = vlaneseq
      %v4304 = vshrl.u32 %v4303, 7
      %v4305 = vsub.s32 %v4302, %v4304
      %v4306 = vrot.slane %v4292, %v4305
      %v4307 = vcombine.low %v4299, %v4306
      %v4308 = vcombine.low %v3962, %v3963
      %v4309 = vcombine.low %v3964, %v3965
      %v4310 = vcombine.low %v3966, %v3967
      %v4311 = vcombine.low %v3968, %v3969
      %v4313 = vunpack.c.l.s4 1966171168
      %v4314 = vunpack.c.0.s8 %v4313
      %v4315 = vlaneseq
      %v4316 = vshrl.u32 %v4315, 7
      %v4317 = vsub.s32 %v4314, %v4316
      %v4318 = vrot.slane %v4308, %v4317
      %v4320 = vunpack.c.l.s4 1966171168
      %v4321 = vunpack.c.0.s8 %v4320
      %v4322 = vlaneseq
      %v4323 = vshrl.u32 %v4322, 7
      %v4324 = vsub.s32 %v4321, %v4323
      %v4325 = vrot.slane %v4309, %v4324
      %v4327 = vunpack.c.l.s4 1966171168
      %v4328 = vunpack.c.0.s8 %v4327
      %v4329 = vlaneseq
      %v4330 = vshrl.u32 %v4329, 7
      %v4331 = vsub.s32 %v4328, %v4330
      %v4332 = vrot.slane %v4310, %v4331
      %v4334 = vunpack.c.l.s4 1966171168
      %v4335 = vunpack.c.0.s8 %v4334
      %v4336 = vlaneseq
      %v4337 = vshrl.u32 %v4336, 7
      %v4338 = vsub.s32 %v4335, %v4337
      %v4339 = vrot.slane %v4311, %v4338
      %v4340 = vcombine.low %v4318, %v4325
      %v4341 = vcombine.low %v4332, %v4339
      %v4343 = vunpack.c.l.s4 1966171168
      %v4344 = vunpack.c.0.s8 %v4343
      %v4345 = vlaneseq
      %v4346 = vshrl.u32 %v4345, 7
      %v4347 = vsub.s32 %v4344, %v4346
      %v4348 = vrot.slane %v4340, %v4347
      %v4350 = vunpack.c.l.s4 1966171168
      %v4351 = vunpack.c.0.s8 %v4350
      %v4352 = vlaneseq
      %v4353 = vshrl.u32 %v4352, 7
      %v4354 = vsub.s32 %v4351, %v4353
      %v4355 = vrot.slane %v4341, %v4354
      %v4356 = vcombine.low %v4348, %v4355
      %v4357 = vcombine.low %v4099, %v4101
      %v4358 = vcombine.low %v4103, %v4105
      %v4359 = vcombine.low %v4107, %v4109
      %v4360 = vcombine.low %v4111, %v4113
      %v4362 = vunpack.c.l.s4 1966171168
      %v4363 = vunpack.c.0.s8 %v4362
      %v4364 = vlaneseq
      %v4365 = vshrl.u32 %v4364, 7
      %v4366 = vsub.s32 %v4363, %v4365
      %v4367 = vrot.slane %v4357, %v4366
      %v4369 = vunpack.c.l.s4 1966171168
      %v4370 = vunpack.c.0.s8 %v4369
      %v4371 = vlaneseq
      %v4372 = vshrl.u32 %v4371, 7
      %v4373 = vsub.s32 %v4370, %v4372
      %v4374 = vrot.slane %v4358, %v4373
      %v4376 = vunpack.c.l.s4 1966171168
      %v4377 = vunpack.c.0.s8 %v4376
      %v4378 = vlaneseq
      %v4379 = vshrl.u32 %v4378, 7
      %v4380 = vsub.s32 %v4377, %v4379
      %v4381 = vrot.slane %v4359, %v4380
      %v4383 = vunpack.c.l.s4 1966171168
      %v4384 = vunpack.c.0.s8 %v4383
      %v4385 = vlaneseq
      %v4386 = vshrl.u32 %v4385, 7
      %v4387 = vsub.s32 %v4384, %v4386
      %v4388 = vrot.slane %v4360, %v4387
      %v4389 = vcombine.low %v4367, %v4374
      %v4390 = vcombine.low %v4381, %v4388
      %v4392 = vunpack.c.l.s4 1966171168
      %v4393 = vunpack.c.0.s8 %v4392
      %v4394 = vlaneseq
      %v4395 = vshrl.u32 %v4394, 7
      %v4396 = vsub.s32 %v4393, %v4395
      %v4397 = vrot.slane %v4389, %v4396
      %v4399 = vunpack.c.l.s4 1966171168
      %v4400 = vunpack.c.0.s8 %v4399
      %v4401 = vlaneseq
      %v4402 = vshrl.u32 %v4401, 7
      %v4403 = vsub.s32 %v4400, %v4402
      %v4404 = vrot.slane %v4390, %v4403
      %v4405 = vcombine.low %v4397, %v4404
      %v4406 = vcombine.low %v3970, %v3971
      %v4407 = vcombine.low %v3972, %v3973
      %v4408 = vcombine.low %v3974, %v3975
      %v4409 = vcombine.low %v3976, %v3977
      %v4411 = vunpack.c.l.s4 1966171168
      %v4412 = vunpack.c.0.s8 %v4411
      %v4413 = vlaneseq
      %v4414 = vshrl.u32 %v4413, 7
      %v4415 = vsub.s32 %v4412, %v4414
      %v4416 = vrot.slane %v4406, %v4415
      %v4418 = vunpack.c.l.s4 1966171168
      %v4419 = vunpack.c.0.s8 %v4418
      %v4420 = vlaneseq
      %v4421 = vshrl.u32 %v4420, 7
      %v4422 = vsub.s32 %v4419, %v4421
      %v4423 = vrot.slane %v4407, %v4422
      %v4425 = vunpack.c.l.s4 1966171168
      %v4426 = vunpack.c.0.s8 %v4425
      %v4427 = vlaneseq
      %v4428 = vshrl.u32 %v4427, 7
      %v4429 = vsub.s32 %v4426, %v4428
      %v4430 = vrot.slane %v4408, %v4429
      %v4432 = vunpack.c.l.s4 1966171168
      %v4433 = vunpack.c.0.s8 %v4432
      %v4434 = vlaneseq
      %v4435 = vshrl.u32 %v4434, 7
      %v4436 = vsub.s32 %v4433, %v4435
      %v4437 = vrot.slane %v4409, %v4436
      %v4438 = vcombine.low %v4416, %v4423
      %v4439 = vcombine.low %v4430, %v4437
      %v4441 = vunpack.c.l.s4 1966171168
      %v4442 = vunpack.c.0.s8 %v4441
      %v4443 = vlaneseq
      %v4444 = vshrl.u32 %v4443, 7
      %v4445 = vsub.s32 %v4442, %v4444
      %v4446 = vrot.slane %v4438, %v4445
      %v4448 = vunpack.c.l.s4 1966171168
      %v4449 = vunpack.c.0.s8 %v4448
      %v4450 = vlaneseq
      %v4451 = vshrl.u32 %v4450, 7
      %v4452 = vsub.s32 %v4449, %v4451
      %v4453 = vrot.slane %v4439, %v4452
      %v4454 = vcombine.low %v4446, %v4453
      %v4455 = vcombine.low %v4115, %v4117
      %v4456 = vcombine.low %v4119, %v4121
      %v4457 = vcombine.low %v4123, %v4125
      %v4458 = vcombine.low %v4127, %v4129
      %v4460 = vunpack.c.l.s4 1966171168
      %v4461 = vunpack.c.0.s8 %v4460
      %v4462 = vlaneseq
      %v4463 = vshrl.u32 %v4462, 7
      %v4464 = vsub.s32 %v4461, %v4463
      %v4465 = vrot.slane %v4455, %v4464
      %v4467 = vunpack.c.l.s4 1966171168
      %v4468 = vunpack.c.0.s8 %v4467
      %v4469 = vlaneseq
      %v4470 = vshrl.u32 %v4469, 7
      %v4471 = vsub.s32 %v4468, %v4470
      %v4472 = vrot.slane %v4456, %v4471
      %v4474 = vunpack.c.l.s4 1966171168
      %v4475 = vunpack.c.0.s8 %v4474
      %v4476 = vlaneseq
      %v4477 = vshrl.u32 %v4476, 7
      %v4478 = vsub.s32 %v4475, %v4477
      %v4479 = vrot.slane %v4457, %v4478
      %v4481 = vunpack.c.l.s4 1966171168
      %v4482 = vunpack.c.0.s8 %v4481
      %v4483 = vlaneseq
      %v4484 = vshrl.u32 %v4483, 7
      %v4485 = vsub.s32 %v4482, %v4484
      %v4486 = vrot.slane %v4458, %v4485
      %v4487 = vcombine.low %v4465, %v4472
      %v4488 = vcombine.low %v4479, %v4486
      %v4490 = vunpack.c.l.s4 1966171168
      %v4491 = vunpack.c.0.s8 %v4490
      %v4492 = vlaneseq
      %v4493 = vshrl.u32 %v4492, 7
      %v4494 = vsub.s32 %v4491, %v4493
      %v4495 = vrot.slane %v4487, %v4494
      %v4497 = vunpack.c.l.s4 1966171168
      %v4498 = vunpack.c.0.s8 %v4497
      %v4499 = vlaneseq
      %v4500 = vshrl.u32 %v4499, 7
      %v4501 = vsub.s32 %v4498, %v4500
      %v4502 = vrot.slane %v4488, %v4501
      %v4503 = vcombine.low %v4495, %v4502
      %v4504 = vcombine.low %v3978, %v3979
      %v4505 = vcombine.low %v3980, %v3981
      %v4506 = vcombine.low %v3982, %v3983
      %v4507 = vcombine.low %v3984, %v3985
      %v4509 = vunpack.c.l.s4 1966171168
      %v4510 = vunpack.c.0.s8 %v4509
      %v4511 = vlaneseq
      %v4512 = vshrl.u32 %v4511, 7
      %v4513 = vsub.s32 %v4510, %v4512
      %v4514 = vrot.slane %v4504, %v4513
      %v4516 = vunpack.c.l.s4 1966171168
      %v4517 = vunpack.c.0.s8 %v4516
      %v4518 = vlaneseq
      %v4519 = vshrl.u32 %v4518, 7
      %v4520 = vsub.s32 %v4517, %v4519
      %v4521 = vrot.slane %v4505, %v4520
      %v4523 = vunpack.c.l.s4 1966171168
      %v4524 = vunpack.c.0.s8 %v4523
      %v4525 = vlaneseq
      %v4526 = vshrl.u32 %v4525, 7
      %v4527 = vsub.s32 %v4524, %v4526
      %v4528 = vrot.slane %v4506, %v4527
      %v4530 = vunpack.c.l.s4 1966171168
      %v4531 = vunpack.c.0.s8 %v4530
      %v4532 = vlaneseq
      %v4533 = vshrl.u32 %v4532, 7
      %v4534 = vsub.s32 %v4531, %v4533
      %v4535 = vrot.slane %v4507, %v4534
      %v4536 = vcombine.low %v4514, %v4521
      %v4537 = vcombine.low %v4528, %v4535
      %v4539 = vunpack.c.l.s4 1966171168
      %v4540 = vunpack.c.0.s8 %v4539
      %v4541 = vlaneseq
      %v4542 = vshrl.u32 %v4541, 7
      %v4543 = vsub.s32 %v4540, %v4542
      %v4544 = vrot.slane %v4536, %v4543
      %v4546 = vunpack.c.l.s4 1966171168
      %v4547 = vunpack.c.0.s8 %v4546
      %v4548 = vlaneseq
      %v4549 = vshrl.u32 %v4548, 7
      %v4550 = vsub.s32 %v4547, %v4549
      %v4551 = vrot.slane %v4537, %v4550
      %v4552 = vcombine.low %v4544, %v4551
      %v4553 = vcombine.low %v4131, %v4133
      %v4554 = vcombine.low %v4135, %v4137
      %v4555 = vcombine.low %v4139, %v4141
      %v4556 = vcombine.low %v4143, %v4145
      %v4558 = vunpack.c.l.s4 1966171168
      %v4559 = vunpack.c.0.s8 %v4558
      %v4560 = vlaneseq
      %v4561 = vshrl.u32 %v4560, 7
      %v4562 = vsub.s32 %v4559, %v4561
      %v4563 = vrot.slane %v4553, %v4562
      %v4565 = vunpack.c.l.s4 1966171168
      %v4566 = vunpack.c.0.s8 %v4565
      %v4567 = vlaneseq
      %v4568 = vshrl.u32 %v4567, 7
      %v4569 = vsub.s32 %v4566, %v4568
      %v4570 = vrot.slane %v4554, %v4569
      %v4572 = vunpack.c.l.s4 1966171168
      %v4573 = vunpack.c.0.s8 %v4572
      %v4574 = vlaneseq
      %v4575 = vshrl.u32 %v4574, 7
      %v4576 = vsub.s32 %v4573, %v4575
      %v4577 = vrot.slane %v4555, %v4576
      %v4579 = vunpack.c.l.s4 1966171168
      %v4580 = vunpack.c.0.s8 %v4579
      %v4581 = vlaneseq
      %v4582 = vshrl.u32 %v4581, 7
      %v4583 = vsub.s32 %v4580, %v4582
      %v4584 = vrot.slane %v4556, %v4583
      %v4585 = vcombine.low %v4563, %v4570
      %v4586 = vcombine.low %v4577, %v4584
      %v4588 = vunpack.c.l.s4 1966171168
      %v4589 = vunpack.c.0.s8 %v4588
      %v4590 = vlaneseq
      %v4591 = vshrl.u32 %v4590, 7
      %v4592 = vsub.s32 %v4589, %v4591
      %v4593 = vrot.slane %v4585, %v4592
      %v4595 = vunpack.c.l.s4 1966171168
      %v4596 = vunpack.c.0.s8 %v4595
      %v4597 = vlaneseq
      %v4598 = vshrl.u32 %v4597, 7
      %v4599 = vsub.s32 %v4596, %v4598
      %v4600 = vrot.slane %v4586, %v4599
      %v4601 = vcombine.low %v4593, %v4600
      %v4602 = vcombine.low %v3986, %v3987
      %v4603 = vcombine.low %v3988, %v3989
      %v4604 = vcombine.low %v3990, %v3991
      %v4605 = vcombine.low %v3992, %v3993
      %v4607 = vunpack.c.l.s4 1966171168
      %v4608 = vunpack.c.0.s8 %v4607
      %v4609 = vlaneseq
      %v4610 = vshrl.u32 %v4609, 7
      %v4611 = vsub.s32 %v4608, %v4610
      %v4612 = vrot.slane %v4602, %v4611
      %v4614 = vunpack.c.l.s4 1966171168
      %v4615 = vunpack.c.0.s8 %v4614
      %v4616 = vlaneseq
      %v4617 = vshrl.u32 %v4616, 7
      %v4618 = vsub.s32 %v4615, %v4617
      %v4619 = vrot.slane %v4603, %v4618
      %v4621 = vunpack.c.l.s4 1966171168
      %v4622 = vunpack.c.0.s8 %v4621
      %v4623 = vlaneseq
      %v4624 = vshrl.u32 %v4623, 7
      %v4625 = vsub.s32 %v4622, %v4624
      %v4626 = vrot.slane %v4604, %v4625
      %v4628 = vunpack.c.l.s4 1966171168
      %v4629 = vunpack.c.0.s8 %v4628
      %v4630 = vlaneseq
      %v4631 = vshrl.u32 %v4630, 7
      %v4632 = vsub.s32 %v4629, %v4631
      %v4633 = vrot.slane %v4605, %v4632
      %v4634 = vcombine.low %v4612, %v4619
      %v4635 = vcombine.low %v4626, %v4633
      %v4637 = vunpack.c.l.s4 1966171168
      %v4638 = vunpack.c.0.s8 %v4637
      %v4639 = vlaneseq
      %v4640 = vshrl.u32 %v4639, 7
      %v4641 = vsub.s32 %v4638, %v4640
      %v4642 = vrot.slane %v4634, %v4641
      %v4644 = vunpack.c.l.s4 1966171168
      %v4645 = vunpack.c.0.s8 %v4644
      %v4646 = vlaneseq
      %v4647 = vshrl.u32 %v4646, 7
      %v4648 = vsub.s32 %v4645, %v4647
      %v4649 = vrot.slane %v4635, %v4648
      %v4650 = vcombine.low %v4642, %v4649
      %v4651 = vcombine.low %v4147, %v4149
      %v4652 = vcombine.low %v4151, %v4153
      %v4653 = vcombine.low %v4155, %v4157
      %v4654 = vcombine.low %v4159, %v4161
      %v4656 = vunpack.c.l.s4 1966171168
      %v4657 = vunpack.c.0.s8 %v4656
      %v4658 = vlaneseq
      %v4659 = vshrl.u32 %v4658, 7
      %v4660 = vsub.s32 %v4657, %v4659
      %v4661 = vrot.slane %v4651, %v4660
      %v4663 = vunpack.c.l.s4 1966171168
      %v4664 = vunpack.c.0.s8 %v4663
      %v4665 = vlaneseq
      %v4666 = vshrl.u32 %v4665, 7
      %v4667 = vsub.s32 %v4664, %v4666
      %v4668 = vrot.slane %v4652, %v4667
      %v4670 = vunpack.c.l.s4 1966171168
      %v4671 = vunpack.c.0.s8 %v4670
      %v4672 = vlaneseq
      %v4673 = vshrl.u32 %v4672, 7
      %v4674 = vsub.s32 %v4671, %v4673
      %v4675 = vrot.slane %v4653, %v4674
      %v4677 = vunpack.c.l.s4 1966171168
      %v4678 = vunpack.c.0.s8 %v4677
      %v4679 = vlaneseq
      %v4680 = vshrl.u32 %v4679, 7
      %v4681 = vsub.s32 %v4678, %v4680
      %v4682 = vrot.slane %v4654, %v4681
      %v4683 = vcombine.low %v4661, %v4668
      %v4684 = vcombine.low %v4675, %v4682
      %v4686 = vunpack.c.l.s4 1966171168
      %v4687 = vunpack.c.0.s8 %v4686
      %v4688 = vlaneseq
      %v4689 = vshrl.u32 %v4688, 7
      %v4690 = vsub.s32 %v4687, %v4689
      %v4691 = vrot.slane %v4683, %v4690
      %v4693 = vunpack.c.l.s4 1966171168
      %v4694 = vunpack.c.0.s8 %v4693
      %v4695 = vlaneseq
      %v4696 = vshrl.u32 %v4695, 7
      %v4697 = vsub.s32 %v4694, %v4696
      %v4698 = vrot.slane %v4684, %v4697
      %v4699 = vcombine.low %v4691, %v4698
      %v4700 = vcombine.low %v3994, %v3995
      %v4701 = vcombine.low %v3996, %v3997
      %v4702 = vcombine.low %v3998, %v3999
      %v4703 = vcombine.low %v4000, %v4001
      %v4705 = vunpack.c.l.s4 1966171168
      %v4706 = vunpack.c.0.s8 %v4705
      %v4707 = vlaneseq
      %v4708 = vshrl.u32 %v4707, 7
      %v4709 = vsub.s32 %v4706, %v4708
      %v4710 = vrot.slane %v4700, %v4709
      %v4712 = vunpack.c.l.s4 1966171168
      %v4713 = vunpack.c.0.s8 %v4712
      %v4714 = vlaneseq
      %v4715 = vshrl.u32 %v4714, 7
      %v4716 = vsub.s32 %v4713, %v4715
      %v4717 = vrot.slane %v4701, %v4716
      %v4719 = vunpack.c.l.s4 1966171168
      %v4720 = vunpack.c.0.s8 %v4719
      %v4721 = vlaneseq
      %v4722 = vshrl.u32 %v4721, 7
      %v4723 = vsub.s32 %v4720, %v4722
      %v4724 = vrot.slane %v4702, %v4723
      %v4726 = vunpack.c.l.s4 1966171168
      %v4727 = vunpack.c.0.s8 %v4726
      %v4728 = vlaneseq
      %v4729 = vshrl.u32 %v4728, 7
      %v4730 = vsub.s32 %v4727, %v4729
      %v4731 = vrot.slane %v4703, %v4730
      %v4732 = vcombine.low %v4710, %v4717
      %v4733 = vcombine.low %v4724, %v4731
      %v4735 = vunpack.c.l.s4 1966171168
      %v4736 = vunpack.c.0.s8 %v4735
      %v4737 = vlaneseq
      %v4738 = vshrl.u32 %v4737, 7
      %v4739 = vsub.s32 %v4736, %v4738
      %v4740 = vrot.slane %v4732, %v4739
      %v4742 = vunpack.c.l.s4 1966171168
      %v4743 = vunpack.c.0.s8 %v4742
      %v4744 = vlaneseq
      %v4745 = vshrl.u32 %v4744, 7
      %v4746 = vsub.s32 %v4743, %v4745
      %v4747 = vrot.slane %v4733, %v4746
      %v4748 = vcombine.low %v4740, %v4747
      %v4749 = vcombine.low %v4163, %v4165
      %v4750 = vcombine.low %v4167, %v4169
      %v4751 = vcombine.low %v4171, %v4173
      %v4752 = vcombine.low %v4175, %v4177
      %v4754 = vunpack.c.l.s4 1966171168
      %v4755 = vunpack.c.0.s8 %v4754
      %v4756 = vlaneseq
      %v4757 = vshrl.u32 %v4756, 7
      %v4758 = vsub.s32 %v4755, %v4757
      %v4759 = vrot.slane %v4749, %v4758
      %v4761 = vunpack.c.l.s4 1966171168
      %v4762 = vunpack.c.0.s8 %v4761
      %v4763 = vlaneseq
      %v4764 = vshrl.u32 %v4763, 7
      %v4765 = vsub.s32 %v4762, %v4764
      %v4766 = vrot.slane %v4750, %v4765
      %v4768 = vunpack.c.l.s4 1966171168
      %v4769 = vunpack.c.0.s8 %v4768
      %v4770 = vlaneseq
      %v4771 = vshrl.u32 %v4770, 7
      %v4772 = vsub.s32 %v4769, %v4771
      %v4773 = vrot.slane %v4751, %v4772
      %v4775 = vunpack.c.l.s4 1966171168
      %v4776 = vunpack.c.0.s8 %v4775
      %v4777 = vlaneseq
      %v4778 = vshrl.u32 %v4777, 7
      %v4779 = vsub.s32 %v4776, %v4778
      %v4780 = vrot.slane %v4752, %v4779
      %v4781 = vcombine.low %v4759, %v4766
      %v4782 = vcombine.low %v4773, %v4780
      %v4784 = vunpack.c.l.s4 1966171168
      %v4785 = vunpack.c.0.s8 %v4784
      %v4786 = vlaneseq
      %v4787 = vshrl.u32 %v4786, 7
      %v4788 = vsub.s32 %v4785, %v4787
      %v4789 = vrot.slane %v4781, %v4788
      %v4791 = vunpack.c.l.s4 1966171168
      %v4792 = vunpack.c.0.s8 %v4791
      %v4793 = vlaneseq
      %v4794 = vshrl.u32 %v4793, 7
      %v4795 = vsub.s32 %v4792, %v4794
      %v4796 = vrot.slane %v4782, %v4795
      %v4797 = vcombine.low %v4789, %v4796
      %v4798 = vcombine.low %v4002, %v4003
      %v4799 = vcombine.low %v4004, %v4005
      %v4800 = vcombine.low %v4006, %v4007
      %v4801 = vcombine.low %v4008, %v4009
      %v4803 = vunpack.c.l.s4 1966171168
      %v4804 = vunpack.c.0.s8 %v4803
      %v4805 = vlaneseq
      %v4806 = vshrl.u32 %v4805, 7
      %v4807 = vsub.s32 %v4804, %v4806
      %v4808 = vrot.slane %v4798, %v4807
      %v4810 = vunpack.c.l.s4 1966171168
      %v4811 = vunpack.c.0.s8 %v4810
      %v4812 = vlaneseq
      %v4813 = vshrl.u32 %v4812, 7
      %v4814 = vsub.s32 %v4811, %v4813
      %v4815 = vrot.slane %v4799, %v4814
      %v4817 = vunpack.c.l.s4 1966171168
      %v4818 = vunpack.c.0.s8 %v4817
      %v4819 = vlaneseq
      %v4820 = vshrl.u32 %v4819, 7
      %v4821 = vsub.s32 %v4818, %v4820
      %v4822 = vrot.slane %v4800, %v4821
      %v4824 = vunpack.c.l.s4 1966171168
      %v4825 = vunpack.c.0.s8 %v4824
      %v4826 = vlaneseq
      %v4827 = vshrl.u32 %v4826, 7
      %v4828 = vsub.s32 %v4825, %v4827
      %v4829 = vrot.slane %v4801, %v4828
      %v4830 = vcombine.low %v4808, %v4815
      %v4831 = vcombine.low %v4822, %v4829
      %v4833 = vunpack.c.l.s4 1966171168
      %v4834 = vunpack.c.0.s8 %v4833
      %v4835 = vlaneseq
      %v4836 = vshrl.u32 %v4835, 7
      %v4837 = vsub.s32 %v4834, %v4836
      %v4838 = vrot.slane %v4830, %v4837
      %v4840 = vunpack.c.l.s4 1966171168
      %v4841 = vunpack.c.0.s8 %v4840
      %v4842 = vlaneseq
      %v4843 = vshrl.u32 %v4842, 7
      %v4844 = vsub.s32 %v4841, %v4843
      %v4845 = vrot.slane %v4831, %v4844
      %v4846 = vcombine.low %v4838, %v4845
      %v4847 = vcombine.low %v4179, %v4181
      %v4848 = vcombine.low %v4183, %v4185
      %v4849 = vcombine.low %v4187, %v4189
      %v4850 = vcombine.low %v4191, %v4193
      %v4852 = vunpack.c.l.s4 1966171168
      %v4853 = vunpack.c.0.s8 %v4852
      %v4854 = vlaneseq
      %v4855 = vshrl.u32 %v4854, 7
      %v4856 = vsub.s32 %v4853, %v4855
      %v4857 = vrot.slane %v4847, %v4856
      %v4859 = vunpack.c.l.s4 1966171168
      %v4860 = vunpack.c.0.s8 %v4859
      %v4861 = vlaneseq
      %v4862 = vshrl.u32 %v4861, 7
      %v4863 = vsub.s32 %v4860, %v4862
      %v4864 = vrot.slane %v4848, %v4863
      %v4866 = vunpack.c.l.s4 1966171168
      %v4867 = vunpack.c.0.s8 %v4866
      %v4868 = vlaneseq
      %v4869 = vshrl.u32 %v4868, 7
      %v4870 = vsub.s32 %v4867, %v4869
      %v4871 = vrot.slane %v4849, %v4870
      %v4873 = vunpack.c.l.s4 1966171168
      %v4874 = vunpack.c.0.s8 %v4873
      %v4875 = vlaneseq
      %v4876 = vshrl.u32 %v4875, 7
      %v4877 = vsub.s32 %v4874, %v4876
      %v4878 = vrot.slane %v4850, %v4877
      %v4879 = vcombine.low %v4857, %v4864
      %v4880 = vcombine.low %v4871, %v4878
      %v4882 = vunpack.c.l.s4 1966171168
      %v4883 = vunpack.c.0.s8 %v4882
      %v4884 = vlaneseq
      %v4885 = vshrl.u32 %v4884, 7
      %v4886 = vsub.s32 %v4883, %v4885
      %v4887 = vrot.slane %v4879, %v4886
      %v4889 = vunpack.c.l.s4 1966171168
      %v4890 = vunpack.c.0.s8 %v4889
      %v4891 = vlaneseq
      %v4892 = vshrl.u32 %v4891, 7
      %v4893 = vsub.s32 %v4890, %v4892
      %v4894 = vrot.slane %v4880, %v4893
      %v4895 = vcombine.low %v4887, %v4894
      %v4896 = vcombine.low %v4010, %v4011
      %v4897 = vcombine.low %v4012, %v4013
      %v4898 = vcombine.low %v4014, %v4015
      %v4899 = vcombine.low %v4016, %v4017
      %v4901 = vunpack.c.l.s4 1966171168
      %v4902 = vunpack.c.0.s8 %v4901
      %v4903 = vlaneseq
      %v4904 = vshrl.u32 %v4903, 7
      %v4905 = vsub.s32 %v4902, %v4904
      %v4906 = vrot.slane %v4896, %v4905
      %v4908 = vunpack.c.l.s4 1966171168
      %v4909 = vunpack.c.0.s8 %v4908
      %v4910 = vlaneseq
      %v4911 = vshrl.u32 %v4910, 7
      %v4912 = vsub.s32 %v4909, %v4911
      %v4913 = vrot.slane %v4897, %v4912
      %v4915 = vunpack.c.l.s4 1966171168
      %v4916 = vunpack.c.0.s8 %v4915
      %v4917 = vlaneseq
      %v4918 = vshrl.u32 %v4917, 7
      %v4919 = vsub.s32 %v4916, %v4918
      %v4920 = vrot.slane %v4898, %v4919
      %v4922 = vunpack.c.l.s4 1966171168
      %v4923 = vunpack.c.0.s8 %v4922
      %v4924 = vlaneseq
      %v4925 = vshrl.u32 %v4924, 7
      %v4926 = vsub.s32 %v4923, %v4925
      %v4927 = vrot.slane %v4899, %v4926
      %v4928 = vcombine.low %v4906, %v4913
      %v4929 = vcombine.low %v4920, %v4927
      %v4931 = vunpack.c.l.s4 1966171168
      %v4932 = vunpack.c.0.s8 %v4931
      %v4933 = vlaneseq
      %v4934 = vshrl.u32 %v4933, 7
      %v4935 = vsub.s32 %v4932, %v4934
      %v4936 = vrot.slane %v4928, %v4935
      %v4938 = vunpack.c.l.s4 1966171168
      %v4939 = vunpack.c.0.s8 %v4938
      %v4940 = vlaneseq
      %v4941 = vshrl.u32 %v4940, 7
      %v4942 = vsub.s32 %v4939, %v4941
      %v4943 = vrot.slane %v4929, %v4942
      %v4944 = vcombine.low %v4936, %v4943
      %v4945 = vcombine.low %v4195, %v4197
      %v4946 = vcombine.low %v4199, %v4201
      %v4947 = vcombine.low %v4203, %v4205
      %v4948 = vcombine.low %v4207, %v4209
      %v4950 = vunpack.c.l.s4 1966171168
      %v4951 = vunpack.c.0.s8 %v4950
      %v4952 = vlaneseq
      %v4953 = vshrl.u32 %v4952, 7
      %v4954 = vsub.s32 %v4951, %v4953
      %v4955 = vrot.slane %v4945, %v4954
      %v4957 = vunpack.c.l.s4 1966171168
      %v4958 = vunpack.c.0.s8 %v4957
      %v4959 = vlaneseq
      %v4960 = vshrl.u32 %v4959, 7
      %v4961 = vsub.s32 %v4958, %v4960
      %v4962 = vrot.slane %v4946, %v4961
      %v4964 = vunpack.c.l.s4 1966171168
      %v4965 = vunpack.c.0.s8 %v4964
      %v4966 = vlaneseq
      %v4967 = vshrl.u32 %v4966, 7
      %v4968 = vsub.s32 %v4965, %v4967
      %v4969 = vrot.slane %v4947, %v4968
      %v4971 = vunpack.c.l.s4 1966171168
      %v4972 = vunpack.c.0.s8 %v4971
      %v4973 = vlaneseq
      %v4974 = vshrl.u32 %v4973, 7
      %v4975 = vsub.s32 %v4972, %v4974
      %v4976 = vrot.slane %v4948, %v4975
      %v4977 = vcombine.low %v4955, %v4962
      %v4978 = vcombine.low %v4969, %v4976
      %v4980 = vunpack.c.l.s4 1966171168
      %v4981 = vunpack.c.0.s8 %v4980
      %v4982 = vlaneseq
      %v4983 = vshrl.u32 %v4982, 7
      %v4984 = vsub.s32 %v4981, %v4983
      %v4985 = vrot.slane %v4977, %v4984
      %v4987 = vunpack.c.l.s4 1966171168
      %v4988 = vunpack.c.0.s8 %v4987
      %v4989 = vlaneseq
      %v4990 = vshrl.u32 %v4989, 7
      %v4991 = vsub.s32 %v4988, %v4990
      %v4992 = vrot.slane %v4978, %v4991
      %v4993 = vcombine.low %v4985, %v4992
      %v4995 = vshrl.u32 %v4258, 16
      %v4997 = vrot.slane %v4995, 7
      %v4998 = vshll.u32 %v4258, 16
      %v5000 = vor.u32 %v4997, %v4998
      %v5002 = vshrl.u32 %v4307, 16
      %v5004 = vrot.slane %v5002, 7
      %v5005 = vshll.u32 %v4307, 16
      %v5007 = vor.u32 %v5004, %v5005
      %v5009 = vshrl.u32 %v4356, 16
      %v5011 = vrot.slane %v5009, 7
      %v5012 = vshll.u32 %v4356, 16
      %v5014 = vor.u32 %v5011, %v5012
      %v5016 = vshrl.u32 %v4405, 16
      %v5018 = vrot.slane %v5016, 7
      %v5019 = vshll.u32 %v4405, 16
      %v5021 = vor.u32 %v5018, %v5019
      %v5023 = vshrl.u32 %v4454, 16
      %v5025 = vrot.slane %v5023, 7
      %v5026 = vshll.u32 %v4454, 16
      %v5028 = vor.u32 %v5025, %v5026
      %v5030 = vshrl.u32 %v4503, 16
      %v5032 = vrot.slane %v5030, 7
      %v5033 = vshll.u32 %v4503, 16
      %v5035 = vor.u32 %v5032, %v5033
      %v5037 = vshrl.u32 %v4552, 16
      %v5039 = vrot.slane %v5037, 7
      %v5040 = vshll.u32 %v4552, 16
      %v5042 = vor.u32 %v5039, %v5040
      %v5044 = vshrl.u32 %v4601, 16
      %v5046 = vrot.slane %v5044, 7
      %v5047 = vshll.u32 %v4601, 16
      %v5049 = vor.u32 %v5046, %v5047
      %v5051 = vshrl.u32 %v4650, 16
      %v5053 = vrot.slane %v5051, 7
      %v5054 = vshll.u32 %v4650, 16
      %v5056 = vor.u32 %v5053, %v5054
      %v5058 = vshrl.u32 %v4699, 16
      %v5060 = vrot.slane %v5058, 7
      %v5061 = vshll.u32 %v4699, 16
      %v5063 = vor.u32 %v5060, %v5061
      %v5065 = vshrl.u32 %v4748, 16
      %v5067 = vrot.slane %v5065, 7
      %v5068 = vshll.u32 %v4748, 16
      %v5070 = vor.u32 %v5067, %v5068
      %v5072 = vshrl.u32 %v4797, 16
      %v5074 = vrot.slane %v5072, 7
      %v5075 = vshll.u32 %v4797, 16
      %v5077 = vor.u32 %v5074, %v5075
      %v5079 = vshrl.u32 %v4846, 16
      %v5081 = vrot.slane %v5079, 7
      %v5082 = vshll.u32 %v4846, 16
      %v5084 = vor.u32 %v5081, %v5082
      %v5086 = vshrl.u32 %v4895, 16
      %v5088 = vrot.slane %v5086, 7
      %v5089 = vshll.u32 %v4895, 16
      %v5091 = vor.u32 %v5088, %v5089
      %v5093 = vshrl.u32 %v4944, 16
      %v5095 = vrot.slane %v5093, 7
      %v5096 = vshll.u32 %v4944, 16
      %v5098 = vor.u32 %v5095, %v5096
      %v5100 = vshrl.u32 %v4993, 16
      %v5102 = vrot.slane %v5100, 7
      %v5103 = vshll.u32 %v4993, 16
      %v5105 = vor.u32 %v5102, %v5103
      %v5138 = vsel %vm817, 0, %v5000
      %v5139 = vsel %vm817, 0, %v5007
      %v5140 = vsel %vm817, 0, %v5014
      %v5141 = vsel %vm817, 0, %v5021
      %v5142 = vsel %vm817, 0, %v5028
      %v5143 = vsel %vm817, 0, %v5035
      %v5144 = vsel %vm817, 0, %v5042
      %v5145 = vsel %vm817, 0, %v5049
      %v5146 = vsel %vm817, 0, %v5056
      %v5147 = vsel %vm817, 0, %v5063
      %v5148 = vsel %vm817, 0, %v5070
      %v5149 = vsel %vm817, 0, %v5077
      %v5150 = vsel %vm817, 0, %v5084
      %v5151 = vsel %vm817, 0, %v5091
      %v5152 = vsel %vm817, 0, %v5098
      %v5153 = vsel %vm817, 0, %v5105
      %v5154 = vsel %vm817, %v4997, 0
      %v5155 = vsel %vm817, %v5004, 0
      %v5156 = vsel %vm817, %v5011, 0
      %v5157 = vsel %vm817, %v5018, 0
      %v5158 = vsel %vm817, %v5025, 0
      %v5159 = vsel %vm817, %v5032, 0
      %v5160 = vsel %vm817, %v5039, 0
      %v5161 = vsel %vm817, %v5046, 0
      %v5162 = vsel %vm817, %v5053, 0
      %v5163 = vsel %vm817, %v5060, 0
      %v5164 = vsel %vm817, %v5067, 0
      %v5165 = vsel %vm817, %v5074, 0
      %v5166 = vsel %vm817, %v5081, 0
      %v5167 = vsel %vm817, %v5088, 0
      %v5168 = vsel %vm817, %v5095, 0
      %v5169 = vsel %vm817, %v5102, 0
      %v5171 = vshrl.u32 0, 16
      %v5173 = vshll.u32 0, 16
      %v5175 = vrot.slane %v5173, 1
      %v5176 = vor.u32 %v5171, %v5175
      %v5177 = vsel %vm879, %v5176, %v5175
      %v5179 = vshrl.u32 %v5138, 16
      %v5181 = vshll.u32 %v5138, 16
      %v5183 = vrot.slane %v5181, 1
      %v5184 = vor.u32 %v5179, %v5183
      %v5186 = vshll.u32 %v5154, 16
      %v5188 = vrot.slane %v5186, 1
      %v5189 = vsel %vm879, %v5184, %v5188
      %v5191 = vshrl.u32 %v5139, 16
      %v5193 = vshll.u32 %v5139, 16
      %v5195 = vrot.slane %v5193, 1
      %v5196 = vor.u32 %v5191, %v5195
      %v5198 = vshll.u32 %v5155, 16
      %v5200 = vrot.slane %v5198, 1
      %v5201 = vsel %vm879, %v5196, %v5200
      %v5203 = vshrl.u32 %v5140, 16
      %v5205 = vshll.u32 %v5140, 16
      %v5207 = vrot.slane %v5205, 1
      %v5208 = vor.u32 %v5203, %v5207
      %v5210 = vshll.u32 %v5156, 16
      %v5212 = vrot.slane %v5210, 1
      %v5213 = vsel %vm879, %v5208, %v5212
      %v5215 = vshrl.u32 %v5141, 16
      %v5217 = vshll.u32 %v5141, 16
      %v5219 = vrot.slane %v5217, 1
      %v5220 = vor.u32 %v5215, %v5219
      %v5222 = vshll.u32 %v5157, 16
      %v5224 = vrot.slane %v5222, 1
      %v5225 = vsel %vm879, %v5220, %v5224
      %v5227 = vshrl.u32 %v5142, 16
      %v5229 = vshll.u32 %v5142, 16
      %v5231 = vrot.slane %v5229, 1
      %v5232 = vor.u32 %v5227, %v5231
      %v5234 = vshll.u32 %v5158, 16
      %v5236 = vrot.slane %v5234, 1
      %v5237 = vsel %vm879, %v5232, %v5236
      %v5239 = vshrl.u32 %v5143, 16
      %v5241 = vshll.u32 %v5143, 16
      %v5243 = vrot.slane %v5241, 1
      %v5244 = vor.u32 %v5239, %v5243
      %v5246 = vshll.u32 %v5159, 16
      %v5248 = vrot.slane %v5246, 1
      %v5249 = vsel %vm879, %v5244, %v5248
      %v5251 = vshrl.u32 %v5144, 16
      %v5253 = vshll.u32 %v5144, 16
      %v5255 = vrot.slane %v5253, 1
      %v5256 = vor.u32 %v5251, %v5255
      %v5258 = vshll.u32 %v5160, 16
      %v5260 = vrot.slane %v5258, 1
      %v5261 = vsel %vm879, %v5256, %v5260
      %v5263 = vshrl.u32 %v5145, 16
      %v5265 = vshll.u32 %v5145, 16
      %v5267 = vrot.slane %v5265, 1
      %v5268 = vor.u32 %v5263, %v5267
      %v5270 = vshll.u32 %v5161, 16
      %v5272 = vrot.slane %v5270, 1
      %v5273 = vsel %vm879, %v5268, %v5272
      %v5275 = vshrl.u32 %v5146, 16
      %v5277 = vshll.u32 %v5146, 16
      %v5279 = vrot.slane %v5277, 1
      %v5280 = vor.u32 %v5275, %v5279
      %v5282 = vshll.u32 %v5162, 16
      %v5284 = vrot.slane %v5282, 1
      %v5285 = vsel %vm879, %v5280, %v5284
      %v5287 = vshrl.u32 %v5147, 16
      %v5289 = vshll.u32 %v5147, 16
      %v5291 = vrot.slane %v5289, 1
      %v5292 = vor.u32 %v5287, %v5291
      %v5294 = vshll.u32 %v5163, 16
      %v5296 = vrot.slane %v5294, 1
      %v5297 = vsel %vm879, %v5292, %v5296
      %v5299 = vshrl.u32 %v5148, 16
      %v5301 = vshll.u32 %v5148, 16
      %v5303 = vrot.slane %v5301, 1
      %v5304 = vor.u32 %v5299, %v5303
      %v5306 = vshll.u32 %v5164, 16
      %v5308 = vrot.slane %v5306, 1
      %v5309 = vsel %vm879, %v5304, %v5308
      %v5311 = vshrl.u32 %v5149, 16
      %v5313 = vshll.u32 %v5149, 16
      %v5315 = vrot.slane %v5313, 1
      %v5316 = vor.u32 %v5311, %v5315
      %v5318 = vshll.u32 %v5165, 16
      %v5320 = vrot.slane %v5318, 1
      %v5321 = vsel %vm879, %v5316, %v5320
      %v5323 = vshrl.u32 %v5150, 16
      %v5325 = vshll.u32 %v5150, 16
      %v5327 = vrot.slane %v5325, 1
      %v5328 = vor.u32 %v5323, %v5327
      %v5330 = vshll.u32 %v5166, 16
      %v5332 = vrot.slane %v5330, 1
      %v5333 = vsel %vm879, %v5328, %v5332
      %v5335 = vshrl.u32 %v5151, 16
      %v5337 = vshll.u32 %v5151, 16
      %v5339 = vrot.slane %v5337, 1
      %v5340 = vor.u32 %v5335, %v5339
      %v5342 = vshll.u32 %v5167, 16
      %v5344 = vrot.slane %v5342, 1
      %v5345 = vsel %vm879, %v5340, %v5344
      %v5347 = vshrl.u32 %v5152, 16
      %v5349 = vshll.u32 %v5152, 16
      %v5351 = vrot.slane %v5349, 1
      %v5352 = vor.u32 %v5347, %v5351
      %v5354 = vshll.u32 %v5168, 16
      %v5356 = vrot.slane %v5354, 1
      %v5357 = vsel %vm879, %v5352, %v5356
      %v5388 = vrot.slane 0, 1
      %v5389 = vsel %vm869, %v5388, %v5388
      %v5390 = vrot.slane %v5138, 1
      %v5391 = vrot.slane %v5154, 1
      %v5392 = vsel %vm869, %v5390, %v5391
      %v5393 = vrot.slane %v5139, 1
      %v5394 = vrot.slane %v5155, 1
      %v5395 = vsel %vm869, %v5393, %v5394
      %v5396 = vrot.slane %v5140, 1
      %v5397 = vrot.slane %v5156, 1
      %v5398 = vsel %vm869, %v5396, %v5397
      %v5399 = vrot.slane %v5141, 1
      %v5400 = vrot.slane %v5157, 1
      %v5401 = vsel %vm869, %v5399, %v5400
      %v5402 = vrot.slane %v5142, 1
      %v5403 = vrot.slane %v5158, 1
      %v5404 = vsel %vm869, %v5402, %v5403
      %v5405 = vrot.slane %v5143, 1
      %v5406 = vrot.slane %v5159, 1
      %v5407 = vsel %vm869, %v5405, %v5406
      %v5408 = vrot.slane %v5144, 1
      %v5409 = vrot.slane %v5160, 1
      %v5410 = vsel %vm869, %v5408, %v5409
      %v5411 = vrot.slane %v5145, 1
      %v5412 = vrot.slane %v5161, 1
      %v5413 = vsel %vm869, %v5411, %v5412
      %v5414 = vrot.slane %v5146, 1
      %v5415 = vrot.slane %v5162, 1
      %v5416 = vsel %vm869, %v5414, %v5415
      %v5417 = vrot.slane %v5147, 1
      %v5418 = vrot.slane %v5163, 1
      %v5419 = vsel %vm869, %v5417, %v5418
      %v5420 = vrot.slane %v5148, 1
      %v5421 = vrot.slane %v5164, 1
      %v5422 = vsel %vm869, %v5420, %v5421
      %v5423 = vrot.slane %v5149, 1
      %v5424 = vrot.slane %v5165, 1
      %v5425 = vsel %vm869, %v5423, %v5424
      %v5426 = vrot.slane %v5150, 1
      %v5427 = vrot.slane %v5166, 1
      %v5428 = vsel %vm869, %v5426, %v5427
      %v5429 = vrot.slane %v5151, 1
      %v5430 = vrot.slane %v5167, 1
      %v5431 = vsel %vm869, %v5429, %v5430
      %v5432 = vrot.slane %v5152, 1
      %v5433 = vrot.slane %v5168, 1
      %v5434 = vsel %vm869, %v5432, %v5433
      %v5436 = vshrl.u32 %v5153, 16
      %v5438 = vshll.u32 %v5153, 16
      %v5440 = vrot.slane %v5438, 1
      %v5441 = vor.u32 %v5436, %v5440
      %v5443 = vshll.u32 %v5169, 16
      %v5445 = vrot.slane %v5443, 1
      %v5446 = vsel %vm879, %v5441, %v5445
      %v5449 = vrot.slane %v5153, 1
      %v5450 = vrot.slane %v5169, 1
      %v5451 = vsel %vm869, %v5449, %v5450
      %5452 = vrot.lane.b32.xlu0 %v5177, 16
      %v5453 = vpop.permute.xlu0 %5452
      %5454 = vrot.lane.b32.xlu0 %v5189, 16
      %v5455 = vpop.permute.xlu0 %5454
      %5456 = vrot.lane.b32.xlu0 %v5201, 16
      %v5457 = vpop.permute.xlu0 %5456
      %5458 = vrot.lane.b32.xlu0 %v5213, 16
      %v5459 = vpop.permute.xlu0 %5458
      %5460 = vrot.lane.b32.xlu0 %v5225, 16
      %v5461 = vpop.permute.xlu0 %5460
      %5462 = vrot.lane.b32.xlu0 %v5237, 16
      %v5463 = vpop.permute.xlu0 %5462
      %5464 = vrot.lane.b32.xlu0 %v5249, 16
      %v5465 = vpop.permute.xlu0 %5464
      %5466 = vrot.lane.b32.xlu0 %v5261, 16
      %v5467 = vpop.permute.xlu0 %5466
      %5468 = vrot.lane.b32.xlu0 %v5273, 16
      %v5469 = vpop.permute.xlu0 %5468
      %5470 = vrot.lane.b32.xlu0 %v5285, 16
      %v5471 = vpop.permute.xlu0 %5470
      %5472 = vrot.lane.b32.xlu0 %v5297, 16
      %v5473 = vpop.permute.xlu0 %5472
      %5474 = vrot.lane.b32.xlu0 %v5309, 16
      %v5475 = vpop.permute.xlu0 %5474
      %5476 = vrot.lane.b32.xlu0 %v5321, 16
      %v5477 = vpop.permute.xlu0 %5476
      %5478 = vrot.lane.b32.xlu0 %v5333, 16
      %v5479 = vpop.permute.xlu0 %5478
      %5480 = vrot.lane.b32.xlu0 %v5345, 16
      %v5481 = vpop.permute.xlu0 %5480
      %5482 = vrot.lane.b32.xlu0 %v5357, 16
      %v5483 = vpop.permute.xlu0 %5482
      %5484 = vrot.lane.b32.xlu0 %v5389, 32
      %v5485 = vpop.permute.xlu0 %5484
      %5486 = vrot.lane.b32.xlu0 %v5392, 32
      %v5487 = vpop.permute.xlu0 %5486
      %5488 = vrot.lane.b32.xlu0 %v5395, 32
      %v5489 = vpop.permute.xlu0 %5488
      %5490 = vrot.lane.b32.xlu0 %v5398, 32
      %v5491 = vpop.permute.xlu0 %5490
      %5492 = vrot.lane.b32.xlu0 %v5401, 32
      %v5493 = vpop.permute.xlu0 %5492
      %5494 = vrot.lane.b32.xlu0 %v5404, 32
      %v5495 = vpop.permute.xlu0 %5494
      %5496 = vrot.lane.b32.xlu0 %v5407, 32
      %v5497 = vpop.permute.xlu0 %5496
      %5498 = vrot.lane.b32.xlu0 %v5410, 32
      %v5499 = vpop.permute.xlu0 %5498
      %5500 = vrot.lane.b32.xlu0 %v5413, 32
      %v5501 = vpop.permute.xlu0 %5500
      %5502 = vrot.lane.b32.xlu0 %v5416, 32
      %v5503 = vpop.permute.xlu0 %5502
      %5504 = vrot.lane.b32.xlu0 %v5419, 32
      %v5505 = vpop.permute.xlu0 %5504
      %5506 = vrot.lane.b32.xlu0 %v5422, 32
      %v5507 = vpop.permute.xlu0 %5506
      %5508 = vrot.lane.b32.xlu0 %v5425, 32
      %v5509 = vpop.permute.xlu0 %5508
      %5510 = vrot.lane.b32.xlu0 %v5428, 32
      %v5511 = vpop.permute.xlu0 %5510
      %5512 = vrot.lane.b32.xlu0 %v5431, 32
      %v5513 = vpop.permute.xlu0 %5512
      %5514 = vrot.lane.b32.xlu0 %v5434, 32
      %v5515 = vpop.permute.xlu0 %5514
      %5516 = vrot.lane.b32.xlu0 %v5138, 48
      %v5517 = vpop.permute.xlu0 %5516
      %5518 = vrot.lane.b32.xlu0 %v5139, 48
      %v5519 = vpop.permute.xlu0 %5518
      %5520 = vrot.lane.b32.xlu0 %v5140, 48
      %v5521 = vpop.permute.xlu0 %5520
      %5522 = vrot.lane.b32.xlu0 %v5141, 48
      %v5523 = vpop.permute.xlu0 %5522
      %5524 = vrot.lane.b32.xlu0 %v5142, 48
      %v5525 = vpop.permute.xlu0 %5524
      %5526 = vrot.lane.b32.xlu0 %v5143, 48
      %v5527 = vpop.permute.xlu0 %5526
      %5528 = vrot.lane.b32.xlu0 %v5144, 48
      %v5529 = vpop.permute.xlu0 %5528
      %5530 = vrot.lane.b32.xlu0 %v5145, 48
      %v5531 = vpop.permute.xlu0 %5530
      %5532 = vrot.lane.b32.xlu0 %v5146, 48
      %v5533 = vpop.permute.xlu0 %5532
      %5534 = vrot.lane.b32.xlu0 %v5147, 48
      %v5535 = vpop.permute.xlu0 %5534
      %5536 = vrot.lane.b32.xlu0 %v5148, 48
      %v5537 = vpop.permute.xlu0 %5536
      %5538 = vrot.lane.b32.xlu0 %v5149, 48
      %v5539 = vpop.permute.xlu0 %5538
      %5540 = vrot.lane.b32.xlu0 %v5150, 48
      %v5541 = vpop.permute.xlu0 %5540
      %5542 = vrot.lane.b32.xlu0 %v5151, 48
      %v5543 = vpop.permute.xlu0 %5542
      %5544 = vrot.lane.b32.xlu0 %v5152, 48
      %v5545 = vpop.permute.xlu0 %5544
      %5546 = vrot.lane.b32.xlu0 %v5153, 48
      %v5547 = vpop.permute.xlu0 %5546
      %5548 = vrot.lane.b32.xlu0 %v5189, 64
      %v5549 = vpop.permute.xlu0 %5548
      %5550 = vrot.lane.b32.xlu0 %v5201, 64
      %v5551 = vpop.permute.xlu0 %5550
      %5552 = vrot.lane.b32.xlu0 %v5213, 64
      %v5553 = vpop.permute.xlu0 %5552
      %5554 = vrot.lane.b32.xlu0 %v5225, 64
      %v5555 = vpop.permute.xlu0 %5554
      %5556 = vrot.lane.b32.xlu0 %v5237, 64
      %v5557 = vpop.permute.xlu0 %5556
      %5558 = vrot.lane.b32.xlu0 %v5249, 64
      %v5559 = vpop.permute.xlu0 %5558
      %5560 = vrot.lane.b32.xlu0 %v5261, 64
      %v5561 = vpop.permute.xlu0 %5560
      %5562 = vrot.lane.b32.xlu0 %v5273, 64
      %v5563 = vpop.permute.xlu0 %5562
      %5564 = vrot.lane.b32.xlu0 %v5285, 64
      %v5565 = vpop.permute.xlu0 %5564
      %5566 = vrot.lane.b32.xlu0 %v5297, 64
      %v5567 = vpop.permute.xlu0 %5566
      %5568 = vrot.lane.b32.xlu0 %v5309, 64
      %v5569 = vpop.permute.xlu0 %5568
      %5570 = vrot.lane.b32.xlu0 %v5321, 64
      %v5571 = vpop.permute.xlu0 %5570
      %5572 = vrot.lane.b32.xlu0 %v5333, 64
      %v5573 = vpop.permute.xlu0 %5572
      %5574 = vrot.lane.b32.xlu0 %v5345, 64
      %v5575 = vpop.permute.xlu0 %5574
      %5576 = vrot.lane.b32.xlu0 %v5357, 64
      %v5577 = vpop.permute.xlu0 %5576
      %5578 = vrot.lane.b32.xlu0 %v5446, 64
      %v5579 = vpop.permute.xlu0 %5578
      %5580 = vrot.lane.b32.xlu0 %v5392, 80
      %v5581 = vpop.permute.xlu0 %5580
      %5582 = vrot.lane.b32.xlu0 %v5395, 80
      %v5583 = vpop.permute.xlu0 %5582
      %5584 = vrot.lane.b32.xlu0 %v5398, 80
      %v5585 = vpop.permute.xlu0 %5584
      %5586 = vrot.lane.b32.xlu0 %v5401, 80
      %v5587 = vpop.permute.xlu0 %5586
      %5588 = vrot.lane.b32.xlu0 %v5404, 80
      %v5589 = vpop.permute.xlu0 %5588
      %5590 = vrot.lane.b32.xlu0 %v5407, 80
      %v5591 = vpop.permute.xlu0 %5590
      %5592 = vrot.lane.b32.xlu0 %v5410, 80
      %v5593 = vpop.permute.xlu0 %5592
      %5594 = vrot.lane.b32.xlu0 %v5413, 80
      %v5595 = vpop.permute.xlu0 %5594
      %5596 = vrot.lane.b32.xlu0 %v5416, 80
      %v5597 = vpop.permute.xlu0 %5596
      %5598 = vrot.lane.b32.xlu0 %v5419, 80
      %v5599 = vpop.permute.xlu0 %5598
      %5600 = vrot.lane.b32.xlu0 %v5422, 80
      %v5601 = vpop.permute.xlu0 %5600
      %5602 = vrot.lane.b32.xlu0 %v5425, 80
      %v5603 = vpop.permute.xlu0 %5602
      %5604 = vrot.lane.b32.xlu0 %v5428, 80
      %v5605 = vpop.permute.xlu0 %5604
      %5606 = vrot.lane.b32.xlu0 %v5431, 80
      %v5607 = vpop.permute.xlu0 %5606
      %5608 = vrot.lane.b32.xlu0 %v5434, 80
      %v5609 = vpop.permute.xlu0 %5608
      %5610 = vrot.lane.b32.xlu0 %v5451, 80
      %v5611 = vpop.permute.xlu0 %5610
      %5612 = vrot.lane.b32.xlu0 %v5139, 96
      %v5613 = vpop.permute.xlu0 %5612
      %5614 = vrot.lane.b32.xlu0 %v5140, 96
      %v5615 = vpop.permute.xlu0 %5614
      %5616 = vrot.lane.b32.xlu0 %v5141, 96
      %v5617 = vpop.permute.xlu0 %5616
      %5618 = vrot.lane.b32.xlu0 %v5142, 96
      %v5619 = vpop.permute.xlu0 %5618
      %5620 = vrot.lane.b32.xlu0 %v5143, 96
      %v5621 = vpop.permute.xlu0 %5620
      %5622 = vrot.lane.b32.xlu0 %v5144, 96
      %v5623 = vpop.permute.xlu0 %5622
      %5624 = vrot.lane.b32.xlu0 %v5145, 96
      %v5625 = vpop.permute.xlu0 %5624
      %5626 = vrot.lane.b32.xlu0 %v5146, 96
      %v5627 = vpop.permute.xlu0 %5626
      %5628 = vrot.lane.b32.xlu0 %v5147, 96
      %v5629 = vpop.permute.xlu0 %5628
      %5630 = vrot.lane.b32.xlu0 %v5148, 96
      %v5631 = vpop.permute.xlu0 %5630
      %5632 = vrot.lane.b32.xlu0 %v5149, 96
      %v5633 = vpop.permute.xlu0 %5632
      %5634 = vrot.lane.b32.xlu0 %v5150, 96
      %v5635 = vpop.permute.xlu0 %5634
      %5636 = vrot.lane.b32.xlu0 %v5151, 96
      %v5637 = vpop.permute.xlu0 %5636
      %5638 = vrot.lane.b32.xlu0 %v5152, 96
      %v5639 = vpop.permute.xlu0 %5638
      %5640 = vrot.lane.b32.xlu0 %v5153, 96
      %v5641 = vpop.permute.xlu0 %5640
      %5642 = vrot.lane.b32.xlu0 0, 96
      %v5643 = vpop.permute.xlu0 %5642
      %5644 = vrot.lane.b32.xlu0 %v5201, 112
      %v5645 = vpop.permute.xlu0 %5644
      %5646 = vrot.lane.b32.xlu0 %v5213, 112
      %v5647 = vpop.permute.xlu0 %5646
      %5648 = vrot.lane.b32.xlu0 %v5225, 112
      %v5649 = vpop.permute.xlu0 %5648
      %5650 = vrot.lane.b32.xlu0 %v5237, 112
      %v5651 = vpop.permute.xlu0 %5650
      %5652 = vrot.lane.b32.xlu0 %v5249, 112
      %v5653 = vpop.permute.xlu0 %5652
      %5654 = vrot.lane.b32.xlu0 %v5261, 112
      %v5655 = vpop.permute.xlu0 %5654
      %5656 = vrot.lane.b32.xlu0 %v5273, 112
      %v5657 = vpop.permute.xlu0 %5656
      %5658 = vrot.lane.b32.xlu0 %v5285, 112
      %v5659 = vpop.permute.xlu0 %5658
      %5660 = vrot.lane.b32.xlu0 %v5297, 112
      %v5661 = vpop.permute.xlu0 %5660
      %5662 = vrot.lane.b32.xlu0 %v5309, 112
      %v5663 = vpop.permute.xlu0 %5662
      %5664 = vrot.lane.b32.xlu0 %v5321, 112
      %v5665 = vpop.permute.xlu0 %5664
      %5666 = vrot.lane.b32.xlu0 %v5333, 112
      %v5667 = vpop.permute.xlu0 %5666
      %5668 = vrot.lane.b32.xlu0 %v5345, 112
      %v5669 = vpop.permute.xlu0 %5668
      %5670 = vrot.lane.b32.xlu0 %v5357, 112
      %v5671 = vpop.permute.xlu0 %5670
      %5672 = vrot.lane.b32.xlu0 %v5446, 112
      %v5673 = vpop.permute.xlu0 %5672
      %5674 = vrot.lane.b32.xlu0 %v5177, 112
      %v5675 = vpop.permute.xlu0 %5674
      %v5677 = vsel %vm3016, 0, %v5453
      %v5679 = vsel %vm3016, %v5138, %v5455
      %v5681 = vsel %vm3016, %v5139, %v5457
      %v5683 = vsel %vm3016, %v5140, %v5459
      %v5685 = vsel %vm3016, %v5141, %v5461
      %v5687 = vsel %vm3016, %v5142, %v5463
      %v5689 = vsel %vm3016, %v5143, %v5465
      %v5691 = vsel %vm3016, %v5144, %v5467
      %v5693 = vsel %vm3016, %v5145, %v5469
      %v5695 = vsel %vm3016, %v5146, %v5471
      %v5697 = vsel %vm3016, %v5147, %v5473
      %v5699 = vsel %vm3016, %v5148, %v5475
      %v5701 = vsel %vm3016, %v5149, %v5477
      %v5703 = vsel %vm3016, %v5150, %v5479
      %v5705 = vsel %vm3016, %v5151, %v5481
      %v5707 = vsel %vm3016, %v5152, %v5483
      %v5709 = vsel %vm1714, %v5677, %v5485
      %v5711 = vsel %vm1714, %v5679, %v5487
      %v5713 = vsel %vm1714, %v5681, %v5489
      %v5715 = vsel %vm1714, %v5683, %v5491
      %v5717 = vsel %vm1714, %v5685, %v5493
      %v5719 = vsel %vm1714, %v5687, %v5495
      %v5721 = vsel %vm1714, %v5689, %v5497
      %v5723 = vsel %vm1714, %v5691, %v5499
      %v5725 = vsel %vm1714, %v5693, %v5501
      %v5727 = vsel %vm1714, %v5695, %v5503
      %v5729 = vsel %vm1714, %v5697, %v5505
      %v5731 = vsel %vm1714, %v5699, %v5507
      %v5733 = vsel %vm1714, %v5701, %v5509
      %v5735 = vsel %vm1714, %v5703, %v5511
      %v5737 = vsel %vm1714, %v5705, %v5513
      %v5739 = vsel %vm1714, %v5707, %v5515
      %v5741 = vsel %vm392, %v5709, %v5517
      %v5743 = vsel %vm392, %v5711, %v5519
      %v5745 = vsel %vm392, %v5713, %v5521
      %v5747 = vsel %vm392, %v5715, %v5523
      %v5749 = vsel %vm392, %v5717, %v5525
      %v5751 = vsel %vm392, %v5719, %v5527
      %v5753 = vsel %vm392, %v5721, %v5529
      %v5755 = vsel %vm392, %v5723, %v5531
      %v5757 = vsel %vm392, %v5725, %v5533
      %v5759 = vsel %vm392, %v5727, %v5535
      %v5761 = vsel %vm392, %v5729, %v5537
      %v5763 = vsel %vm392, %v5731, %v5539
      %v5765 = vsel %vm392, %v5733, %v5541
      %v5767 = vsel %vm392, %v5735, %v5543
      %v5769 = vsel %vm392, %v5737, %v5545
      %v5771 = vsel %vm392, %v5739, %v5547
      %v5773 = vsel %vm1252, %v5741, %v5549
      %v5775 = vsel %vm1252, %v5743, %v5551
      %v5777 = vsel %vm1252, %v5745, %v5553
      %v5779 = vsel %vm1252, %v5747, %v5555
      %v5781 = vsel %vm1252, %v5749, %v5557
      %v5783 = vsel %vm1252, %v5751, %v5559
      %v5785 = vsel %vm1252, %v5753, %v5561
      %v5787 = vsel %vm1252, %v5755, %v5563
      %v5789 = vsel %vm1252, %v5757, %v5565
      %v5791 = vsel %vm1252, %v5759, %v5567
      %v5793 = vsel %vm1252, %v5761, %v5569
      %v5795 = vsel %vm1252, %v5763, %v5571
      %v5797 = vsel %vm1252, %v5765, %v5573
      %v5799 = vsel %vm1252, %v5767, %v5575
      %v5801 = vsel %vm1252, %v5769, %v5577
      %v5803 = vsel %vm1252, %v5771, %v5579
      %vm5804 = vcmask 654336
      %v5806 = vsel %vm5804, %v5773, %v5581
      %v5808 = vsel %vm5804, %v5775, %v5583
      %v5810 = vsel %vm5804, %v5777, %v5585
      %v5812 = vsel %vm5804, %v5779, %v5587
      %v5814 = vsel %vm5804, %v5781, %v5589
      %v5816 = vsel %vm5804, %v5783, %v5591
      %v5818 = vsel %vm5804, %v5785, %v5593
      %v5820 = vsel %vm5804, %v5787, %v5595
      %v5822 = vsel %vm5804, %v5789, %v5597
      %v5824 = vsel %vm5804, %v5791, %v5599
      %v5826 = vsel %vm5804, %v5793, %v5601
      %v5828 = vsel %vm5804, %v5795, %v5603
      %v5830 = vsel %vm5804, %v5797, %v5605
      %v5832 = vsel %vm5804, %v5799, %v5607
      %v5834 = vsel %vm5804, %v5801, %v5609
      %v5836 = vsel %vm5804, %v5803, %v5611
      %v5838 = vsel %vm1717, %v5806, %v5613
      %v5840 = vsel %vm1717, %v5808, %v5615
      %v5842 = vsel %vm1717, %v5810, %v5617
      %v5844 = vsel %vm1717, %v5812, %v5619
      %v5846 = vsel %vm1717, %v5814, %v5621
      %v5848 = vsel %vm1717, %v5816, %v5623
      %v5850 = vsel %vm1717, %v5818, %v5625
      %v5852 = vsel %vm1717, %v5820, %v5627
      %v5854 = vsel %vm1717, %v5822, %v5629
      %v5856 = vsel %vm1717, %v5824, %v5631
      %v5858 = vsel %vm1717, %v5826, %v5633
      %v5860 = vsel %vm1717, %v5828, %v5635
      %v5862 = vsel %vm1717, %v5830, %v5637
      %v5864 = vsel %vm1717, %v5832, %v5639
      %v5866 = vsel %vm1717, %v5834, %v5641
      %v5868 = vsel %vm1717, %v5836, %v5643
      %vm5869 = vcmask 916480
      %v5871 = vsel %vm5869, %v5838, %v5645
      %v5874 = vsel %vm5869, %v5840, %v5647
      %v5877 = vsel %vm5869, %v5842, %v5649
      %v5880 = vsel %vm5869, %v5844, %v5651
      %v5883 = vsel %vm5869, %v5846, %v5653
      %v5886 = vsel %vm5869, %v5848, %v5655
      %v5889 = vsel %vm5869, %v5850, %v5657
      %v5892 = vsel %vm5869, %v5852, %v5659
      %v5895 = vsel %vm5869, %v5854, %v5661
      %v5898 = vsel %vm5869, %v5856, %v5663
      %v5901 = vsel %vm5869, %v5858, %v5665
      %v5904 = vsel %vm5869, %v5860, %v5667
      %v5907 = vsel %vm5869, %v5862, %v5669
      %v5910 = vsel %vm5869, %v5864, %v5671
      %v5913 = vsel %vm5869, %v5866, %v5673
      %v5916 = vsel %vm5869, %v5868, %v5675
      %v5918 = vld [vmem:[%s4] sm:$0xf]
      %v5919 = vld [vmem:[%s4 + $0x4] sm:$0xf]
      %v5920 = vld [vmem:[%s4 + $0x8] sm:$0xf]
      %v5921 = vld [vmem:[%s4 + $0xc] sm:$0xf]
      %v5922 = vld [vmem:[%s4 + $0x10] sm:$0xf]
      %v5923 = vld [vmem:[%s4 + $0x14] sm:$0xf]
      %v5924 = vld [vmem:[%s4 + $0x18] sm:$0xf]
      %v5925 = vld [vmem:[%s4 + $0x1c] sm:$0xf]
      %v5926 = vld [vmem:[%s4 + $0x20] sm:$0xf]
      %v5927 = vld [vmem:[%s4 + $0x24] sm:$0xf]
      %v5928 = vld [vmem:[%s4 + $0x28] sm:$0xf]
      %v5929 = vld [vmem:[%s4 + $0x2c] sm:$0xf]
      %v5930 = vld [vmem:[%s4 + $0x30] sm:$0xf]
      %v5931 = vld [vmem:[%s4 + $0x34] sm:$0xf]
      %v5932 = vld [vmem:[%s4 + $0x38] sm:$0xf]
      %v5933 = vld [vmem:[%s4 + $0x3c] sm:$0xf]
      %v5934 = vld [vmem:[%s4 + $0x40] sm:$0xf]
      %v5935 = vld [vmem:[%s4 + $0x44] sm:$0xf]
      %v5954 = vunpack.c.l.b16 %v5918
      %v5955 = vunpack.c.l.b16 %v5919
      %v5956 = vunpack.c.l.b16 %v5920
      %v5957 = vunpack.c.l.b16 %v5921
      %v5958 = vunpack.c.l.b16 %v5922
      %v5959 = vunpack.c.l.b16 %v5923
      %v5960 = vunpack.c.l.b16 %v5924
      %v5961 = vunpack.c.l.b16 %v5925
      %v5962 = vunpack.c.l.b16 %v5926
      %v5963 = vunpack.c.l.b16 %v5927
      %v5964 = vunpack.c.l.b16 %v5928
      %v5965 = vunpack.c.l.b16 %v5929
      %v5966 = vunpack.c.l.b16 %v5930
      %v5967 = vunpack.c.l.b16 %v5931
      %v5968 = vunpack.c.l.b16 %v5932
      %v5969 = vunpack.c.l.b16 %v5933
      %v5970 = vunpack.c.l.b16 %v5934
      %v5971 = vunpack.c.l.b16 %v5935
      %v5972 = vpack.c.b16 %v5955, %v5954
      %v5973 = vpack.c.b16 %v5957, %v5956
      %v5974 = vpack.c.b16 %v5959, %v5958
      %v5975 = vpack.c.b16 %v5961, %v5960
      %v5976 = vpack.c.b16 %v5963, %v5962
      %v5977 = vpack.c.b16 %v5965, %v5964
      %v5978 = vpack.c.b16 %v5967, %v5966
      %v5979 = vpack.c.b16 %v5969, %v5968
      %v5980 = vpack.c.b16 %v5971, %v5970
      %v5991 = vsel %vm3016, %v5395, 0
      %v5994 = vsel %vm3016, %v5398, 0
      %v5997 = vsel %vm3016, %v5401, 0
      %v6000 = vsel %vm3016, %v5404, 0
      %v6003 = vsel %vm3016, %v5407, 0
      %v6006 = vsel %vm3016, %v5410, 0
      %v6009 = vsel %vm3016, %v5413, 0
      %v6012 = vsel %vm3016, %v5416, 0
      %v6015 = vsel %vm3016, %v5419, 0
      %v6018 = vsel %vm3016, %v5422, 0
      %v6021 = vsel %vm3016, %v5425, 0
      %v6024 = vsel %vm3016, %v5428, 0
      %v6027 = vsel %vm3016, %v5431, 0
      %v6030 = vsel %vm3016, %v5434, 0
      %v6033 = vsel %vm3016, %v5451, 0
      %v6036 = vsel %vm3016, %v5389, 0
      %6038 = vmatprep.subr.bf16.mxu0 0
      %6039 = vmatpush1.bf16.msra.mxu0 %v5972
      %6040 = vmatprep.subr.bf16.mxu0 0
      %6041 = vmatpush1.bf16.msra.mxu0 %v5973
      %6042 = vmatprep.subr.bf16.mxu0 0
      %6043 = vmatpush1.bf16.msra.mxu0 %v5974
      %6044 = vmatprep.subr.bf16.mxu0 0
      %6045 = vmatpush1.bf16.msra.mxu0 %v5975
      %6046 = vmatprep.subr.bf16.mxu0 0
      %6047 = vmatpush1.bf16.msra.mxu0 %v5976
      %6048 = vmatprep.subr.bf16.mxu0 0
      %6049 = vmatpush1.bf16.msra.mxu0 %v5977
      %6050 = vmatprep.subr.bf16.mxu0 0
      %6051 = vmatpush1.bf16.msra.mxu0 %v5978
      %6052 = vmatprep.subr.bf16.mxu0 0
      %6053 = vmatpush1.bf16.msra.mxu0 %v5979
      %6054 = vmatprep.subr.bf16.mxu0 0
      %6055 = vmatpush1.bf16.msra.mxu0 %v5980
      %6056 = vmatprep.subr.bf16.mxu0 0
      %6057 = vmatpush1.bf16.msra.mxu0 0
      %6058 = vmatprep.subr.bf16.mxu0 0
      %6059 = vmatpush1.bf16.msra.mxu0 0
      %6060 = vmatprep.subr.bf16.mxu0 0
      %6061 = vmatpush1.bf16.msra.mxu0 0
      %6062 = vmatprep.subr.bf16.mxu0 0
      %6063 = vmatpush1.bf16.msra.mxu0 0
      %6064 = vmatprep.subr.bf16.mxu0 0
      %6065 = vmatpush1.bf16.msra.mxu0 0
      %6066 = vmatprep.subr.bf16.mxu0 0
      %6067 = vmatpush1.bf16.msra.mxu0 0
      %6068 = vmatprep.subr.bf16.mxu0 0
      %6069 = vmatpush1.bf16.msra.mxu0 0
      %6070 = vmatprep.mubr.bf16.mxu0 %v5991
      %6071 = vmatmul.mubr.bf16.gmra.mrb[0].mxu0 %v5871
      %v6072 = vpop.f32.mrb[0].mxu0
      %v6073 = vadd.f32 0.0, %v6072
      %v6074 = vpop.f32.mrb[0].mxu0
      %v6075 = vpop.f32.mrb[0].mxu0
      %v6076 = vadd.f32 0.0, %v6075
      %v6077 = vpop.f32.mrb[0].mxu0
      %6078 = vmatprep.mubr.bf16.mxu0 %v5994
      %6079 = vmatmul.mubr.bf16.gmra.mrb[0].mxu0 %v5874
      %v6080 = vpop.f32.mrb[0].mxu0
      %v6081 = vadd.f32 0.0, %v6080
      %v6082 = vpop.f32.mrb[0].mxu0
      %v6083 = vpop.f32.mrb[0].mxu0
      %v6084 = vadd.f32 0.0, %v6083
      %v6085 = vpop.f32.mrb[0].mxu0
      %6086 = vmatprep.mubr.bf16.mxu0 %v5997
      %6087 = vmatmul.mubr.bf16.gmra.mrb[0].mxu0 %v5877
      %v6088 = vpop.f32.mrb[0].mxu0
      %v6089 = vadd.f32 0.0, %v6088
      %v6090 = vpop.f32.mrb[0].mxu0
      %v6091 = vpop.f32.mrb[0].mxu0
      %v6092 = vadd.f32 0.0, %v6091
      %v6093 = vpop.f32.mrb[0].mxu0
      %6094 = vmatprep.mubr.bf16.mxu0 %v6000
      %6095 = vmatmul.mubr.bf16.gmra.mrb[0].mxu0 %v5880
      %v6096 = vpop.f32.mrb[0].mxu0
      %v6097 = vadd.f32 0.0, %v6096
      %v6098 = vpop.f32.mrb[0].mxu0
      %v6099 = vpop.f32.mrb[0].mxu0
      %v6100 = vadd.f32 0.0, %v6099
      %v6101 = vpop.f32.mrb[0].mxu0
      %6102 = vmatprep.mubr.bf16.mxu0 %v6003
      %6103 = vmatmul.mubr.bf16.gmra.mrb[0].mxu0 %v5883
      %v6104 = vpop.f32.mrb[0].mxu0
      %v6105 = vadd.f32 0.0, %v6104
      %v6106 = vpop.f32.mrb[0].mxu0
      %v6107 = vpop.f32.mrb[0].mxu0
      %v6108 = vadd.f32 0.0, %v6107
      %v6109 = vpop.f32.mrb[0].mxu0
      %6110 = vmatprep.mubr.bf16.mxu0 %v6006
      %6111 = vmatmul.mubr.bf16.gmra.mrb[0].mxu0 %v5886
      %v6112 = vpop.f32.mrb[0].mxu0
      %v6113 = vadd.f32 0.0, %v6112
      %v6114 = vpop.f32.mrb[0].mxu0
      %v6115 = vpop.f32.mrb[0].mxu0
      %v6116 = vadd.f32 0.0, %v6115
      %v6117 = vpop.f32.mrb[0].mxu0
      %6118 = vmatprep.mubr.bf16.mxu0 %v6009
      %6119 = vmatmul.mubr.bf16.gmra.mrb[0].mxu0 %v5889
      %v6120 = vpop.f32.mrb[0].mxu0
      %v6121 = vadd.f32 0.0, %v6120
      %v6122 = vpop.f32.mrb[0].mxu0
      %v6123 = vpop.f32.mrb[0].mxu0
      %v6124 = vadd.f32 0.0, %v6123
      %v6125 = vpop.f32.mrb[0].mxu0
      %6126 = vmatprep.mubr.bf16.mxu0 %v6012
      %6127 = vmatmul.mubr.bf16.gmra.mrb[0].mxu0 %v5892
      %v6128 = vpop.f32.mrb[0].mxu0
      %v6129 = vadd.f32 0.0, %v6128
      %v6130 = vpop.f32.mrb[0].mxu0
      %v6131 = vpop.f32.mrb[0].mxu0
      %v6132 = vadd.f32 0.0, %v6131
      %v6133 = vpop.f32.mrb[0].mxu0
      %6134 = vmatprep.mubr.bf16.mxu0 %v6015
      %6135 = vmatmul.mubr.bf16.gmra.mrb[0].mxu0 %v5895
      %v6136 = vpop.f32.mrb[0].mxu0
      %v6137 = vadd.f32 0.0, %v6136
      %v6138 = vpop.f32.mrb[0].mxu0
      %v6139 = vpop.f32.mrb[0].mxu0
      %v6140 = vadd.f32 0.0, %v6139
      %v6141 = vpop.f32.mrb[0].mxu0
      %6142 = vmatprep.mubr.bf16.mxu0 %v6018
      %6143 = vmatmul.mubr.bf16.gmra.mrb[0].mxu0 %v5898
      %v6144 = vpop.f32.mrb[0].mxu0
      %v6145 = vadd.f32 0.0, %v6144
      %v6146 = vpop.f32.mrb[0].mxu0
      %v6147 = vpop.f32.mrb[0].mxu0
      %v6148 = vadd.f32 0.0, %v6147
      %v6149 = vpop.f32.mrb[0].mxu0
      %6150 = vmatprep.mubr.bf16.mxu0 %v6021
      %6151 = vmatmul.mubr.bf16.gmra.mrb[0].mxu0 %v5901
      %v6152 = vpop.f32.mrb[0].mxu0
      %v6153 = vadd.f32 0.0, %v6152
      %v6154 = vpop.f32.mrb[0].mxu0
      %v6155 = vpop.f32.mrb[0].mxu0
      %v6156 = vadd.f32 0.0, %v6155
      %v6157 = vpop.f32.mrb[0].mxu0
      %6158 = vmatprep.mubr.bf16.mxu0 %v6024
      %6159 = vmatmul.mubr.bf16.gmra.mrb[0].mxu0 %v5904
      %v6160 = vpop.f32.mrb[0].mxu0
      %v6161 = vadd.f32 0.0, %v6160
      %v6162 = vpop.f32.mrb[0].mxu0
      %v6163 = vpop.f32.mrb[0].mxu0
      %v6164 = vadd.f32 0.0, %v6163
      %v6165 = vpop.f32.mrb[0].mxu0
      %6166 = vmatprep.mubr.bf16.mxu0 %v6027
      %6167 = vmatmul.mubr.bf16.gmra.mrb[0].mxu0 %v5907
      %v6168 = vpop.f32.mrb[0].mxu0
      %v6169 = vadd.f32 0.0, %v6168
      %v6170 = vpop.f32.mrb[0].mxu0
      %v6171 = vpop.f32.mrb[0].mxu0
      %v6172 = vadd.f32 0.0, %v6171
      %v6173 = vpop.f32.mrb[0].mxu0
      %6174 = vmatprep.mubr.bf16.mxu0 %v6030
      %6175 = vmatmul.mubr.bf16.gmra.mrb[0].mxu0 %v5910
      %v6176 = vpop.f32.mrb[0].mxu0
      %v6177 = vadd.f32 0.0, %v6176
      %v6178 = vpop.f32.mrb[0].mxu0
      %v6179 = vpop.f32.mrb[0].mxu0
      %v6180 = vadd.f32 0.0, %v6179
      %v6181 = vpop.f32.mrb[0].mxu0
      %6182 = vmatprep.mubr.bf16.mxu0 %v6033
      %6183 = vmatmul.mubr.bf16.gmra.mrb[0].mxu0 %v5913
      %v6184 = vpop.f32.mrb[0].mxu0
      %v6185 = vadd.f32 0.0, %v6184
      %v6186 = vpop.f32.mrb[0].mxu0
      %v6187 = vpop.f32.mrb[0].mxu0
      %v6188 = vadd.f32 0.0, %v6187
      %v6189 = vpop.f32.mrb[0].mxu0
      %6190 = vmatprep.mubr.bf16.mxu0 %v6036
      %6191 = vmatmul.mubr.bf16.gmra.mrb[0].mxu0 %v5916
      %v6192 = vpop.f32.mrb[0].mxu0
      %v6193 = vadd.f32 0.0, %v6192
      %v6194 = vpop.f32.mrb[0].mxu0
      %v6195 = vpop.f32.mrb[0].mxu0
      %v6196 = vadd.f32 0.0, %v6195
      %v6197 = vpop.f32.mrb[0].mxu0
      %6198 = vdwg.mxu0
      %v6199 = vld [vmem:[%s5] sm:$0x1]
      %v6201 = vlaneseq
      %v6202 = vshrl.u32 %v6201, 7
      %v6203 = vsub.s32 0, %v6202
      %v6204 = vrot.slane %v6199, %v6203
      %v6206 = vadd.f32 %v6073, %v6204
      %v6207 = vadd.f32 %v6076, %v6204
      %v6208 = vadd.f32 %v6081, %v6204
      %v6209 = vadd.f32 %v6084, %v6204
      %v6210 = vadd.f32 %v6089, %v6204
      %v6211 = vadd.f32 %v6092, %v6204
      %v6212 = vadd.f32 %v6097, %v6204
      %v6213 = vadd.f32 %v6100, %v6204
      %v6214 = vadd.f32 %v6105, %v6204
      %v6215 = vadd.f32 %v6108, %v6204
      %v6216 = vadd.f32 %v6113, %v6204
      %v6217 = vadd.f32 %v6116, %v6204
      %v6218 = vadd.f32 %v6121, %v6204
      %v6219 = vadd.f32 %v6124, %v6204
      %v6220 = vadd.f32 %v6129, %v6204
      %v6221 = vadd.f32 %v6132, %v6204
      %v6222 = vadd.f32 %v6137, %v6204
      %v6223 = vadd.f32 %v6140, %v6204
      %v6224 = vadd.f32 %v6145, %v6204
      %v6225 = vadd.f32 %v6148, %v6204
      %v6226 = vadd.f32 %v6153, %v6204
      %v6227 = vadd.f32 %v6156, %v6204
      %v6228 = vadd.f32 %v6161, %v6204
      %v6229 = vadd.f32 %v6164, %v6204
      %v6230 = vadd.f32 %v6169, %v6204
      %v6231 = vadd.f32 %v6172, %v6204
      %v6232 = vadd.f32 %v6177, %v6204
      %v6233 = vadd.f32 %v6180, %v6204
      %v6234 = vadd.f32 %v6185, %v6204
      %v6235 = vadd.f32 %v6188, %v6204
      %v6236 = vadd.f32 %v6193, %v6204
      %v6237 = vadd.f32 %v6196, %v6204
      %v6238 = vtanh.pop %v6206
      %v6239 = vtanh.pop %v6207
      %v6240 = vtanh.pop %v6208
      %v6241 = vtanh.pop %v6209
      %v6242 = vtanh.pop %v6210
      %v6243 = vtanh.pop %v6211
      %v6244 = vtanh.pop %v6212
      %v6245 = vtanh.pop %v6213
      %v6246 = vtanh.pop %v6214
      %v6247 = vtanh.pop %v6215
      %v6248 = vtanh.pop %v6216
      %v6249 = vtanh.pop %v6217
      %v6250 = vtanh.pop %v6218
      %v6251 = vtanh.pop %v6219
      %v6252 = vtanh.pop %v6220
      %v6253 = vtanh.pop %v6221
      %v6254 = vtanh.pop %v6222
      %v6255 = vtanh.pop %v6223
      %v6256 = vtanh.pop %v6224
      %v6257 = vtanh.pop %v6225
      %v6258 = vtanh.pop %v6226
      %v6259 = vtanh.pop %v6227
      %v6260 = vtanh.pop %v6228
      %v6261 = vtanh.pop %v6229
      %v6262 = vtanh.pop %v6230
      %v6263 = vtanh.pop %v6231
      %v6264 = vtanh.pop %v6232
      %v6265 = vtanh.pop %v6233
      %v6266 = vtanh.pop %v6234
      %v6267 = vtanh.pop %v6235
      %v6268 = vtanh.pop %v6236
      %v6269 = vtanh.pop %v6237
      %vm6270 = vcmask 97280
      %6271 = vst.msk [vmem:[%s245] sm:$0xff] %vm6270, %v6238
      %6272 = vst.msk [vmem:[%s245 + $0x8] sm:$0xff] %vm6270, %v6239
      %6273 = vst.msk [vmem:[%s245 + $0x10] sm:$0xff] %vm6270, %v6240
      %6274 = vst.msk [vmem:[%s245 + $0x18] sm:$0xff] %vm6270, %v6241
      %6275 = vst.msk [vmem:[%s245 + $0x20] sm:$0xff] %vm6270, %v6242
      %6276 = vst.msk [vmem:[%s245 + $0x28] sm:$0xff] %vm6270, %v6243
      %6277 = vst.msk [vmem:[%s245 + $0x30] sm:$0xff] %vm6270, %v6244
      %6278 = vst.msk [vmem:[%s245 + $0x38] sm:$0xff] %vm6270, %v6245
      %6279 = vst.msk [vmem:[%s245 + $0x40] sm:$0xff] %vm6270, %v6246
      %6280 = vst.msk [vmem:[%s245 + $0x48] sm:$0xff] %vm6270, %v6247
      %6281 = vst.msk [vmem:[%s245 + $0x50] sm:$0xff] %vm6270, %v6248
      %6282 = vst.msk [vmem:[%s245 + $0x58] sm:$0xff] %vm6270, %v6249
      %6283 = vst.msk [vmem:[%s245 + $0x60] sm:$0xff] %vm6270, %v6250
      %6284 = vst.msk [vmem:[%s245 + $0x68] sm:$0xff] %vm6270, %v6251
      %6285 = vst.msk [vmem:[%s245 + $0x70] sm:$0xff] %vm6270, %v6252
      %6286 = vst.msk [vmem:[%s245 + $0x78] sm:$0xff] %vm6270, %v6253
      %6287 = vst.msk [vmem:[%s245 + $0x80] sm:$0xff] %vm6270, %v6254
      %6288 = vst.msk [vmem:[%s245 + $0x88] sm:$0xff] %vm6270, %v6255
      %6289 = vst.msk [vmem:[%s245 + $0x90] sm:$0xff] %vm6270, %v6256
      %6290 = vst.msk [vmem:[%s245 + $0x98] sm:$0xff] %vm6270, %v6257
      %6291 = vst.msk [vmem:[%s245 + $0xa0] sm:$0xff] %vm6270, %v6258
      %6292 = vst.msk [vmem:[%s245 + $0xa8] sm:$0xff] %vm6270, %v6259
      %6293 = vst.msk [vmem:[%s245 + $0xb0] sm:$0xff] %vm6270, %v6260
      %6294 = vst.msk [vmem:[%s245 + $0xb8] sm:$0xff] %vm6270, %v6261
      %6295 = vst.msk [vmem:[%s245 + $0xc0] sm:$0xff] %vm6270, %v6262
      %6296 = vst.msk [vmem:[%s245 + $0xc8] sm:$0xff] %vm6270, %v6263
      %6297 = vst.msk [vmem:[%s245 + $0xd0] sm:$0xff] %vm6270, %v6264
      %6298 = vst.msk [vmem:[%s245 + $0xd8] sm:$0xff] %vm6270, %v6265
      %6299 = vst.msk [vmem:[%s245 + $0xe0] sm:$0xff] %vm6270, %v6266
      %6300 = vst.msk [vmem:[%s245 + $0xe8] sm:$0xff] %vm6270, %v6267
      %6301 = vst.msk [vmem:[%s245 + $0xf0] sm:$0xff] %vm6270, %v6268
      %6302 = vst.msk [vmem:[%s245 + $0xf8] sm:$0xff] %vm6270, %v6269
      %p6303 = scmp.lt.s32.totalorder %s17, 1
      %s6304 = scalar_select %p6303, %s17, 1
      %s6305 = smul.addr %s6304, 32
      %s6306 = smul.addr %s6305, 8
      %s6307 = scalar_lea.vmem %s6, %s6306
      // Predicated region
      $region45: #{generator_forward.1} parent=43 // pred_check
        %p6308 = pneg %p166
      $region46: #{generator_forward.1} parent=43 // pred_check_branch
        %6310 = sbr.rel (%p6308) target = $region48
      $region47: #{generator_forward.1} parent=43 // pred_region
        _
      $region48: #{generator_forward.1} parent=43 // pred_fallthru
        _
    $region44: #{generator_forward.1} parent=5 // pred_fallthru
      _
    %p6311 = scmp.le.s32.totalorder 2, %s12
    // Predicated region
    $region49: #{generator_forward.1} parent=5 // pred_check
      %p6312 = pneg %p6311
    $region50: #{generator_forward.1} parent=5 // pred_check_branch
      %6314 = sbr.rel (%p6312) target = $region52
    $region51: #{generator_forward.1} parent=5 // pred_region
      %s6315 = ssub.s32 %s12, 2
      // Predicated region
      $region53: #{generator_forward.1} parent=51 // pred_check
        %p6316 = pneg %p172
      $region54: #{generator_forward.1} parent=51 // pred_check_branch
        %6318 = sbr.rel (%p6316) target = $region56
      $region55: #{generator_forward.1} parent=51 // pred_region
        %p6319 = scmp.lt.s32.totalorder %s18, 1
        %s6320 = scalar_select %p6319, %s18, 1
        %s6321 = smul.addr %s6320, 32
        %s6322 = smul.addr %s6321, 8
        %s6323 = scalar_lea.vmem %s6, %s6322
      $region56: #{generator_forward.1} parent=51 // pred_fallthru
        _
    $region52: #{generator_forward.1} parent=5 // pred_fallthru
      _
  $region6: #{generator_forward.1} parent=0 // loop_footer
    %s16 = sadd.s32 1, %s12
  $region7: #{generator_forward.1} parent=0 // loop_footer_branch
    %11 = sbr.rel target = $region3
  $region8: #{generator_forward.1} parent=0 // loop_exit
    _

</llo_original>
